<compile_context>
chip_gen: v7x
topology: tpu7x:2x2x1
jax: 0.10.0
libtpu: 0.0.40
codegen_flags: <defaults>
</compile_context>

<pallas_src>
import jax
import jax.numpy as jnp
from jax import lax
from jax.experimental import pallas as pl
from jax.experimental.pallas import tpu as pltpu

EPS = 1e-5  # torch.nn.GroupNorm default


def _round_up(x, m):
    return -(-x // m) * m


# --------------------------------------------------------------------------
# Weight folding: stride-1 conv; the KW taps and the W zero-padding are
# folded into KH banded matrices acting on an unpadded (W*Cin) slab row.
# --------------------------------------------------------------------------
def _fold_conv_weights(w, width, pad):
    c_out, c_in, kh, kw = w.shape
    w = w.astype(jnp.float32)
    mats = []
    for dh in range(kh):
        m = jnp.zeros((width * c_in, width * c_out), jnp.float32)
        for dw in range(kw):
            # sel[wi, wo] = 1  iff  wi = wo + dw - pad  (W zero-pad folded in)
            sel = jnp.eye(width, width, k=pad - dw, dtype=jnp.float32)
            m = m + jnp.kron(sel, w[:, :, dh, dw].T)
        mats.append(m)
    return jnp.stack(mats)                       # (KH, W*Cin, W*Cout)


# --------------------------------------------------------------------------
# Fused kernel: conv1+ReLU+GN -> conv2+ReLU+GN -> MaxPool2d(2) on an
# (nb*H, W*C) lane-dense slab.  Shifts/pool neighbours use pltpu.roll (XLU)
# + VPU masks; only true contractions hit the MXU.
# --------------------------------------------------------------------------
def _make_fused_kernel(kh, pad, height, nho, wco, c_out, inv_count, eps):
    def kernel(x_ref, w1_ref, w2_ref, c_ref, a_ref, at_ref, g_ref, gt_ref,
               re_ref, ce_ref, o_ref):
        cst = c_ref[...]                          # (8, wco) packed constants
        b1, b2 = cst[0:1, :], cst[1:2, :]
        gamma, beta = cst[2:3, :], cst[3:4, :]
        a, at = a_ref[...], at_ref[...]           # (nho, nbp), (nbp, nho)
        g, gt = g_ref[...], gt_ref[...]           # (wco, gp),  (gp, wco)

        # Row index within each sample; hoisted and reused by every tap mask.
        hmod = lax.broadcasted_iota(jnp.int32, (nho, 1), 0) % height
        masks = []
        for dh in range(kh):                      # static unroll
            lo = max(0, pad - dh)
            hi = height - max(0, dh - pad)
            if lo == 0 and hi == height:
                masks.append(None)                # dh == pad: no shift/mask
            else:
                masks.append(jnp.logical_and(hmod >= lo, hmod < hi))

        def shift_rows(z, dh):
            shift = (pad - dh) % nho
            rows = z if shift == 0 else pltpu.roll(z, shift, axis=0)
            m = masks[dh]
            return rows if m is None else jnp.where(m, rows, 0.0)

        def conv_relu(z, w_ref, brow):
            acc = jnp.dot(shift_rows(z, 0), w_ref[0],
                          preferred_element_type=jnp.float32)
            for dh in range(1, kh):               # static unroll, kernel rows
                acc = acc + jnp.dot(shift_rows(z, dh), w_ref[dh],
                                    preferred_element_type=jnp.float32)
            return jnp.maximum(acc + brow, 0.0)   # bias + ReLU

        def spread_stats(q):
            # Per-(sample, group) sums via the rank factorisation, spread back.
            s = jnp.dot(jnp.dot(at, q, preferred_element_type=jnp.float32), g,
                        preferred_element_type=jnp.float32)      # (nbp, gp)
            full = jnp.dot(jnp.dot(a, s, preferred_element_type=jnp.float32),
                           gt, preferred_element_type=jnp.float32)
            return full * inv_count

        def group_norm(z):
            m = spread_stats(z)
            d = z - m
            v = spread_stats(d * d)               # two-pass variance
            return d * lax.rsqrt(v + eps) * gamma + beta

        x = x_ref[...]                                        # (nho, W*Cin)
        y1 = group_norm(conv_relu(x, w1_ref, b1))             # (nho, wco)
        y2 = group_norm(conv_relu(y1, w2_ref, b2))            # (nho, wco)

        # MaxPool2d(2): neighbour max via rolls, then ONE even-row gather and
        # ONE even-column-block gather (odd-row / odd-column gathers removed).
        rmax = jnp.maximum(y2, pltpu.roll(y2, nho - 1, axis=0))
        rows = jnp.dot(re_ref[...], rmax, preferred_element_type=jnp.float32)
        cmax = jnp.maximum(rows, pltpu.roll(rows, wco - c_out, axis=1))
        o_ref[...] = jnp.dot(cmax, ce_ref[...],
                             preferred_element_type=jnp.float32)

    return kernel


# --------------------------------------------------------------------------
# Builder: precompute all weight-derived constants once, return a jitted
# forward(x_nchw) that issues a single pallas_call.
# --------------------------------------------------------------------------
def make_conv2d_down(w1, b1, w2, b2, gamma, beta, *, groups, padding,
                     batch, height, width, samples_per_block=None):
    c_out, c_in, kh, kw = w1.shape
    assert w2.shape == (c_out, c_out, kh, kw)
    assert kh == kw
    assert 2 * padding == kh - 1, "only stride=1 'same' conv supported"
    assert c_out % groups == 0

    N, H, W = batch, height, width
    assert H % 2 == 0 and W % 2 == 0

    # Samples per grid step.  Default: all samples in one step (v5e/v6e:
    # fewer, fuller steps).  For v7x pass N//2 (or less) so num_blocks is a
    # multiple of 2 and both TensorCores get work.
    nb = samples_per_block or N
    assert N % nb == 0
    num_blocks = N // nb

    cpg = c_out // groups
    wci, wco = W * c_in, W * c_out
    hp, wp = H // 2, W // 2
    nho, nhp = nb * H, nb * hp
    wcp = wp * c_out
    inv_count = 1.0 / float(H * W * cpg)

    # ---- constant operands (built once, reused every forward) -------------
    bigw1 = _fold_conv_weights(w1, W, padding)        # (KH, W*Cin , W*Cout)
    bigw2 = _fold_conv_weights(w2, W, padding)        # (KH, W*Cout, W*Cout)

    # b1 / b2 / gamma / beta packed into one sublane-aligned (8, wco) operand.
    consts = jnp.zeros((8, wco), jnp.float32)
    for r, vec in enumerate((b1, b2, gamma, beta)):
        consts = consts.at[r].set(jnp.tile(vec.astype(jnp.float32), W))

    # Factored GroupNorm spreads; small dims padded to a sublane multiple
    # (the extra zero rows/cols are inert).
    nbp, gp = _round_up(nb, 8), _round_up(groups, 8)
    a_mat = jnp.zeros((nho, nbp), jnp.float32).at[:, :nb].set(
        jnp.kron(jnp.eye(nb, dtype=jnp.float32),
                 jnp.ones((H, 1), jnp.float32)))               # (nho, nbp)
    at_mat = a_mat.T                                            # (nbp, nho)
    grp = (jnp.arange(wco) % c_out) // cpg
    g_mat = jnp.zeros((wco, gp), jnp.float32).at[:, :groups].set(
        (grp[:, None] == jnp.arange(groups)[None, :]).astype(jnp.float32))
    gt_mat = g_mat.T                                            # (gp, wco)

    # MaxPool gathers: even rows / even column-blocks only.
    re = jnp.eye(nho, dtype=jnp.float32)[0::2]                  # (nhp, nho)
    ce = jnp.kron(jnp.eye(W, dtype=jnp.float32)[0::2].T,
                  jnp.eye(c_out, dtype=jnp.float32))            # (wco, wcp)

    # ---- footprint-derived compiler hints ----------------------------------
    fpb = 4  # f32 bytes
    const_bytes = fpb * int(bigw1.size + bigw2.size + consts.size + a_mat.size
                            + at_mat.size + g_mat.size + gt_mat.size
                            + re.size + ce.size)
    act_bytes = fpb * nho * max(wci, wco)
    vmem_limit = int(min(64 << 20, max(32 << 20,
                         2 * const_bytes + 12 * act_bytes
                         + 4 * fpb * nhp * wcp + (2 << 20))))

    gn_spread = 2 * (nbp * nho * wco + nbp * wco * gp
                     + nho * nbp * gp + nho * gp * wco)
    flops = num_blocks * (2 * kh * nho * (wci + wco) * wco          # convs
                          + 4 * gn_spread + 24 * nho * wco          # GN
                          + 2 * (nhp * nho * wco + nhp * wco * wcp))  # pool
    cost = pl.CostEstimate(
        flops=int(flops),
        transcendentals=int(num_blocks * 2 * nho * wco),            # rsqrt
        bytes_accessed=int(fpb * (N * H * wci + N * hp * wcp) + const_bytes))

    kernel = _make_fused_kernel(kh, padding, H, nho, wco, c_out, inv_count, EPS)

    def build_call(single_buffer_consts):
        ckw = ({"pipeline_mode": pl.Buffered(1)}
               if single_buffer_consts else {})

        def cspec(shape):
            ix = (lambda i: (0, 0, 0)) if len(shape) == 3 else (lambda i: (0, 0))
            return pl.BlockSpec(shape, ix, **ckw)

        return pl.pallas_call(
            kernel,
            out_shape=jax.ShapeDtypeStruct((N * hp, wcp), jnp.float32),
            grid=(num_blocks,),
            in_specs=[
                pl.BlockSpec((nho, wci), lambda i: (i, 0)),   # x slab block
                cspec((kh, wci, wco)),                        # folded conv1 w
                cspec((kh, wco, wco)),                        # folded conv2 w
                cspec((8, wco)),                              # b1/b2/gamma/beta
                cspec((nho, nbp)),                            # GN row factor A
                cspec((nbp, nho)),                            # A.T
                cspec((wco, gp)),                             # GN col factor G
                cspec((gp, wco)),                             # G.T
                cspec((nhp, nho)),                            # pool: even rows
                cspec((wco, wcp)),                            # pool: even cols
            ],
            out_specs=pl.BlockSpec((nhp, wcp), lambda i: (i, 0)),
            compiler_params=pltpu.CompilerParams(
                dimension_semantics=("parallel",),
                vmem_limit_bytes=vmem_limit),
            cost_estimate=cost,
        )

    def make_forward(call):
        def forward(x_nchw):
            xs = jnp.transpose(x_nchw, (0, 2, 3, 1)).astype(jnp.float32)  # NHWC
            x2 = xs.reshape(N * H, wci)                                   # slab
            out = call(x2, bigw1, bigw2, consts, a_mat, at_mat, g_mat,
                       gt_mat, re, ce)
            return jnp.transpose(out.reshape(N, hp, wp, c_out), (0, 3, 1, 2))
        return jax.jit(forward)

    # Prefer single-buffered constant operands; probe-compile once and fall
    # back to default double buffering if this JAX rejects pl.Buffered(1).
    try:
        fwd = make_forward(build_call(True))
        jax.block_until_ready(fwd(jnp.zeros((N, c_in, H, W), jnp.float32)))
        return fwd
    except Exception:
        return make_forward(build_call(False))


# --------------------------------------------------------------------------
# Pure-JAX reference (mirrors the PyTorch module) for the correctness check
# --------------------------------------------------------------------------
def reference(x_nchw, w1, b1, w2, b2, gamma, beta, *, groups, padding):
    def conv(x, w, b):
        return lax.conv_general_dilated(
            x, jnp.transpose(w, (2, 3, 1, 0)), (1, 1),
            ((padding, padding), (padding, padding)),
            dimension_numbers=("NHWC", "HWIO", "NHWC")) + b

    def gn(x):
        n, h, w, c = x.shape
        xg = x.reshape(n, h, w, groups, c // groups)
        mu = xg.mean(axis=(1, 2, 4), keepdims=True)
        var = ((xg - mu) ** 2).mean(axis=(1, 2, 4), keepdims=True)
        xn = ((xg - mu) / jnp.sqrt(var + EPS)).reshape(n, h, w, c)
        return xn * gamma + beta

    x = jnp.transpose(x_nchw, (0, 2, 3, 1))
    y = gn(jnp.maximum(conv(x, w1, b1), 0.0))
    y = gn(jnp.maximum(conv(y, w2, b2), 0.0))
    n, h, w, c = y.shape
    y = y.reshape(n, h // 2, 2, w // 2, 2, c).max(axis=(2, 4))
    return jnp.transpose(y, (0, 3, 1, 2))


if __name__ == "__main__":
    N, C_IN, C_OUT, H, W = 2, 4, 8, 16, 16
    K, PAD, GROUPS = 3, 1, 4                     # cfg.unet.model.group_norm = 4

    key = jax.random.PRNGKey(0)
    ks = jax.random.split(key, 7)
    x = jax.random.normal(ks[0], (N, C_IN, H, W), jnp.float32)
    w1 = 0.1 * jax.random.normal(ks[1], (C_OUT, C_IN, K, K), jnp.float32)
    b1 = 0.1 * jax.random.normal(ks[2], (C_OUT,), jnp.float32)
    w2 = 0.1 * jax.random.normal(ks[3], (C_OUT, C_OUT, K, K), jnp.float32)
    b2 = 0.1 * jax.random.normal(ks[4], (C_OUT,), jnp.float32)
    # The module reuses the SAME GroupNorm layer twice -> shared gamma/beta.
    gamma = 1.0 + 0.1 * jax.random.normal(ks[5], (C_OUT,), jnp.float32)
    beta = 0.1 * jax.random.normal(ks[6], (C_OUT,), jnp.float32)

    fwd = make_conv2d_down(w1, b1, w2, b2, gamma, beta, groups=GROUPS,
                           padding=PAD, batch=N, height=H, width=W)
    out = jax.block_until_ready(fwd(x))
    assert out.shape == (N, C_OUT, H // 2, W // 2), out.shape

    ref = reference(x, w1, b1, w2, b2, gamma, beta, groups=GROUPS, padding=PAD)
    if not jnp.allclose(out, ref, atol=1e-4, rtol=1e-4):
        max_err = float(jnp.max(jnp.abs(out - ref)))
        raise AssertionError(f"Pallas result mismatch, max abs err = {max_err}")

    print("KERNEL_OK")
</pallas_src>

<mosaic_0001>
module attributes {stable_mosaic.version = 11 : i64} {
  func.func @kernel(%arg0: i32, %arg1: memref<32x64xf32, #tpu.memory_space<vmem>>, %arg2: memref<3x64x128xf32, #tpu.memory_space<vmem>>, %arg3: memref<3x128x128xf32, #tpu.memory_space<vmem>>, %arg4: memref<8x128xf32, #tpu.memory_space<vmem>>, %arg5: memref<32x8xf32, #tpu.memory_space<vmem>>, %arg6: memref<8x32xf32, #tpu.memory_space<vmem>>, %arg7: memref<128x8xf32, #tpu.memory_space<vmem>>, %arg8: memref<8x128xf32, #tpu.memory_space<vmem>>, %arg9: memref<16x32xf32, #tpu.memory_space<vmem>>, %arg10: memref<128x64xf32, #tpu.memory_space<vmem>>, %arg11: memref<16x64xf32, #tpu.memory_space<vmem>>) attributes {dimension_semantics = [#tpu.dimension_semantics<parallel>], iteration_bounds = array<i64: 1>, scalar_prefetch = 0 : i64, scratch_operands = 0 : i64, tpu.core_type = #tpu.core_type<tc>, window_params = [{transform_indices = @transform_0, window_bounds = array<i64: 32, 64>}, {pipeline_mode = #tpu.pipeline_mode<synchronous>, transform_indices = @transform_1, window_bounds = array<i64: 3, 64, 128>}, {pipeline_mode = #tpu.pipeline_mode<synchronous>, transform_indices = @transform_2, window_bounds = array<i64: 3, 128, 128>}, {pipeline_mode = #tpu.pipeline_mode<synchronous>, transform_indices = @transform_3, window_bounds = array<i64: 8, 128>}, {pipeline_mode = #tpu.pipeline_mode<synchronous>, transform_indices = @transform_4, window_bounds = array<i64: 32, 8>}, {pipeline_mode = #tpu.pipeline_mode<synchronous>, transform_indices = @transform_5, window_bounds = array<i64: 8, 32>}, {pipeline_mode = #tpu.pipeline_mode<synchronous>, transform_indices = @transform_6, window_bounds = array<i64: 128, 8>}, {pipeline_mode = #tpu.pipeline_mode<synchronous>, transform_indices = @transform_7, window_bounds = array<i64: 8, 128>}, {pipeline_mode = #tpu.pipeline_mode<synchronous>, transform_indices = @transform_8, window_bounds = array<i64: 16, 32>}, {pipeline_mode = #tpu.pipeline_mode<synchronous>, transform_indices = @transform_9, window_bounds = array<i64: 128, 64>}, {transform_indices = @transform_10, window_bounds = array<i64: 16, 64>}]} {
    %c0 = arith.constant 0 : index
    %c0_0 = arith.constant 0 : index
    %0 = vector.load %arg4[%c0, %c0_0] : memref<8x128xf32, #tpu.memory_space<vmem>>, vector<8x128xf32>
    %1 = vector.extract_strided_slice %0 {offsets = [0, 0], sizes = [1, 128], strides = [1, 1]} : vector<8x128xf32> to vector<1x128xf32>
    %2 = vector.extract_strided_slice %0 {offsets = [1, 0], sizes = [1, 128], strides = [1, 1]} : vector<8x128xf32> to vector<1x128xf32>
    %3 = vector.extract_strided_slice %0 {offsets = [2, 0], sizes = [1, 128], strides = [1, 1]} : vector<8x128xf32> to vector<1x128xf32>
    %4 = vector.extract_strided_slice %0 {offsets = [3, 0], sizes = [1, 128], strides = [1, 1]} : vector<8x128xf32> to vector<1x128xf32>
    %c0_1 = arith.constant 0 : index
    %c0_2 = arith.constant 0 : index
    %5 = vector.load %arg5[%c0_1, %c0_2] : memref<32x8xf32, #tpu.memory_space<vmem>>, vector<32x8xf32>
    %c0_3 = arith.constant 0 : index
    %c0_4 = arith.constant 0 : index
    %6 = vector.load %arg6[%c0_3, %c0_4] : memref<8x32xf32, #tpu.memory_space<vmem>>, vector<8x32xf32>
    %c0_5 = arith.constant 0 : index
    %c0_6 = arith.constant 0 : index
    %7 = vector.load %arg7[%c0_5, %c0_6] : memref<128x8xf32, #tpu.memory_space<vmem>>, vector<128x8xf32>
    %c0_7 = arith.constant 0 : index
    %c0_8 = arith.constant 0 : index
    %8 = vector.load %arg8[%c0_7, %c0_8] : memref<8x128xf32, #tpu.memory_space<vmem>>, vector<8x128xf32>
    %9 = tpu.iota {dimensions = array<i32: 0>} : vector<32x1xi32>
    %c16_i32 = arith.constant 16 : i32
    %c0_i32 = arith.constant 0 : i32
    %10 = arith.cmpi eq, %c16_i32, %c0_i32 : i32
    %c1_i32 = arith.constant 1 : i32
    %11 = arith.select %10, %c1_i32, %c16_i32 : i32
    %12 = vector.broadcast %11 : i32 to vector<32x1xi32>
    %13 = arith.remsi %9, %12 : vector<32x1xi32>
    %c0_i32_9 = arith.constant 0 : i32
    %14 = vector.broadcast %c0_i32_9 : i32 to vector<32x1xi32>
    %15 = arith.cmpi ne, %13, %14 : vector<32x1xi32>
    %c0_i32_10 = arith.constant 0 : i32
    %16 = vector.broadcast %c0_i32_10 : i32 to vector<32x1xi32>
    %17 = arith.cmpi slt, %13, %16 : vector<32x1xi32>
    %c0_i32_11 = arith.constant 0 : i32
    %18 = arith.cmpi slt, %11, %c0_i32_11 : i32
    %19 = vector.broadcast %18 : i1 to vector<32x1xi1>
    %20 = vector.broadcast %19 : vector<32x1xi1> to vector<32x1xi1>
    %21 = arith.xori %17, %20 : vector<32x1xi1>
    %22 = arith.andi %21, %15 : vector<32x1xi1>
    %23 = vector.broadcast %11 : i32 to vector<32x1xi32>
    %24 = arith.addi %13, %23 : vector<32x1xi32>
    %25 = arith.select %22, %24, %13 : vector<32x1xi1>, vector<32x1xi32>
    %c1_i32_12 = arith.constant 1 : i32
    %26 = vector.broadcast %c1_i32_12 : i32 to vector<32x1xi32>
    %27 = arith.cmpi sge, %25, %26 : vector<32x1xi32>
    %c16_i32_13 = arith.constant 16 : i32
    %28 = vector.broadcast %c16_i32_13 : i32 to vector<32x1xi32>
    %29 = arith.cmpi slt, %25, %28 : vector<32x1xi32>
    %30 = arith.andi %27, %29 : vector<32x1xi1>
    %c0_i32_14 = arith.constant 0 : i32
    %31 = vector.broadcast %c0_i32_14 : i32 to vector<32x1xi32>
    %32 = arith.cmpi sge, %25, %31 : vector<32x1xi32>
    %c15_i32 = arith.constant 15 : i32
    %33 = vector.broadcast %c15_i32 : i32 to vector<32x1xi32>
    %34 = arith.cmpi slt, %25, %33 : vector<32x1xi32>
    %35 = arith.andi %32, %34 : vector<32x1xi1>
    %c0_15 = arith.constant 0 : index
    %c0_16 = arith.constant 0 : index
    %36 = vector.load %arg1[%c0_15, %c0_16] : memref<32x64xf32, #tpu.memory_space<vmem>>, vector<32x64xf32>
    %c1_i32_17 = arith.constant 1 : i32
    %37 = tpu.dynamic_rotate %36 by %c1_i32_17 dim 0 : vector<32x64xf32>, i32 -> vector<32x64xf32>
    %cst = arith.constant 0.000000e+00 : f32
    %38 = vector.shape_cast %30 : vector<32x1xi1> to vector<32x1xi1>
    %39 = vector.broadcast %38 : vector<32x1xi1> to vector<32x64xi1>
    %40 = vector.broadcast %cst : f32 to vector<32x64xf32>
    %41 = arith.select %39, %37, %40 : vector<32x64xi1>, vector<32x64xf32>
    %c0_18 = arith.constant 0 : index
    %c0_19 = arith.constant 0 : index
    %c0_20 = arith.constant 0 : index
    %42 = vector.load %arg2[%c0_18, %c0_19, %c0_20] : memref<3x64x128xf32, #tpu.memory_space<vmem>>, vector<1x64x128xf32>
    %43 = vector.shape_cast %42 : vector<1x64x128xf32> to vector<64x128xf32>
    %cst_21 = arith.constant dense<0.000000e+00> : vector<32x128xf32>
    %44 = tpu.matmul %41, %43, %cst_21 {dimension_numbers = #tpu.dot_dimension_numbers<[1], [0], [0], [1], [0, 0, 1, 1], [], []>} : vector<32x64xf32>, vector<64x128xf32>, vector<32x128xf32> -> vector<32x128xf32>
    %c1 = arith.constant 1 : index
    %c0_22 = arith.constant 0 : index
    %c0_23 = arith.constant 0 : index
    %45 = vector.load %arg2[%c1, %c0_22, %c0_23] : memref<3x64x128xf32, #tpu.memory_space<vmem>>, vector<1x64x128xf32>
    %46 = vector.shape_cast %45 : vector<1x64x128xf32> to vector<64x128xf32>
    %cst_24 = arith.constant dense<0.000000e+00> : vector<32x128xf32>
    %47 = tpu.matmul %36, %46, %cst_24 {dimension_numbers = #tpu.dot_dimension_numbers<[1], [0], [0], [1], [0, 0, 1, 1], [], []>} : vector<32x64xf32>, vector<64x128xf32>, vector<32x128xf32> -> vector<32x128xf32>
    %48 = arith.addf %44, %47 : vector<32x128xf32>
    %c31_i32 = arith.constant 31 : i32
    %49 = tpu.dynamic_rotate %36 by %c31_i32 dim 0 : vector<32x64xf32>, i32 -> vector<32x64xf32>
    %cst_25 = arith.constant 0.000000e+00 : f32
    %50 = vector.shape_cast %35 : vector<32x1xi1> to vector<32x1xi1>
    %51 = vector.broadcast %50 : vector<32x1xi1> to vector<32x64xi1>
    %52 = vector.broadcast %cst_25 : f32 to vector<32x64xf32>
    %53 = arith.select %51, %49, %52 : vector<32x64xi1>, vector<32x64xf32>
    %c2 = arith.constant 2 : index
    %c0_26 = arith.constant 0 : index
    %c0_27 = arith.constant 0 : index
    %54 = vector.load %arg2[%c2, %c0_26, %c0_27] : memref<3x64x128xf32, #tpu.memory_space<vmem>>, vector<1x64x128xf32>
    %55 = vector.shape_cast %54 : vector<1x64x128xf32> to vector<64x128xf32>
    %cst_28 = arith.constant dense<0.000000e+00> : vector<32x128xf32>
    %56 = tpu.matmul %53, %55, %cst_28 {dimension_numbers = #tpu.dot_dimension_numbers<[1], [0], [0], [1], [0, 0, 1, 1], [], []>} : vector<32x64xf32>, vector<64x128xf32>, vector<32x128xf32> -> vector<32x128xf32>
    %57 = arith.addf %48, %56 : vector<32x128xf32>
    %58 = vector.broadcast %1 : vector<1x128xf32> to vector<32x128xf32>
    %59 = arith.addf %57, %58 : vector<32x128xf32>
    %cst_29 = arith.constant 0.000000e+00 : f32
    %60 = vector.broadcast %cst_29 : f32 to vector<32x128xf32>
    %61 = arith.maximumf %59, %60 : vector<32x128xf32>
    %cst_30 = arith.constant dense<0.000000e+00> : vector<8x128xf32>
    %62 = tpu.matmul %6, %61, %cst_30 {dimension_numbers = #tpu.dot_dimension_numbers<[1], [0], [0], [1], [0, 0, 1, 1], [], []>} : vector<8x32xf32>, vector<32x128xf32>, vector<8x128xf32> -> vector<8x128xf32>
    %cst_31 = arith.constant dense<0.000000e+00> : vector<8x8xf32>
    %63 = tpu.matmul %62, %7, %cst_31 {dimension_numbers = #tpu.dot_dimension_numbers<[1], [0], [0], [1], [0, 0, 1, 1], [], []>} : vector<8x128xf32>, vector<128x8xf32>, vector<8x8xf32> -> vector<8x8xf32>
    %cst_32 = arith.constant dense<0.000000e+00> : vector<32x8xf32>
    %64 = tpu.matmul %5, %63, %cst_32 {dimension_numbers = #tpu.dot_dimension_numbers<[1], [0], [0], [1], [0, 0, 1, 1], [], []>} : vector<32x8xf32>, vector<8x8xf32>, vector<32x8xf32> -> vector<32x8xf32>
    %cst_33 = arith.constant dense<0.000000e+00> : vector<32x128xf32>
    %65 = tpu.matmul %64, %8, %cst_33 {dimension_numbers = #tpu.dot_dimension_numbers<[1], [0], [0], [1], [0, 0, 1, 1], [], []>} : vector<32x8xf32>, vector<8x128xf32>, vector<32x128xf32> -> vector<32x128xf32>
    %cst_34 = arith.constant 0.001953125 : f32
    %66 = vector.broadcast %cst_34 : f32 to vector<32x128xf32>
    %67 = arith.mulf %65, %66 : vector<32x128xf32>
    %68 = arith.subf %61, %67 : vector<32x128xf32>
    %69 = arith.mulf %68, %68 : vector<32x128xf32>
    %cst_35 = arith.constant dense<0.000000e+00> : vector<8x128xf32>
    %70 = tpu.matmul %6, %69, %cst_35 {dimension_numbers = #tpu.dot_dimension_numbers<[1], [0], [0], [1], [0, 0, 1, 1], [], []>} : vector<8x32xf32>, vector<32x128xf32>, vector<8x128xf32> -> vector<8x128xf32>
    %cst_36 = arith.constant dense<0.000000e+00> : vector<8x8xf32>
    %71 = tpu.matmul %70, %7, %cst_36 {dimension_numbers = #tpu.dot_dimension_numbers<[1], [0], [0], [1], [0, 0, 1, 1], [], []>} : vector<8x128xf32>, vector<128x8xf32>, vector<8x8xf32> -> vector<8x8xf32>
    %cst_37 = arith.constant dense<0.000000e+00> : vector<32x8xf32>
    %72 = tpu.matmul %5, %71, %cst_37 {dimension_numbers = #tpu.dot_dimension_numbers<[1], [0], [0], [1], [0, 0, 1, 1], [], []>} : vector<32x8xf32>, vector<8x8xf32>, vector<32x8xf32> -> vector<32x8xf32>
    %cst_38 = arith.constant dense<0.000000e+00> : vector<32x128xf32>
    %73 = tpu.matmul %72, %8, %cst_38 {dimension_numbers = #tpu.dot_dimension_numbers<[1], [0], [0], [1], [0, 0, 1, 1], [], []>} : vector<32x8xf32>, vector<8x128xf32>, vector<32x128xf32> -> vector<32x128xf32>
    %cst_39 = arith.constant 0.001953125 : f32
    %74 = vector.broadcast %cst_39 : f32 to vector<32x128xf32>
    %75 = arith.mulf %73, %74 : vector<32x128xf32>
    %cst_40 = arith.constant 9.99999974E-6 : f32
    %76 = vector.broadcast %cst_40 : f32 to vector<32x128xf32>
    %77 = arith.addf %75, %76 : vector<32x128xf32>
    %78 = math.rsqrt %77 : vector<32x128xf32>
    %79 = arith.mulf %68, %78 : vector<32x128xf32>
    %80 = vector.broadcast %3 : vector<1x128xf32> to vector<32x128xf32>
    %81 = arith.mulf %79, %80 : vector<32x128xf32>
    %82 = vector.broadcast %4 : vector<1x128xf32> to vector<32x128xf32>
    %83 = arith.addf %81, %82 : vector<32x128xf32>
    %c1_i32_41 = arith.constant 1 : i32
    %84 = tpu.dynamic_rotate %83 by %c1_i32_41 dim 0 : vector<32x128xf32>, i32 -> vector<32x128xf32>
    %cst_42 = arith.constant 0.000000e+00 : f32
    %85 = vector.shape_cast %30 : vector<32x1xi1> to vector<32x1xi1>
    %86 = vector.broadcast %85 : vector<32x1xi1> to vector<32x128xi1>
    %87 = vector.broadcast %cst_42 : f32 to vector<32x128xf32>
    %88 = arith.select %86, %84, %87 : vector<32x128xi1>, vector<32x128xf32>
    %c0_43 = arith.constant 0 : index
    %c0_44 = arith.constant 0 : index
    %c0_45 = arith.constant 0 : index
    %89 = vector.load %arg3[%c0_43, %c0_44, %c0_45] : memref<3x128x128xf32, #tpu.memory_space<vmem>>, vector<1x128x128xf32>
    %90 = vector.shape_cast %89 : vector<1x128x128xf32> to vector<128x128xf32>
    %cst_46 = arith.constant dense<0.000000e+00> : vector<32x128xf32>
    %91 = tpu.matmul %88, %90, %cst_46 {dimension_numbers = #tpu.dot_dimension_numbers<[1], [0], [0], [1], [0, 0, 1, 1], [], []>} : vector<32x128xf32>, vector<128x128xf32>, vector<32x128xf32> -> vector<32x128xf32>
    %c1_47 = arith.constant 1 : index
    %c0_48 = arith.constant 0 : index
    %c0_49 = arith.constant 0 : index
    %92 = vector.load %arg3[%c1_47, %c0_48, %c0_49] : memref<3x128x128xf32, #tpu.memory_space<vmem>>, vector<1x128x128xf32>
    %93 = vector.shape_cast %92 : vector<1x128x128xf32> to vector<128x128xf32>
    %cst_50 = arith.constant dense<0.000000e+00> : vector<32x128xf32>
    %94 = tpu.matmul %83, %93, %cst_50 {dimension_numbers = #tpu.dot_dimension_numbers<[1], [0], [0], [1], [0, 0, 1, 1], [], []>} : vector<32x128xf32>, vector<128x128xf32>, vector<32x128xf32> -> vector<32x128xf32>
    %95 = arith.addf %91, %94 : vector<32x128xf32>
    %c31_i32_51 = arith.constant 31 : i32
    %96 = tpu.dynamic_rotate %83 by %c31_i32_51 dim 0 : vector<32x128xf32>, i32 -> vector<32x128xf32>
    %cst_52 = arith.constant 0.000000e+00 : f32
    %97 = vector.shape_cast %35 : vector<32x1xi1> to vector<32x1xi1>
    %98 = vector.broadcast %97 : vector<32x1xi1> to vector<32x128xi1>
    %99 = vector.broadcast %cst_52 : f32 to vector<32x128xf32>
    %100 = arith.select %98, %96, %99 : vector<32x128xi1>, vector<32x128xf32>
    %c2_53 = arith.constant 2 : index
    %c0_54 = arith.constant 0 : index
    %c0_55 = arith.constant 0 : index
    %101 = vector.load %arg3[%c2_53, %c0_54, %c0_55] : memref<3x128x128xf32, #tpu.memory_space<vmem>>, vector<1x128x128xf32>
    %102 = vector.shape_cast %101 : vector<1x128x128xf32> to vector<128x128xf32>
    %cst_56 = arith.constant dense<0.000000e+00> : vector<32x128xf32>
    %103 = tpu.matmul %100, %102, %cst_56 {dimension_numbers = #tpu.dot_dimension_numbers<[1], [0], [0], [1], [0, 0, 1, 1], [], []>} : vector<32x128xf32>, vector<128x128xf32>, vector<32x128xf32> -> vector<32x128xf32>
    %104 = arith.addf %95, %103 : vector<32x128xf32>
    %105 = vector.broadcast %2 : vector<1x128xf32> to vector<32x128xf32>
    %106 = arith.addf %104, %105 : vector<32x128xf32>
    %cst_57 = arith.constant 0.000000e+00 : f32
    %107 = vector.broadcast %cst_57 : f32 to vector<32x128xf32>
    %108 = arith.maximumf %106, %107 : vector<32x128xf32>
    %cst_58 = arith.constant dense<0.000000e+00> : vector<8x128xf32>
    %109 = tpu.matmul %6, %108, %cst_58 {dimension_numbers = #tpu.dot_dimension_numbers<[1], [0], [0], [1], [0, 0, 1, 1], [], []>} : vector<8x32xf32>, vector<32x128xf32>, vector<8x128xf32> -> vector<8x128xf32>
    %cst_59 = arith.constant dense<0.000000e+00> : vector<8x8xf32>
    %110 = tpu.matmul %109, %7, %cst_59 {dimension_numbers = #tpu.dot_dimension_numbers<[1], [0], [0], [1], [0, 0, 1, 1], [], []>} : vector<8x128xf32>, vector<128x8xf32>, vector<8x8xf32> -> vector<8x8xf32>
    %cst_60 = arith.constant dense<0.000000e+00> : vector<32x8xf32>
    %111 = tpu.matmul %5, %110, %cst_60 {dimension_numbers = #tpu.dot_dimension_numbers<[1], [0], [0], [1], [0, 0, 1, 1], [], []>} : vector<32x8xf32>, vector<8x8xf32>, vector<32x8xf32> -> vector<32x8xf32>
    %cst_61 = arith.constant dense<0.000000e+00> : vector<32x128xf32>
    %112 = tpu.matmul %111, %8, %cst_61 {dimension_numbers = #tpu.dot_dimension_numbers<[1], [0], [0], [1], [0, 0, 1, 1], [], []>} : vector<32x8xf32>, vector<8x128xf32>, vector<32x128xf32> -> vector<32x128xf32>
    %cst_62 = arith.constant 0.001953125 : f32
    %113 = vector.broadcast %cst_62 : f32 to vector<32x128xf32>
    %114 = arith.mulf %112, %113 : vector<32x128xf32>
    %115 = arith.subf %108, %114 : vector<32x128xf32>
    %116 = arith.mulf %115, %115 : vector<32x128xf32>
    %cst_63 = arith.constant dense<0.000000e+00> : vector<8x128xf32>
    %117 = tpu.matmul %6, %116, %cst_63 {dimension_numbers = #tpu.dot_dimension_numbers<[1], [0], [0], [1], [0, 0, 1, 1], [], []>} : vector<8x32xf32>, vector<32x128xf32>, vector<8x128xf32> -> vector<8x128xf32>
    %cst_64 = arith.constant dense<0.000000e+00> : vector<8x8xf32>
    %118 = tpu.matmul %117, %7, %cst_64 {dimension_numbers = #tpu.dot_dimension_numbers<[1], [0], [0], [1], [0, 0, 1, 1], [], []>} : vector<8x128xf32>, vector<128x8xf32>, vector<8x8xf32> -> vector<8x8xf32>
    %cst_65 = arith.constant dense<0.000000e+00> : vector<32x8xf32>
    %119 = tpu.matmul %5, %118, %cst_65 {dimension_numbers = #tpu.dot_dimension_numbers<[1], [0], [0], [1], [0, 0, 1, 1], [], []>} : vector<32x8xf32>, vector<8x8xf32>, vector<32x8xf32> -> vector<32x8xf32>
    %cst_66 = arith.constant dense<0.000000e+00> : vector<32x128xf32>
    %120 = tpu.matmul %119, %8, %cst_66 {dimension_numbers = #tpu.dot_dimension_numbers<[1], [0], [0], [1], [0, 0, 1, 1], [], []>} : vector<32x8xf32>, vector<8x128xf32>, vector<32x128xf32> -> vector<32x128xf32>
    %cst_67 = arith.constant 0.001953125 : f32
    %121 = vector.broadcast %cst_67 : f32 to vector<32x128xf32>
    %122 = arith.mulf %120, %121 : vector<32x128xf32>
    %cst_68 = arith.constant 9.99999974E-6 : f32
    %123 = vector.broadcast %cst_68 : f32 to vector<32x128xf32>
    %124 = arith.addf %122, %123 : vector<32x128xf32>
    %125 = math.rsqrt %124 : vector<32x128xf32>
    %126 = arith.mulf %115, %125 : vector<32x128xf32>
    %127 = vector.broadcast %3 : vector<1x128xf32> to vector<32x128xf32>
    %128 = arith.mulf %126, %127 : vector<32x128xf32>
    %129 = vector.broadcast %4 : vector<1x128xf32> to vector<32x128xf32>
    %130 = arith.addf %128, %129 : vector<32x128xf32>
    %c31_i32_69 = arith.constant 31 : i32
    %131 = tpu.dynamic_rotate %130 by %c31_i32_69 dim 0 : vector<32x128xf32>, i32 -> vector<32x128xf32>
    %132 = arith.maximumf %130, %131 : vector<32x128xf32>
    %c0_70 = arith.constant 0 : index
    %c0_71 = arith.constant 0 : index
    %133 = vector.load %arg9[%c0_70, %c0_71] : memref<16x32xf32, #tpu.memory_space<vmem>>, vector<16x32xf32>
    %cst_72 = arith.constant dense<0.000000e+00> : vector<16x128xf32>
    %134 = tpu.matmul %133, %132, %cst_72 {dimension_numbers = #tpu.dot_dimension_numbers<[1], [0], [0], [1], [0, 0, 1, 1], [], []>} : vector<16x32xf32>, vector<32x128xf32>, vector<16x128xf32> -> vector<16x128xf32>
    %c120_i32 = arith.constant 120 : i32
    %135 = tpu.dynamic_rotate %134 by %c120_i32 dim 1 : vector<16x128xf32>, i32 -> vector<16x128xf32>
    %136 = arith.maximumf %134, %135 : vector<16x128xf32>
    %c0_73 = arith.constant 0 : index
    %c0_74 = arith.constant 0 : index
    %137 = vector.load %arg10[%c0_73, %c0_74] : memref<128x64xf32, #tpu.memory_space<vmem>>, vector<128x64xf32>
    %cst_75 = arith.constant dense<0.000000e+00> : vector<16x64xf32>
    %138 = tpu.matmul %136, %137, %cst_75 {dimension_numbers = #tpu.dot_dimension_numbers<[1], [0], [0], [1], [0, 0, 1, 1], [], []>} : vector<16x128xf32>, vector<128x64xf32>, vector<16x64xf32> -> vector<16x64xf32>
    %c0_76 = arith.constant 0 : index
    %c0_77 = arith.constant 0 : index
    %139 = vector.load %arg11[%c0_76, %c0_77] : memref<16x64xf32, #tpu.memory_space<vmem>>, vector<16x64xf32>
    tpu.vector_store %arg11[%c0_76, %c0_77], %138 {strides = array<i32>} : memref<16x64xf32, #tpu.memory_space<vmem>>, vector<16x64xf32>,
    return
  }
  func.func @transform_0(%arg0: i32) -> (i32, i32) {
    %c0_i32 = arith.constant 0 : i32
    %c0_i32_0 = arith.constant 0 : i32
    return %arg0, %c0_i32 : i32, i32
  }
  func.func @transform_1(%arg0: i32) -> (i32, i32, i32) {
    %c0_i32 = arith.constant 0 : i32
    %c0_i32_0 = arith.constant 0 : i32
    %c0_i32_1 = arith.constant 0 : i32
    %c0_i32_2 = arith.constant 0 : i32
    return %c0_i32, %c0_i32_0, %c0_i32_1 : i32, i32, i32
  }
  func.func @transform_2(%arg0: i32) -> (i32, i32, i32) {
    %c0_i32 = arith.constant 0 : i32
    %c0_i32_0 = arith.constant 0 : i32
    %c0_i32_1 = arith.constant 0 : i32
    %c0_i32_2 = arith.constant 0 : i32
    return %c0_i32, %c0_i32_0, %c0_i32_1 : i32, i32, i32
  }
  func.func @transform_3(%arg0: i32) -> (i32, i32) {
    %c0_i32 = arith.constant 0 : i32
    %c0_i32_0 = arith.constant 0 : i32
    %c0_i32_1 = arith.constant 0 : i32
    return %c0_i32, %c0_i32_0 : i32, i32
  }
  func.func @transform_4(%arg0: i32) -> (i32, i32) {
    %c0_i32 = arith.constant 0 : i32
    %c0_i32_0 = arith.constant 0 : i32
    %c0_i32_1 = arith.constant 0 : i32
    return %c0_i32, %c0_i32_0 : i32, i32
  }
  func.func @transform_5(%arg0: i32) -> (i32, i32) {
    %c0_i32 = arith.constant 0 : i32
    %c0_i32_0 = arith.constant 0 : i32
    %c0_i32_1 = arith.constant 0 : i32
    return %c0_i32, %c0_i32_0 : i32, i32
  }
  func.func @transform_6(%arg0: i32) -> (i32, i32) {
    %c0_i32 = arith.constant 0 : i32
    %c0_i32_0 = arith.constant 0 : i32
    %c0_i32_1 = arith.constant 0 : i32
    return %c0_i32, %c0_i32_0 : i32, i32
  }
  func.func @transform_7(%arg0: i32) -> (i32, i32) {
    %c0_i32 = arith.constant 0 : i32
    %c0_i32_0 = arith.constant 0 : i32
    %c0_i32_1 = arith.constant 0 : i32
    return %c0_i32, %c0_i32_0 : i32, i32
  }
  func.func @transform_8(%arg0: i32) -> (i32, i32) {
    %c0_i32 = arith.constant 0 : i32
    %c0_i32_0 = arith.constant 0 : i32
    %c0_i32_1 = arith.constant 0 : i32
    return %c0_i32, %c0_i32_0 : i32, i32
  }
  func.func @transform_9(%arg0: i32) -> (i32, i32) {
    %c0_i32 = arith.constant 0 : i32
    %c0_i32_0 = arith.constant 0 : i32
    %c0_i32_1 = arith.constant 0 : i32
    return %c0_i32, %c0_i32_0 : i32, i32
  }
  func.func @transform_10(%arg0: i32) -> (i32, i32) {
    %c0_i32 = arith.constant 0 : i32
    %c0_i32_0 = arith.constant 0 : i32
    return %arg0, %c0_i32 : i32, i32
  }
}

module attributes {stable_mosaic.version = 11 : i64} {
  func.func @kernel(%arg0: i32, %arg1: memref<32x64xf32, #tpu.memory_space<vmem>>, %arg2: memref<3x64x128xf32, #tpu.memory_space<vmem>>, %arg3: memref<3x128x128xf32, #tpu.memory_space<vmem>>, %arg4: memref<8x128xf32, #tpu.memory_space<vmem>>, %arg5: memref<32x8xf32, #tpu.memory_space<vmem>>, %arg6: memref<8x32xf32, #tpu.memory_space<vmem>>, %arg7: memref<128x8xf32, #tpu.memory_space<vmem>>, %arg8: memref<8x128xf32, #tpu.memory_space<vmem>>, %arg9: memref<16x32xf32, #tpu.memory_space<vmem>>, %arg10: memref<128x64xf32, #tpu.memory_space<vmem>>, %arg11: memref<16x64xf32, #tpu.memory_space<vmem>>) attributes {dimension_semantics = [#tpu.dimension_semantics<parallel>], iteration_bounds = array<i64: 1>, scalar_prefetch = 0 : i64, scratch_operands = 0 : i64, tpu.core_type = #tpu.core_type<tc>, window_params = [{transform_indices = @transform_0, window_bounds = array<i64: 32, 64>}, {pipeline_mode = #tpu.pipeline_mode<synchronous>, transform_indices = @transform_1, window_bounds = array<i64: 3, 64, 128>}, {pipeline_mode = #tpu.pipeline_mode<synchronous>, transform_indices = @transform_2, window_bounds = array<i64: 3, 128, 128>}, {pipeline_mode = #tpu.pipeline_mode<synchronous>, transform_indices = @transform_3, window_bounds = array<i64: 8, 128>}, {pipeline_mode = #tpu.pipeline_mode<synchronous>, transform_indices = @transform_4, window_bounds = array<i64: 32, 8>}, {pipeline_mode = #tpu.pipeline_mode<synchronous>, transform_indices = @transform_5, window_bounds = array<i64: 8, 32>}, {pipeline_mode = #tpu.pipeline_mode<synchronous>, transform_indices = @transform_6, window_bounds = array<i64: 128, 8>}, {pipeline_mode = #tpu.pipeline_mode<synchronous>, transform_indices = @transform_7, window_bounds = array<i64: 8, 128>}, {pipeline_mode = #tpu.pipeline_mode<synchronous>, transform_indices = @transform_8, window_bounds = array<i64: 16, 32>}, {pipeline_mode = #tpu.pipeline_mode<synchronous>, transform_indices = @transform_9, window_bounds = array<i64: 128, 64>}, {transform_indices = @transform_10, window_bounds = array<i64: 16, 64>}]} {
    %c0 = arith.constant 0 : index
    %c0_0 = arith.constant 0 : index
    %0 = vector.load %arg4[%c0, %c0_0] : memref<8x128xf32, #tpu.memory_space<vmem>>, vector<8x128xf32>
    %1 = vector.extract_strided_slice %0 {offsets = [0, 0], sizes = [1, 128], strides = [1, 1]} : vector<8x128xf32> to vector<1x128xf32>
    %2 = vector.extract_strided_slice %0 {offsets = [1, 0], sizes = [1, 128], strides = [1, 1]} : vector<8x128xf32> to vector<1x128xf32>
    %3 = vector.extract_strided_slice %0 {offsets = [2, 0], sizes = [1, 128], strides = [1, 1]} : vector<8x128xf32> to vector<1x128xf32>
    %4 = vector.extract_strided_slice %0 {offsets = [3, 0], sizes = [1, 128], strides = [1, 1]} : vector<8x128xf32> to vector<1x128xf32>
    %c0_1 = arith.constant 0 : index
    %c0_2 = arith.constant 0 : index
    %5 = vector.load %arg5[%c0_1, %c0_2] : memref<32x8xf32, #tpu.memory_space<vmem>>, vector<32x8xf32>
    %c0_3 = arith.constant 0 : index
    %c0_4 = arith.constant 0 : index
    %6 = vector.load %arg6[%c0_3, %c0_4] : memref<8x32xf32, #tpu.memory_space<vmem>>, vector<8x32xf32>
    %c0_5 = arith.constant 0 : index
    %c0_6 = arith.constant 0 : index
    %7 = vector.load %arg7[%c0_5, %c0_6] : memref<128x8xf32, #tpu.memory_space<vmem>>, vector<128x8xf32>
    %c0_7 = arith.constant 0 : index
    %c0_8 = arith.constant 0 : index
    %8 = vector.load %arg8[%c0_7, %c0_8] : memref<8x128xf32, #tpu.memory_space<vmem>>, vector<8x128xf32>
    %9 = tpu.iota {dimensions = array<i32: 0>} : vector<32x1xi32>
    %c16_i32 = arith.constant 16 : i32
    %c0_i32 = arith.constant 0 : i32
    %10 = arith.cmpi eq, %c16_i32, %c0_i32 : i32
    %c1_i32 = arith.constant 1 : i32
    %11 = arith.select %10, %c1_i32, %c16_i32 : i32
    %12 = vector.broadcast %11 : i32 to vector<32x1xi32>
    %13 = arith.remsi %9, %12 : vector<32x1xi32>
    %c0_i32_9 = arith.constant 0 : i32
    %14 = vector.broadcast %c0_i32_9 : i32 to vector<32x1xi32>
    %15 = arith.cmpi ne, %13, %14 : vector<32x1xi32>
    %c0_i32_10 = arith.constant 0 : i32
    %16 = vector.broadcast %c0_i32_10 : i32 to vector<32x1xi32>
    %17 = arith.cmpi slt, %13, %16 : vector<32x1xi32>
    %c0_i32_11 = arith.constant 0 : i32
    %18 = arith.cmpi slt, %11, %c0_i32_11 : i32
    %19 = vector.broadcast %18 : i1 to vector<32x1xi1>
    %20 = vector.broadcast %19 : vector<32x1xi1> to vector<32x1xi1>
    %21 = arith.xori %17, %20 : vector<32x1xi1>
    %22 = arith.andi %21, %15 : vector<32x1xi1>
    %23 = vector.broadcast %11 : i32 to vector<32x1xi32>
    %24 = arith.addi %13, %23 : vector<32x1xi32>
    %25 = arith.select %22, %24, %13 : vector<32x1xi1>, vector<32x1xi32>
    %c1_i32_12 = arith.constant 1 : i32
    %26 = vector.broadcast %c1_i32_12 : i32 to vector<32x1xi32>
    %27 = arith.cmpi sge, %25, %26 : vector<32x1xi32>
    %c16_i32_13 = arith.constant 16 : i32
    %28 = vector.broadcast %c16_i32_13 : i32 to vector<32x1xi32>
    %29 = arith.cmpi slt, %25, %28 : vector<32x1xi32>
    %30 = arith.andi %27, %29 : vector<32x1xi1>
    %c0_i32_14 = arith.constant 0 : i32
    %31 = vector.broadcast %c0_i32_14 : i32 to vector<32x1xi32>
    %32 = arith.cmpi sge, %25, %31 : vector<32x1xi32>
    %c15_i32 = arith.constant 15 : i32
    %33 = vector.broadcast %c15_i32 : i32 to vector<32x1xi32>
    %34 = arith.cmpi slt, %25, %33 : vector<32x1xi32>
    %35 = arith.andi %32, %34 : vector<32x1xi1>
    %c0_15 = arith.constant 0 : index
    %c0_16 = arith.constant 0 : index
    %36 = vector.load %arg1[%c0_15, %c0_16] : memref<32x64xf32, #tpu.memory_space<vmem>>, vector<32x64xf32>
    %c1_i32_17 = arith.constant 1 : i32
    %37 = tpu.dynamic_rotate %36 by %c1_i32_17 dim 0 : vector<32x64xf32>, i32 -> vector<32x64xf32>
    %cst = arith.constant 0.000000e+00 : f32
    %38 = vector.shape_cast %30 : vector<32x1xi1> to vector<32x1xi1>
    %39 = vector.broadcast %38 : vector<32x1xi1> to vector<32x64xi1>
    %40 = vector.broadcast %cst : f32 to vector<32x64xf32>
    %41 = arith.select %39, %37, %40 : vector<32x64xi1>, vector<32x64xf32>
    %c0_18 = arith.constant 0 : index
    %c0_19 = arith.constant 0 : index
    %c0_20 = arith.constant 0 : index
    %42 = vector.load %arg2[%c0_18, %c0_19, %c0_20] : memref<3x64x128xf32, #tpu.memory_space<vmem>>, vector<1x64x128xf32>
    %43 = vector.shape_cast %42 : vector<1x64x128xf32> to vector<64x128xf32>
    %cst_21 = arith.constant dense<0.000000e+00> : vector<32x128xf32>
    %44 = tpu.matmul %41, %43, %cst_21 {dimension_numbers = #tpu.dot_dimension_numbers<[1], [0], [0], [1], [0, 0, 1, 1], [], []>} : vector<32x64xf32>, vector<64x128xf32>, vector<32x128xf32> -> vector<32x128xf32>
    %c1 = arith.constant 1 : index
    %c0_22 = arith.constant 0 : index
    %c0_23 = arith.constant 0 : index
    %45 = vector.load %arg2[%c1, %c0_22, %c0_23] : memref<3x64x128xf32, #tpu.memory_space<vmem>>, vector<1x64x128xf32>
    %46 = vector.shape_cast %45 : vector<1x64x128xf32> to vector<64x128xf32>
    %cst_24 = arith.constant dense<0.000000e+00> : vector<32x128xf32>
    %47 = tpu.matmul %36, %46, %cst_24 {dimension_numbers = #tpu.dot_dimension_numbers<[1], [0], [0], [1], [0, 0, 1, 1], [], []>} : vector<32x64xf32>, vector<64x128xf32>, vector<32x128xf32> -> vector<32x128xf32>
    %48 = arith.addf %44, %47 : vector<32x128xf32>
    %c31_i32 = arith.constant 31 : i32
    %49 = tpu.dynamic_rotate %36 by %c31_i32 dim 0 : vector<32x64xf32>, i32 -> vector<32x64xf32>
    %cst_25 = arith.constant 0.000000e+00 : f32
    %50 = vector.shape_cast %35 : vector<32x1xi1> to vector<32x1xi1>
    %51 = vector.broadcast %50 : vector<32x1xi1> to vector<32x64xi1>
    %52 = vector.broadcast %cst_25 : f32 to vector<32x64xf32>
    %53 = arith.select %51, %49, %52 : vector<32x64xi1>, vector<32x64xf32>
    %c2 = arith.constant 2 : index
    %c0_26 = arith.constant 0 : index
    %c0_27 = arith.constant 0 : index
    %54 = vector.load %arg2[%c2, %c0_26, %c0_27] : memref<3x64x128xf32, #tpu.memory_space<vmem>>, vector<1x64x128xf32>
    %55 = vector.shape_cast %54 : vector<1x64x128xf32> to vector<64x128xf32>
    %cst_28 = arith.constant dense<0.000000e+00> : vector<32x128xf32>
    %56 = tpu.matmul %53, %55, %cst_28 {dimension_numbers = #tpu.dot_dimension_numbers<[1], [0], [0], [1], [0, 0, 1, 1], [], []>} : vector<32x64xf32>, vector<64x128xf32>, vector<32x128xf32> -> vector<32x128xf32>
    %57 = arith.addf %48, %56 : vector<32x128xf32>
    %58 = vector.broadcast %1 : vector<1x128xf32> to vector<32x128xf32>
    %59 = arith.addf %57, %58 : vector<32x128xf32>
    %cst_29 = arith.constant 0.000000e+00 : f32
    %60 = vector.broadcast %cst_29 : f32 to vector<32x128xf32>
    %61 = arith.maximumf %59, %60 : vector<32x128xf32>
    %cst_30 = arith.constant dense<0.000000e+00> : vector<8x128xf32>
    %62 = tpu.matmul %6, %61, %cst_30 {dimension_numbers = #tpu.dot_dimension_numbers<[1], [0], [0], [1], [0, 0, 1, 1], [], []>} : vector<8x32xf32>, vector<32x128xf32>, vector<8x128xf32> -> vector<8x128xf32>
    %cst_31 = arith.constant dense<0.000000e+00> : vector<8x8xf32>
    %63 = tpu.matmul %62, %7, %cst_31 {dimension_numbers = #tpu.dot_dimension_numbers<[1], [0], [0], [1], [0, 0, 1, 1], [], []>} : vector<8x128xf32>, vector<128x8xf32>, vector<8x8xf32> -> vector<8x8xf32>
    %cst_32 = arith.constant dense<0.000000e+00> : vector<32x8xf32>
    %64 = tpu.matmul %5, %63, %cst_32 {dimension_numbers = #tpu.dot_dimension_numbers<[1], [0], [0], [1], [0, 0, 1, 1], [], []>} : vector<32x8xf32>, vector<8x8xf32>, vector<32x8xf32> -> vector<32x8xf32>
    %cst_33 = arith.constant dense<0.000000e+00> : vector<32x128xf32>
    %65 = tpu.matmul %64, %8, %cst_33 {dimension_numbers = #tpu.dot_dimension_numbers<[1], [0], [0], [1], [0, 0, 1, 1], [], []>} : vector<32x8xf32>, vector<8x128xf32>, vector<32x128xf32> -> vector<32x128xf32>
    %cst_34 = arith.constant 0.001953125 : f32
    %66 = vector.broadcast %cst_34 : f32 to vector<32x128xf32>
    %67 = arith.mulf %65, %66 : vector<32x128xf32>
    %68 = arith.subf %61, %67 : vector<32x128xf32>
    %69 = arith.mulf %68, %68 : vector<32x128xf32>
    %cst_35 = arith.constant dense<0.000000e+00> : vector<8x128xf32>
    %70 = tpu.matmul %6, %69, %cst_35 {dimension_numbers = #tpu.dot_dimension_numbers<[1], [0], [0], [1], [0, 0, 1, 1], [], []>} : vector<8x32xf32>, vector<32x128xf32>, vector<8x128xf32> -> vector<8x128xf32>
    %cst_36 = arith.constant dense<0.000000e+00> : vector<8x8xf32>
    %71 = tpu.matmul %70, %7, %cst_36 {dimension_numbers = #tpu.dot_dimension_numbers<[1], [0], [0], [1], [0, 0, 1, 1], [], []>} : vector<8x128xf32>, vector<128x8xf32>, vector<8x8xf32> -> vector<8x8xf32>
    %cst_37 = arith.constant dense<0.000000e+00> : vector<32x8xf32>
    %72 = tpu.matmul %5, %71, %cst_37 {dimension_numbers = #tpu.dot_dimension_numbers<[1], [0], [0], [1], [0, 0, 1, 1], [], []>} : vector<32x8xf32>, vector<8x8xf32>, vector<32x8xf32> -> vector<32x8xf32>
    %cst_38 = arith.constant dense<0.000000e+00> : vector<32x128xf32>
    %73 = tpu.matmul %72, %8, %cst_38 {dimension_numbers = #tpu.dot_dimension_numbers<[1], [0], [0], [1], [0, 0, 1, 1], [], []>} : vector<32x8xf32>, vector<8x128xf32>, vector<32x128xf32> -> vector<32x128xf32>
    %cst_39 = arith.constant 0.001953125 : f32
    %74 = vector.broadcast %cst_39 : f32 to vector<32x128xf32>
    %75 = arith.mulf %73, %74 : vector<32x128xf32>
    %cst_40 = arith.constant 9.99999974E-6 : f32
    %76 = vector.broadcast %cst_40 : f32 to vector<32x128xf32>
    %77 = arith.addf %75, %76 : vector<32x128xf32>
    %78 = math.rsqrt %77 : vector<32x128xf32>
    %79 = arith.mulf %68, %78 : vector<32x128xf32>
    %80 = vector.broadcast %3 : vector<1x128xf32> to vector<32x128xf32>
    %81 = arith.mulf %79, %80 : vector<32x128xf32>
    %82 = vector.broadcast %4 : vector<1x128xf32> to vector<32x128xf32>
    %83 = arith.addf %81, %82 : vector<32x128xf32>
    %c1_i32_41 = arith.constant 1 : i32
    %84 = tpu.dynamic_rotate %83 by %c1_i32_41 dim 0 : vector<32x128xf32>, i32 -> vector<32x128xf32>
    %cst_42 = arith.constant 0.000000e+00 : f32
    %85 = vector.shape_cast %30 : vector<32x1xi1> to vector<32x1xi1>
    %86 = vector.broadcast %85 : vector<32x1xi1> to vector<32x128xi1>
    %87 = vector.broadcast %cst_42 : f32 to vector<32x128xf32>
    %88 = arith.select %86, %84, %87 : vector<32x128xi1>, vector<32x128xf32>
    %c0_43 = arith.constant 0 : index
    %c0_44 = arith.constant 0 : index
    %c0_45 = arith.constant 0 : index
    %89 = vector.load %arg3[%c0_43, %c0_44, %c0_45] : memref<3x128x128xf32, #tpu.memory_space<vmem>>, vector<1x128x128xf32>
    %90 = vector.shape_cast %89 : vector<1x128x128xf32> to vector<128x128xf32>
    %cst_46 = arith.constant dense<0.000000e+00> : vector<32x128xf32>
    %91 = tpu.matmul %88, %90, %cst_46 {dimension_numbers = #tpu.dot_dimension_numbers<[1], [0], [0], [1], [0, 0, 1, 1], [], []>} : vector<32x128xf32>, vector<128x128xf32>, vector<32x128xf32> -> vector<32x128xf32>
    %c1_47 = arith.constant 1 : index
    %c0_48 = arith.constant 0 : index
    %c0_49 = arith.constant 0 : index
    %92 = vector.load %arg3[%c1_47, %c0_48, %c0_49] : memref<3x128x128xf32, #tpu.memory_space<vmem>>, vector<1x128x128xf32>
    %93 = vector.shape_cast %92 : vector<1x128x128xf32> to vector<128x128xf32>
    %cst_50 = arith.constant dense<0.000000e+00> : vector<32x128xf32>
    %94 = tpu.matmul %83, %93, %cst_50 {dimension_numbers = #tpu.dot_dimension_numbers<[1], [0], [0], [1], [0, 0, 1, 1], [], []>} : vector<32x128xf32>, vector<128x128xf32>, vector<32x128xf32> -> vector<32x128xf32>
    %95 = arith.addf %91, %94 : vector<32x128xf32>
    %c31_i32_51 = arith.constant 31 : i32
    %96 = tpu.dynamic_rotate %83 by %c31_i32_51 dim 0 : vector<32x128xf32>, i32 -> vector<32x128xf32>
    %cst_52 = arith.constant 0.000000e+00 : f32
    %97 = vector.shape_cast %35 : vector<32x1xi1> to vector<32x1xi1>
    %98 = vector.broadcast %97 : vector<32x1xi1> to vector<32x128xi1>
    %99 = vector.broadcast %cst_52 : f32 to vector<32x128xf32>
    %100 = arith.select %98, %96, %99 : vector<32x128xi1>, vector<32x128xf32>
    %c2_53 = arith.constant 2 : index
    %c0_54 = arith.constant 0 : index
    %c0_55 = arith.constant 0 : index
    %101 = vector.load %arg3[%c2_53, %c0_54, %c0_55] : memref<3x128x128xf32, #tpu.memory_space<vmem>>, vector<1x128x128xf32>
    %102 = vector.shape_cast %101 : vector<1x128x128xf32> to vector<128x128xf32>
    %cst_56 = arith.constant dense<0.000000e+00> : vector<32x128xf32>
    %103 = tpu.matmul %100, %102, %cst_56 {dimension_numbers = #tpu.dot_dimension_numbers<[1], [0], [0], [1], [0, 0, 1, 1], [], []>} : vector<32x128xf32>, vector<128x128xf32>, vector<32x128xf32> -> vector<32x128xf32>
    %104 = arith.addf %95, %103 : vector<32x128xf32>
    %105 = vector.broadcast %2 : vector<1x128xf32> to vector<32x128xf32>
    %106 = arith.addf %104, %105 : vector<32x128xf32>
    %cst_57 = arith.constant 0.000000e+00 : f32
    %107 = vector.broadcast %cst_57 : f32 to vector<32x128xf32>
    %108 = arith.maximumf %106, %107 : vector<32x128xf32>
    %cst_58 = arith.constant dense<0.000000e+00> : vector<8x128xf32>
    %109 = tpu.matmul %6, %108, %cst_58 {dimension_numbers = #tpu.dot_dimension_numbers<[1], [0], [0], [1], [0, 0, 1, 1], [], []>} : vector<8x32xf32>, vector<32x128xf32>, vector<8x128xf32> -> vector<8x128xf32>
    %cst_59 = arith.constant dense<0.000000e+00> : vector<8x8xf32>
    %110 = tpu.matmul %109, %7, %cst_59 {dimension_numbers = #tpu.dot_dimension_numbers<[1], [0], [0], [1], [0, 0, 1, 1], [], []>} : vector<8x128xf32>, vector<128x8xf32>, vector<8x8xf32> -> vector<8x8xf32>
    %cst_60 = arith.constant dense<0.000000e+00> : vector<32x8xf32>
    %111 = tpu.matmul %5, %110, %cst_60 {dimension_numbers = #tpu.dot_dimension_numbers<[1], [0], [0], [1], [0, 0, 1, 1], [], []>} : vector<32x8xf32>, vector<8x8xf32>, vector<32x8xf32> -> vector<32x8xf32>
    %cst_61 = arith.constant dense<0.000000e+00> : vector<32x128xf32>
    %112 = tpu.matmul %111, %8, %cst_61 {dimension_numbers = #tpu.dot_dimension_numbers<[1], [0], [0], [1], [0, 0, 1, 1], [], []>} : vector<32x8xf32>, vector<8x128xf32>, vector<32x128xf32> -> vector<32x128xf32>
    %cst_62 = arith.constant 0.001953125 : f32
    %113 = vector.broadcast %cst_62 : f32 to vector<32x128xf32>
    %114 = arith.mulf %112, %113 : vector<32x128xf32>
    %115 = arith.subf %108, %114 : vector<32x128xf32>
    %116 = arith.mulf %115, %115 : vector<32x128xf32>
    %cst_63 = arith.constant dense<0.000000e+00> : vector<8x128xf32>
    %117 = tpu.matmul %6, %116, %cst_63 {dimension_numbers = #tpu.dot_dimension_numbers<[1], [0], [0], [1], [0, 0, 1, 1], [], []>} : vector<8x32xf32>, vector<32x128xf32>, vector<8x128xf32> -> vector<8x128xf32>
    %cst_64 = arith.constant dense<0.000000e+00> : vector<8x8xf32>
    %118 = tpu.matmul %117, %7, %cst_64 {dimension_numbers = #tpu.dot_dimension_numbers<[1], [0], [0], [1], [0, 0, 1, 1], [], []>} : vector<8x128xf32>, vector<128x8xf32>, vector<8x8xf32> -> vector<8x8xf32>
    %cst_65 = arith.constant dense<0.000000e+00> : vector<32x8xf32>
    %119 = tpu.matmul %5, %118, %cst_65 {dimension_numbers = #tpu.dot_dimension_numbers<[1], [0], [0], [1], [0, 0, 1, 1], [], []>} : vector<32x8xf32>, vector<8x8xf32>, vector<32x8xf32> -> vector<32x8xf32>
    %cst_66 = arith.constant dense<0.000000e+00> : vector<32x128xf32>
    %120 = tpu.matmul %119, %8, %cst_66 {dimension_numbers = #tpu.dot_dimension_numbers<[1], [0], [0], [1], [0, 0, 1, 1], [], []>} : vector<32x8xf32>, vector<8x128xf32>, vector<32x128xf32> -> vector<32x128xf32>
    %cst_67 = arith.constant 0.001953125 : f32
    %121 = vector.broadcast %cst_67 : f32 to vector<32x128xf32>
    %122 = arith.mulf %120, %121 : vector<32x128xf32>
    %cst_68 = arith.constant 9.99999974E-6 : f32
    %123 = vector.broadcast %cst_68 : f32 to vector<32x128xf32>
    %124 = arith.addf %122, %123 : vector<32x128xf32>
    %125 = math.rsqrt %124 : vector<32x128xf32>
    %126 = arith.mulf %115, %125 : vector<32x128xf32>
    %127 = vector.broadcast %3 : vector<1x128xf32> to vector<32x128xf32>
    %128 = arith.mulf %126, %127 : vector<32x128xf32>
    %129 = vector.broadcast %4 : vector<1x128xf32> to vector<32x128xf32>
    %130 = arith.addf %128, %129 : vector<32x128xf32>
    %c31_i32_69 = arith.constant 31 : i32
    %131 = tpu.dynamic_rotate %130 by %c31_i32_69 dim 0 : vector<32x128xf32>, i32 -> vector<32x128xf32>
    %132 = arith.maximumf %130, %131 : vector<32x128xf32>
    %c0_70 = arith.constant 0 : index
    %c0_71 = arith.constant 0 : index
    %133 = vector.load %arg9[%c0_70, %c0_71] : memref<16x32xf32, #tpu.memory_space<vmem>>, vector<16x32xf32>
    %cst_72 = arith.constant dense<0.000000e+00> : vector<16x128xf32>
    %134 = tpu.matmul %133, %132, %cst_72 {dimension_numbers = #tpu.dot_dimension_numbers<[1], [0], [0], [1], [0, 0, 1, 1], [], []>} : vector<16x32xf32>, vector<32x128xf32>, vector<16x128xf32> -> vector<16x128xf32>
    %c120_i32 = arith.constant 120 : i32
    %135 = tpu.dynamic_rotate %134 by %c120_i32 dim 1 : vector<16x128xf32>, i32 -> vector<16x128xf32>
    %136 = arith.maximumf %134, %135 : vector<16x128xf32>
    %c0_73 = arith.constant 0 : index
    %c0_74 = arith.constant 0 : index
    %137 = vector.load %arg10[%c0_73, %c0_74] : memref<128x64xf32, #tpu.memory_space<vmem>>, vector<128x64xf32>
    %cst_75 = arith.constant dense<0.000000e+00> : vector<16x64xf32>
    %138 = tpu.matmul %136, %137, %cst_75 {dimension_numbers = #tpu.dot_dimension_numbers<[1], [0], [0], [1], [0, 0, 1, 1], [], []>} : vector<16x128xf32>, vector<128x64xf32>, vector<16x64xf32> -> vector<16x64xf32>
    %c0_76 = arith.constant 0 : index
    %c0_77 = arith.constant 0 : index
    %139 = vector.load %arg11[%c0_76, %c0_77] : memref<16x64xf32, #tpu.memory_space<vmem>>, vector<16x64xf32>
    tpu.vector_store %arg11[%c0_76, %c0_77], %138 {strides = array<i32>} : memref<16x64xf32, #tpu.memory_space<vmem>>, vector<16x64xf32>,
    return
  }
  func.func @transform_0(%arg0: i32) -> (i32, i32) {
    %c0_i32 = arith.constant 0 : i32
    %c0_i32_0 = arith.constant 0 : i32
    return %arg0, %c0_i32 : i32, i32
  }
  func.func @transform_1(%arg0: i32) -> (i32, i32, i32) {
    %c0_i32 = arith.constant 0 : i32
    %c0_i32_0 = arith.constant 0 : i32
    %c0_i32_1 = arith.constant 0 : i32
    %c0_i32_2 = arith.constant 0 : i32
    return %c0_i32, %c0_i32_0, %c0_i32_1 : i32, i32, i32
  }
  func.func @transform_2(%arg0: i32) -> (i32, i32, i32) {
    %c0_i32 = arith.constant 0 : i32
    %c0_i32_0 = arith.constant 0 : i32
    %c0_i32_1 = arith.constant 0 : i32
    %c0_i32_2 = arith.constant 0 : i32
    return %c0_i32, %c0_i32_0, %c0_i32_1 : i32, i32, i32
  }
  func.func @transform_3(%arg0: i32) -> (i32, i32) {
    %c0_i32 = arith.constant 0 : i32
    %c0_i32_0 = arith.constant 0 : i32
    %c0_i32_1 = arith.constant 0 : i32
    return %c0_i32, %c0_i32_0 : i32, i32
  }
  func.func @transform_4(%arg0: i32) -> (i32, i32) {
    %c0_i32 = arith.constant 0 : i32
    %c0_i32_0 = arith.constant 0 : i32
    %c0_i32_1 = arith.constant 0 : i32
    return %c0_i32, %c0_i32_0 : i32, i32
  }
  func.func @transform_5(%arg0: i32) -> (i32, i32) {
    %c0_i32 = arith.constant 0 : i32
    %c0_i32_0 = arith.constant 0 : i32
    %c0_i32_1 = arith.constant 0 : i32
    return %c0_i32, %c0_i32_0 : i32, i32
  }
  func.func @transform_6(%arg0: i32) -> (i32, i32) {
    %c0_i32 = arith.constant 0 : i32
    %c0_i32_0 = arith.constant 0 : i32
    %c0_i32_1 = arith.constant 0 : i32
    return %c0_i32, %c0_i32_0 : i32, i32
  }
  func.func @transform_7(%arg0: i32) -> (i32, i32) {
    %c0_i32 = arith.constant 0 : i32
    %c0_i32_0 = arith.constant 0 : i32
    %c0_i32_1 = arith.constant 0 : i32
    return %c0_i32, %c0_i32_0 : i32, i32
  }
  func.func @transform_8(%arg0: i32) -> (i32, i32) {
    %c0_i32 = arith.constant 0 : i32
    %c0_i32_0 = arith.constant 0 : i32
    %c0_i32_1 = arith.constant 0 : i32
    return %c0_i32, %c0_i32_0 : i32, i32
  }
  func.func @transform_9(%arg0: i32) -> (i32, i32) {
    %c0_i32 = arith.constant 0 : i32
    %c0_i32_0 = arith.constant 0 : i32
    %c0_i32_1 = arith.constant 0 : i32
    return %c0_i32, %c0_i32_0 : i32, i32
  }
  func.func @transform_10(%arg0: i32) -> (i32, i32) {
    %c0_i32 = arith.constant 0 : i32
    %c0_i32_0 = arith.constant 0 : i32
    return %arg0, %c0_i32 : i32, i32
  }
}

</mosaic_0001>

<llo_original>
// kernel: forward.1
$region0: #{forward.1}
  #allocation0 [shape = 'u32[]', space=smem, size = 0x4, offset = 0x4, fixed_abs, tag = 'smem constant byte address 0x4 - core index']
  #allocation1 [shape = 'u32[144,128]{1,0:T(1,128)}', space=vmem, size = 0x12000, scoped, tag = 'internal scratch']
  %s0 = inlined_call_operand.vmem [shape: f32[32,64], index: 0, kind: input, shape index: {}]
  %s1 = inlined_call_operand.hbm [shape: f32[3,64,128], index: 1, kind: input, shape index: {}]
  %s2 = inlined_call_operand.vmem [shape: f32[3,128,128], index: 2, kind: input, shape index: {}]
  %s3 = inlined_call_operand.hbm [shape: f32[8,128], index: 3, kind: input, shape index: {}]
  %s4 = inlined_call_operand.vmem [shape: f32[32,8], index: 4, kind: input, shape index: {}]
  %s5 = inlined_call_operand.hbm [shape: f32[8,32], index: 5, kind: input, shape index: {}]
  %s6 = inlined_call_operand.hbm [shape: f32[128,8], index: 6, kind: input, shape index: {}]
  %s7 = inlined_call_operand.vmem [shape: f32[8,128], index: 7, kind: input, shape index: {}]
  %s8 = inlined_call_operand.vmem [shape: f32[16,32], index: 8, kind: input, shape index: {}]
  %s9 = inlined_call_operand.vmem [shape: f32[128,64], index: 9, kind: input, shape index: {}]
  %s10 = inlined_call_operand.vmem [shape: f32[16,64], index: 10, kind: output, shape index: {}]
  %s11 = sld [smem:[#allocation0]]
  $region66: #{forward.1} parent=0
    _
  %s13 = ssub.s32 1, %s11
  %s14 = scalar_select 0, %s13, %s11
  $region1: #{forward.1} parent=0
    #allocation2 [shape = 'u8[98304]{0}', space=vmem, size = 0x18000, scoped, tag = 'input window, operand 1, single buffered']
    #allocation3 [shape = 's32[1]{0}', space=sflag, size = 0x4, scoped, tag = 'scoped memory for forward.1']
    #allocation4 [shape = 'u8[4096]{0}', space=vmem, size = 0x1000, scoped, tag = 'input window, operand 3, single buffered']
    #allocation5 [shape = 's32[1]{0}', space=sflag, size = 0x4, scoped, tag = 'scoped memory for forward.1']
    #allocation6 [shape = 'u8[4096]{0}', space=vmem, size = 0x1000, scoped, tag = 'input window, operand 5, single buffered']
    #allocation7 [shape = 'u8[65536]{0}', space=vmem, size = 0x10000, scoped, tag = 'input window, operand 6, single buffered']
    #allocation8 [shape = 's32[1]{0}', space=sflag, size = 0x4, scoped, tag = 'scoped memory for forward.1']
    %15 = vsyncpa [#allocation3], 0
    %16 = vsyncpa [#allocation5], 0
    %17 = vsyncpa [#allocation8], 0
    // Predicated region
    $region2: #{forward.1} parent=1 // pred_check
      _
    $region3: #{forward.1} parent=1 // pred_check_branch
      %19 = sbr.rel (0) target = $region5
    $region4: #{forward.1} parent=1 // pred_region
      _
    $region5: #{forward.1} parent=1 // pred_fallthru
      _
    // Predicated region
    $region6: #{forward.1} parent=1 // pred_check
      _
    $region7: #{forward.1} parent=1 // pred_check_branch
      %21 = sbr.rel (0) target = $region9
    $region8: #{forward.1} parent=1 // pred_region
      %s23 = ssub.s32 3072, 3072
      %24 = vsyncadd [#allocation3], %s23
      %s25 = sshll.u32 [#allocation2], 4
      %s26 = int_to_ptr.vmem [resolvable:$true] %s25
      %31 = dma.hbm_to_vmem [thread:$0]  %s1, 3072, %s26, [#allocation3], 128, 128, 8
    $region9: #{forward.1} parent=1 // pred_fallthru
      _
    // Predicated region
    $region10: #{forward.1} parent=1 // pred_check
      _
    $region11: #{forward.1} parent=1 // pred_check_branch
      %33 = sbr.rel (0) target = $region13
    $region12: #{forward.1} parent=1 // pred_region
      _
    $region13: #{forward.1} parent=1 // pred_fallthru
      _
    // Predicated region
    $region14: #{forward.1} parent=1 // pred_check
      _
    $region15: #{forward.1} parent=1 // pred_check_branch
      %35 = sbr.rel (0) target = $region17
    $region16: #{forward.1} parent=1 // pred_region
      %s37 = ssub.s32 128, 128
      %38 = vsyncadd [#allocation5], %s37
      %s40 = sshll.u32 [#allocation4], 4
      %s41 = int_to_ptr.vmem [resolvable:$true] %s40
      %43 = dma.hbm_to_vmem [thread:$0]  %s3, 128, %s41, [#allocation5]
    $region17: #{forward.1} parent=1 // pred_fallthru
      _
    // Predicated region
    $region18: #{forward.1} parent=1 // pred_check
      _
    $region19: #{forward.1} parent=1 // pred_check_branch
      %45 = sbr.rel (0) target = $region21
    $region20: #{forward.1} parent=1 // pred_region
      _
    $region21: #{forward.1} parent=1 // pred_fallthru
      _
    // Predicated region
    $region22: #{forward.1} parent=1 // pred_check
      _
    $region23: #{forward.1} parent=1 // pred_check_branch
      %47 = sbr.rel (0) target = $region25
    $region24: #{forward.1} parent=1 // pred_region
      %s49 = ssub.s32 128, 128
      %50 = vsyncadd [#allocation5], %s49
      %s52 = sshll.u32 [#allocation6], 4
      %s53 = int_to_ptr.vmem [resolvable:$true] %s52
      %55 = dma.hbm_to_vmem [thread:$0]  %s5, 128, %s53, [#allocation5]
    $region25: #{forward.1} parent=1 // pred_fallthru
      _
    // Predicated region
    $region26: #{forward.1} parent=1 // pred_check
      _
    $region27: #{forward.1} parent=1 // pred_check_branch
      %57 = sbr.rel (0) target = $region29
    $region28: #{forward.1} parent=1 // pred_region
      %s59 = ssub.s32 2048, 2048
      %60 = vsyncadd [#allocation8], %s59
      %s61 = sshll.u32 [#allocation7], 4
      %s62 = int_to_ptr.vmem [resolvable:$true] %s61
      %67 = dma.hbm_to_vmem [thread:$0]  %s6, 2048, %s62, [#allocation8], 128, 128, 8
    $region29: #{forward.1} parent=1 // pred_fallthru
      _
    // Predicated region
    $region30: #{forward.1} parent=1 // pred_check
      _
    $region31: #{forward.1} parent=1 // pred_check_branch
      %69 = sbr.rel (0) target = $region33
    $region32: #{forward.1} parent=1 // pred_region
      _
    $region33: #{forward.1} parent=1 // pred_fallthru
      _
    // Predicated region
    $region34: #{forward.1} parent=1 // pred_check
      _
    $region35: #{forward.1} parent=1 // pred_check_branch
      %71 = sbr.rel (0) target = $region37
    $region36: #{forward.1} parent=1 // pred_region
      _
    $region37: #{forward.1} parent=1 // pred_fallthru
      _
    // Predicated region
    $region38: #{forward.1} parent=1 // pred_check
      _
    $region39: #{forward.1} parent=1 // pred_check_branch
      %73 = sbr.rel (0) target = $region41
    $region40: #{forward.1} parent=1 // pred_region
      _
    $region41: #{forward.1} parent=1 // pred_fallthru
      _
    // Predicated region
    $region42: #{forward.1} parent=1 // pred_check
      _
    $region43: #{forward.1} parent=1 // pred_check_branch
      %75 = sbr.rel (0) target = $region45
    $region44: #{forward.1} parent=1 // pred_region
      %76 = dma.done [#allocation3], 3072
    $region45: #{forward.1} parent=1 // pred_fallthru
      _
    // Predicated region
    $region46: #{forward.1} parent=1 // pred_check
      _
    $region47: #{forward.1} parent=1 // pred_check_branch
      %78 = sbr.rel (0) target = $region49
    $region48: #{forward.1} parent=1 // pred_region
      %79 = dma.done [#allocation5], 128
    $region49: #{forward.1} parent=1 // pred_fallthru
      _
    // Predicated region
    $region50: #{forward.1} parent=1 // pred_check
      _
    $region51: #{forward.1} parent=1 // pred_check_branch
      %81 = sbr.rel (0) target = $region53
    $region52: #{forward.1} parent=1 // pred_region
      %82 = dma.done [#allocation5], 128
    $region53: #{forward.1} parent=1 // pred_fallthru
      _
    // Predicated region
    $region54: #{forward.1} parent=1 // pred_check
      _
    $region55: #{forward.1} parent=1 // pred_check_branch
      %84 = sbr.rel (0) target = $region57
    $region56: #{forward.1} parent=1 // pred_region
      %85 = dma.done [#allocation8], 2048
    $region57: #{forward.1} parent=1 // pred_fallthru
      _
    %v86 = vld [vmem:[#allocation4] sm:$0xff]
    %v87 = vld [vmem:[%s4] sm:$0xff]
    %v88 = vld [vmem:[%s4 + $0x8] sm:$0xff]
    %v89 = vld [vmem:[%s4 + $0x10] sm:$0xff]
    %v90 = vld [vmem:[%s4 + $0x18] sm:$0xff]
    %v91 = vld [vmem:[#allocation6] sm:$0xff]
    %v92 = vld [vmem:[#allocation7] sm:$0xff]
    %v93 = vld [vmem:[#allocation7 + $0x8] sm:$0xff]
    %v94 = vld [vmem:[#allocation7 + $0x10] sm:$0xff]
    %v95 = vld [vmem:[#allocation7 + $0x18] sm:$0xff]
    %v96 = vld [vmem:[#allocation7 + $0x20] sm:$0xff]
    %v97 = vld [vmem:[#allocation7 + $0x28] sm:$0xff]
    %v98 = vld [vmem:[#allocation7 + $0x30] sm:$0xff]
    %v99 = vld [vmem:[#allocation7 + $0x38] sm:$0xff]
    %v100 = vld [vmem:[#allocation7 + $0x40] sm:$0xff]
    %v101 = vld [vmem:[#allocation7 + $0x48] sm:$0xff]
    %v102 = vld [vmem:[#allocation7 + $0x50] sm:$0xff]
    %v103 = vld [vmem:[#allocation7 + $0x58] sm:$0xff]
    %v104 = vld [vmem:[#allocation7 + $0x60] sm:$0xff]
    %v105 = vld [vmem:[#allocation7 + $0x68] sm:$0xff]
    %v106 = vld [vmem:[#allocation7 + $0x70] sm:$0xff]
    %v107 = vld [vmem:[#allocation7 + $0x78] sm:$0xff]
    %v108 = vld [vmem:[%s7] sm:$0xff]
    %v109 = vlaneseq
    %v110 = vshrl.u32 %v109, 7
    %v111 = vadd.s32 %v110, 8
    %v112 = vadd.s32 %v110, 16
    %v113 = vadd.s32 %v110, 24
    %vm114 = vcmp.lt.s32.totalorder %v110, 0
    %v115 = vsub.s32 0, %v110
    %v116 = vsel %vm114, %v115, %v110
    %v117 = vshrl.u32 %v116, 4
    %v118 = vand.u32 %v116, 15
    %v119 = vsub.s32 0, %v118
    %v120 = vsel %vm114, %v119, %v118
    %vm121 = vcmp.lt.s32.totalorder %v111, 0
    %v122 = vsub.s32 0, %v111
    %v123 = vsel %vm121, %v122, %v111
    %v124 = vshrl.u32 %v123, 4
    %v125 = vand.u32 %v123, 15
    %v126 = vsub.s32 0, %v125
    %v127 = vsel %vm121, %v126, %v125
    %vm128 = vcmp.lt.s32.totalorder %v112, 0
    %v129 = vsub.s32 0, %v112
    %v130 = vsel %vm128, %v129, %v112
    %v131 = vshrl.u32 %v130, 4
    %v132 = vand.u32 %v130, 15
    %v133 = vsub.s32 0, %v132
    %v134 = vsel %vm128, %v133, %v132
    %vm135 = vcmp.lt.s32.totalorder %v113, 0
    %v136 = vsub.s32 0, %v113
    %v137 = vsel %vm135, %v136, %v113
    %v138 = vshrl.u32 %v137, 4
    %v139 = vand.u32 %v137, 15
    %v140 = vsub.s32 0, %v139
    %v141 = vsel %vm135, %v140, %v139
    %vm142 = vcmp.ne.s32.totalorder %v120, 0
    %vm143 = vcmp.ne.s32.totalorder %v127, 0
    %vm144 = vcmp.ne.s32.totalorder %v134, 0
    %vm145 = vcmp.ne.s32.totalorder %v141, 0
    %vm146 = vcmp.lt.s32.totalorder %v120, 0
    %vm147 = vcmp.lt.s32.totalorder %v127, 0
    %vm148 = vcmp.lt.s32.totalorder %v134, 0
    %vm149 = vcmp.lt.s32.totalorder %v141, 0
    %vm150 = vmand %vm146, %vm142
    %vm151 = vmand %vm147, %vm143
    %vm152 = vmand %vm148, %vm144
    %vm153 = vmand %vm149, %vm145
    %v154 = vadd.s32 %v120, 16
    %v155 = vadd.s32 %v127, 16
    %v156 = vadd.s32 %v134, 16
    %v157 = vadd.s32 %v141, 16
    %v158 = vsel %vm150, %v154, %v120
    %v159 = vsel %vm151, %v155, %v127
    %v160 = vsel %vm152, %v156, %v134
    %v161 = vsel %vm153, %v157, %v141
    %vm162 = vcmp.ge.s32.totalorder %v158, 1
    %vm163 = vcmp.ge.s32.totalorder %v159, 1
    %vm164 = vcmp.ge.s32.totalorder %v160, 1
    %vm165 = vcmp.ge.s32.totalorder %v161, 1
    %vm166 = vcmp.lt.s32.totalorder %v158, 16
    %vm167 = vcmp.lt.s32.totalorder %v159, 16
    %vm168 = vcmp.lt.s32.totalorder %v160, 16
    %vm169 = vcmp.lt.s32.totalorder %v161, 16
    %vm170 = vmand %vm162, %vm166
    %vm171 = vmand %vm163, %vm167
    %vm172 = vmand %vm164, %vm168
    %vm173 = vmand %vm165, %vm169
    %vm174 = vcmp.ge.s32.totalorder %v158, 0
    %vm175 = vcmp.ge.s32.totalorder %v159, 0
    %vm176 = vcmp.ge.s32.totalorder %v160, 0
    %vm177 = vcmp.ge.s32.totalorder %v161, 0
    %vm178 = vcmp.lt.s32.totalorder %v158, 15
    %vm179 = vcmp.lt.s32.totalorder %v159, 15
    %vm180 = vcmp.lt.s32.totalorder %v160, 15
    %vm181 = vcmp.lt.s32.totalorder %v161, 15
    %vm182 = vmand %vm174, %vm178
    %vm183 = vmand %vm175, %vm179
    %vm184 = vmand %vm176, %vm180
    %vm185 = vmand %vm177, %vm181
    %v186 = vld [vmem:[%s0] sm:$0xff]
    %v187 = vld [vmem:[%s0 + $0x8] sm:$0xff]
    %v188 = vld [vmem:[%s0 + $0x10] sm:$0xff]
    %v189 = vld [vmem:[%s0 + $0x18] sm:$0xff]
    %v190 = vrot.slane %v186, 7
    %v191 = vrot.slane %v187, 7
    %v192 = vrot.slane %v188, 7
    %v193 = vrot.slane %v189, 7
    %vm194 = vcmp.lt.s32.totalorder %v110, 1
    %v195 = vsel %vm194, %v192, %v193
    %v196 = vsel %vm194, %v191, %v192
    %v197 = vsel %vm194, %v190, %v191
    %v198 = vsel %vm194, %v193, %v190
    %v199 = vsel %vm170, 1, 0
    %v200 = vsel %vm171, 1, 0
    %v201 = vsel %vm172, 1, 0
    %v202 = vsel %vm173, 1, 0
    %vm203 = vcmp.eq.s32.totalorder %v199, 1
    %vm204 = vcmp.eq.s32.totalorder %v200, 1
    %vm205 = vcmp.eq.s32.totalorder %v201, 1
    %vm206 = vcmp.eq.s32.totalorder %v202, 1
    %v207 = vsel %vm203, %v198, 0.0
    %v208 = vsel %vm204, %v197, 0.0
    %v209 = vsel %vm205, %v196, 0.0
    %v210 = vsel %vm206, %v195, 0.0
    %v211 = vld [vmem:[#allocation2] sm:$0xff]
    %v212 = vld [vmem:[#allocation2 + $0x8] sm:$0xff]
    %v213 = vld [vmem:[#allocation2 + $0x10] sm:$0xff]
    %v214 = vld [vmem:[#allocation2 + $0x18] sm:$0xff]
    %v215 = vld [vmem:[#allocation2 + $0x20] sm:$0xff]
    %v216 = vld [vmem:[#allocation2 + $0x28] sm:$0xff]
    %v217 = vld [vmem:[#allocation2 + $0x30] sm:$0xff]
    %v218 = vld [vmem:[#allocation2 + $0x38] sm:$0xff]
    %s219 = scalar_lea.vmem [#allocation2], 64
    %v220 = vld [vmem:[%s219] sm:$0xff]
    %v221 = vld [vmem:[%s219 + $0x8] sm:$0xff]
    %v222 = vld [vmem:[%s219 + $0x10] sm:$0xff]
    %v223 = vld [vmem:[%s219 + $0x18] sm:$0xff]
    %v224 = vld [vmem:[%s219 + $0x20] sm:$0xff]
    %v225 = vld [vmem:[%s219 + $0x28] sm:$0xff]
    %v226 = vld [vmem:[%s219 + $0x30] sm:$0xff]
    %v227 = vld [vmem:[%s219 + $0x38] sm:$0xff]
    %vm228 = vcmask 523264
    %v230 = vsel %vm228, %v186, 0
    %v233 = vsel %vm228, %v187, 0
    %v236 = vsel %vm228, %v188, 0
    %v239 = vsel %vm228, %v189, 0
    %241 = vmatprep.subr.mxu0 0.0
    %242 = vmatpush1.msra.mxu0 %v220
    %243 = vmatprep.subr.mxu0 0.0
    %244 = vmatpush1.msra.mxu0 %v221
    %245 = vmatprep.subr.mxu0 0.0
    %246 = vmatpush1.msra.mxu0 %v222
    %247 = vmatprep.subr.mxu0 0.0
    %248 = vmatpush1.msra.mxu0 %v223
    %249 = vmatprep.subr.mxu0 0.0
    %250 = vmatpush1.msra.mxu0 %v224
    %251 = vmatprep.subr.mxu0 0.0
    %252 = vmatpush1.msra.mxu0 %v225
    %253 = vmatprep.subr.mxu0 0.0
    %254 = vmatpush1.msra.mxu0 %v226
    %255 = vmatprep.subr.mxu0 0.0
    %256 = vmatpush1.msra.mxu0 %v227
    %257 = vmatprep.subr.mxu0 0.0
    %258 = vmatpush1.msra.mxu0 0.0
    %259 = vmatprep.subr.mxu0 0.0
    %260 = vmatpush1.msra.mxu0 0.0
    %261 = vmatprep.subr.mxu0 0.0
    %262 = vmatpush1.msra.mxu0 0.0
    %263 = vmatprep.subr.mxu0 0.0
    %264 = vmatpush1.msra.mxu0 0.0
    %265 = vmatprep.subr.mxu0 0.0
    %266 = vmatpush1.msra.mxu0 0.0
    %267 = vmatprep.subr.mxu0 0.0
    %268 = vmatpush1.msra.mxu0 0.0
    %269 = vmatprep.subr.mxu0 0.0
    %270 = vmatpush1.msra.mxu0 0.0
    %271 = vmatprep.subr.mxu0 0.0
    %272 = vmatpush1.msra.mxu0 0.0
    %273 = vmatprep.subr.mxu0 0.0
    %274 = vmatpush1.msra.mxu0 0.0
    %275 = vmatprep.subr.mxu0 0.0
    %276 = vmatpush1.msra.mxu0 0.0
    %277 = vmatprep.subr.mxu0 0.0
    %278 = vmatpush1.msra.mxu0 0.0
    %279 = vmatprep.subr.mxu0 0.0
    %280 = vmatpush1.msra.mxu0 0.0
    %281 = vmatprep.subr.mxu0 0.0
    %282 = vmatpush1.msra.mxu0 0.0
    %283 = vmatprep.subr.mxu0 0.0
    %284 = vmatpush1.msra.mxu0 0.0
    %285 = vmatprep.subr.mxu0 0.0
    %286 = vmatpush1.msra.mxu0 0.0
    %287 = vmatprep.subr.mxu0 0.0
    %288 = vmatpush1.msra.mxu0 0.0
    %289 = vmatprep.subr.mxu0 0.0
    %290 = vmatpush1.msra.mxu0 0.0
    %291 = vmatprep.subr.mxu0 0.0
    %292 = vmatpush1.msra.mxu0 0.0
    %293 = vmatprep.subr.mxu0 0.0
    %294 = vmatpush1.msra.mxu0 0.0
    %295 = vmatprep.subr.mxu0 0.0
    %296 = vmatpush1.msra.mxu0 0.0
    %297 = vmatprep.subr.mxu0 0.0
    %298 = vmatpush1.msra.mxu0 0.0
    %299 = vmatprep.subr.mxu0 0.0
    %300 = vmatpush1.msra.mxu0 0.0
    %301 = vmatprep.subr.mxu0 0.0
    %302 = vmatpush1.msra.mxu0 0.0
    %303 = vmatprep.subr.mxu0 0.0
    %304 = vmatpush1.msra.mxu0 0.0
    %305 = vmatprep.mubr.f32.mxu0 0.0
    %306 = vmatmul.mubr.f32.gmra.mrb[0].mxu0 %v230
    %v307 = vpop.f32.mrb[0].mxu0
    %v308 = vadd.f32 0.0, %v307
    %v309 = vpop.f32.mrb[0].mxu0
    %310 = vmatprep.mubr.f32.mxu0 0.0
    %311 = vmatmul.mubr.f32.gmra.mrb[0].mxu0 %v233
    %v312 = vpop.f32.mrb[0].mxu0
    %v313 = vadd.f32 0.0, %v312
    %v314 = vpop.f32.mrb[0].mxu0
    %315 = vmatprep.mubr.f32.mxu0 0.0
    %316 = vmatmul.mubr.f32.gmra.mrb[0].mxu0 %v236
    %v317 = vpop.f32.mrb[0].mxu0
    %v318 = vadd.f32 0.0, %v317
    %v319 = vpop.f32.mrb[0].mxu0
    %320 = vmatprep.mubr.f32.mxu0 0.0
    %321 = vmatmul.mubr.f32.gmra.mrb[0].mxu0 %v239
    %v322 = vpop.f32.mrb[0].mxu0
    %v323 = vadd.f32 0.0, %v322
    %v324 = vpop.f32.mrb[0].mxu0
    %325 = vdwg.mxu0
    %v327 = vsel %vm228, %v207, 0
    %v330 = vsel %vm228, %v208, 0
    %v333 = vsel %vm228, %v209, 0
    %v336 = vsel %vm228, %v210, 0
    %338 = vmatprep.subr.mxu0 0.0
    %339 = vmatpush1.msra.mxu0 %v211
    %340 = vmatprep.subr.mxu0 0.0
    %341 = vmatpush1.msra.mxu0 %v212
    %342 = vmatprep.subr.mxu0 0.0
    %343 = vmatpush1.msra.mxu0 %v213
    %344 = vmatprep.subr.mxu0 0.0
    %345 = vmatpush1.msra.mxu0 %v214
    %346 = vmatprep.subr.mxu0 0.0
    %347 = vmatpush1.msra.mxu0 %v215
    %348 = vmatprep.subr.mxu0 0.0
    %349 = vmatpush1.msra.mxu0 %v216
    %350 = vmatprep.subr.mxu0 0.0
    %351 = vmatpush1.msra.mxu0 %v217
    %352 = vmatprep.subr.mxu0 0.0
    %353 = vmatpush1.msra.mxu0 %v218
    %354 = vmatprep.subr.mxu0 0.0
    %355 = vmatpush1.msra.mxu0 0.0
    %356 = vmatprep.subr.mxu0 0.0
    %357 = vmatpush1.msra.mxu0 0.0
    %358 = vmatprep.subr.mxu0 0.0
    %359 = vmatpush1.msra.mxu0 0.0
    %360 = vmatprep.subr.mxu0 0.0
    %361 = vmatpush1.msra.mxu0 0.0
    %362 = vmatprep.subr.mxu0 0.0
    %363 = vmatpush1.msra.mxu0 0.0
    %364 = vmatprep.subr.mxu0 0.0
    %365 = vmatpush1.msra.mxu0 0.0
    %366 = vmatprep.subr.mxu0 0.0
    %367 = vmatpush1.msra.mxu0 0.0
    %368 = vmatprep.subr.mxu0 0.0
    %369 = vmatpush1.msra.mxu0 0.0
    %370 = vmatprep.subr.mxu0 0.0
    %371 = vmatpush1.msra.mxu0 0.0
    %372 = vmatprep.subr.mxu0 0.0
    %373 = vmatpush1.msra.mxu0 0.0
    %374 = vmatprep.subr.mxu0 0.0
    %375 = vmatpush1.msra.mxu0 0.0
    %376 = vmatprep.subr.mxu0 0.0
    %377 = vmatpush1.msra.mxu0 0.0
    %378 = vmatprep.subr.mxu0 0.0
    %379 = vmatpush1.msra.mxu0 0.0
    %380 = vmatprep.subr.mxu0 0.0
    %381 = vmatpush1.msra.mxu0 0.0
    %382 = vmatprep.subr.mxu0 0.0
    %383 = vmatpush1.msra.mxu0 0.0
    %384 = vmatprep.subr.mxu0 0.0
    %385 = vmatpush1.msra.mxu0 0.0
    %386 = vmatprep.subr.mxu0 0.0
    %387 = vmatpush1.msra.mxu0 0.0
    %388 = vmatprep.subr.mxu0 0.0
    %389 = vmatpush1.msra.mxu0 0.0
    %390 = vmatprep.subr.mxu0 0.0
    %391 = vmatpush1.msra.mxu0 0.0
    %392 = vmatprep.subr.mxu0 0.0
    %393 = vmatpush1.msra.mxu0 0.0
    %394 = vmatprep.subr.mxu0 0.0
    %395 = vmatpush1.msra.mxu0 0.0
    %396 = vmatprep.subr.mxu0 0.0
    %397 = vmatpush1.msra.mxu0 0.0
    %398 = vmatprep.subr.mxu0 0.0
    %399 = vmatpush1.msra.mxu0 0.0
    %400 = vmatprep.subr.mxu0 0.0
    %401 = vmatpush1.msra.mxu0 0.0
    %402 = vmatprep.mubr.f32.mxu0 0.0
    %403 = vmatmul.mubr.f32.gmra.mrb[0].mxu0 %v327
    %v404 = vpop.f32.mrb[0].mxu0
    %v405 = vadd.f32 %v308, %v404
    %v406 = vpop.f32.mrb[0].mxu0
    %407 = vmatprep.mubr.f32.mxu0 0.0
    %408 = vmatmul.mubr.f32.gmra.mrb[0].mxu0 %v330
    %v409 = vpop.f32.mrb[0].mxu0
    %v410 = vadd.f32 %v313, %v409
    %v411 = vpop.f32.mrb[0].mxu0
    %412 = vmatprep.mubr.f32.mxu0 0.0
    %413 = vmatmul.mubr.f32.gmra.mrb[0].mxu0 %v333
    %v414 = vpop.f32.mrb[0].mxu0
    %v415 = vadd.f32 %v318, %v414
    %v416 = vpop.f32.mrb[0].mxu0
    %417 = vmatprep.mubr.f32.mxu0 0.0
    %418 = vmatmul.mubr.f32.gmra.mrb[0].mxu0 %v336
    %v419 = vpop.f32.mrb[0].mxu0
    %v420 = vadd.f32 %v323, %v419
    %v421 = vpop.f32.mrb[0].mxu0
    %422 = vdwg.mxu0
    %v423 = vrot.slane %v186, 1
    %v424 = vrot.slane %v187, 1
    %v425 = vrot.slane %v188, 1
    %v426 = vrot.slane %v189, 1
    %vm427 = vcmp.lt.s32.totalorder %v110, 7
    %v428 = vsel %vm427, %v425, %v426
    %v429 = vsel %vm427, %v424, %v425
    %v430 = vsel %vm427, %v423, %v424
    %v431 = vsel %vm427, %v426, %v423
    %v432 = vsel %vm182, 1, 0
    %v433 = vsel %vm183, 1, 0
    %v434 = vsel %vm184, 1, 0
    %v435 = vsel %vm185, 1, 0
    %vm436 = vcmp.eq.s32.totalorder %v432, 1
    %vm437 = vcmp.eq.s32.totalorder %v433, 1
    %vm438 = vcmp.eq.s32.totalorder %v434, 1
    %vm439 = vcmp.eq.s32.totalorder %v435, 1
    %v440 = vsel %vm436, %v430, 0.0
    %v441 = vsel %vm437, %v429, 0.0
    %v442 = vsel %vm438, %v428, 0.0
    %v443 = vsel %vm439, %v431, 0.0
    %s444 = scalar_lea.vmem [#allocation2], 128
    %v445 = vld [vmem:[%s444] sm:$0xff]
    %v446 = vld [vmem:[%s444 + $0x8] sm:$0xff]
    %v447 = vld [vmem:[%s444 + $0x10] sm:$0xff]
    %v448 = vld [vmem:[%s444 + $0x18] sm:$0xff]
    %v449 = vld [vmem:[%s444 + $0x20] sm:$0xff]
    %v450 = vld [vmem:[%s444 + $0x28] sm:$0xff]
    %v451 = vld [vmem:[%s444 + $0x30] sm:$0xff]
    %v452 = vld [vmem:[%s444 + $0x38] sm:$0xff]
    %v454 = vsel %vm228, %v440, 0
    %v457 = vsel %vm228, %v441, 0
    %v460 = vsel %vm228, %v442, 0
    %v463 = vsel %vm228, %v443, 0
    %465 = vmatprep.subr.mxu0 0.0
    %466 = vmatpush1.msra.mxu0 %v445
    %467 = vmatprep.subr.mxu0 0.0
    %468 = vmatpush1.msra.mxu0 %v446
    %469 = vmatprep.subr.mxu0 0.0
    %470 = vmatpush1.msra.mxu0 %v447
    %471 = vmatprep.subr.mxu0 0.0
    %472 = vmatpush1.msra.mxu0 %v448
    %473 = vmatprep.subr.mxu0 0.0
    %474 = vmatpush1.msra.mxu0 %v449
    %475 = vmatprep.subr.mxu0 0.0
    %476 = vmatpush1.msra.mxu0 %v450
    %477 = vmatprep.subr.mxu0 0.0
    %478 = vmatpush1.msra.mxu0 %v451
    %479 = vmatprep.subr.mxu0 0.0
    %480 = vmatpush1.msra.mxu0 %v452
    %481 = vmatprep.subr.mxu0 0.0
    %482 = vmatpush1.msra.mxu0 0.0
    %483 = vmatprep.subr.mxu0 0.0
    %484 = vmatpush1.msra.mxu0 0.0
    %485 = vmatprep.subr.mxu0 0.0
    %486 = vmatpush1.msra.mxu0 0.0
    %487 = vmatprep.subr.mxu0 0.0
    %488 = vmatpush1.msra.mxu0 0.0
    %489 = vmatprep.subr.mxu0 0.0
    %490 = vmatpush1.msra.mxu0 0.0
    %491 = vmatprep.subr.mxu0 0.0
    %492 = vmatpush1.msra.mxu0 0.0
    %493 = vmatprep.subr.mxu0 0.0
    %494 = vmatpush1.msra.mxu0 0.0
    %495 = vmatprep.subr.mxu0 0.0
    %496 = vmatpush1.msra.mxu0 0.0
    %497 = vmatprep.subr.mxu0 0.0
    %498 = vmatpush1.msra.mxu0 0.0
    %499 = vmatprep.subr.mxu0 0.0
    %500 = vmatpush1.msra.mxu0 0.0
    %501 = vmatprep.subr.mxu0 0.0
    %502 = vmatpush1.msra.mxu0 0.0
    %503 = vmatprep.subr.mxu0 0.0
    %504 = vmatpush1.msra.mxu0 0.0
    %505 = vmatprep.subr.mxu0 0.0
    %506 = vmatpush1.msra.mxu0 0.0
    %507 = vmatprep.subr.mxu0 0.0
    %508 = vmatpush1.msra.mxu0 0.0
    %509 = vmatprep.subr.mxu0 0.0
    %510 = vmatpush1.msra.mxu0 0.0
    %511 = vmatprep.subr.mxu0 0.0
    %512 = vmatpush1.msra.mxu0 0.0
    %513 = vmatprep.subr.mxu0 0.0
    %514 = vmatpush1.msra.mxu0 0.0
    %515 = vmatprep.subr.mxu0 0.0
    %516 = vmatpush1.msra.mxu0 0.0
    %517 = vmatprep.subr.mxu0 0.0
    %518 = vmatpush1.msra.mxu0 0.0
    %519 = vmatprep.subr.mxu0 0.0
    %520 = vmatpush1.msra.mxu0 0.0
    %521 = vmatprep.subr.mxu0 0.0
    %522 = vmatpush1.msra.mxu0 0.0
    %523 = vmatprep.subr.mxu0 0.0
    %524 = vmatpush1.msra.mxu0 0.0
    %525 = vmatprep.subr.mxu0 0.0
    %526 = vmatpush1.msra.mxu0 0.0
    %527 = vmatprep.subr.mxu0 0.0
    %528 = vmatpush1.msra.mxu0 0.0
    %529 = vmatprep.mubr.f32.mxu0 0.0
    %530 = vmatmul.mubr.f32.gmra.mrb[0].mxu0 %v454
    %v531 = vpop.f32.mrb[0].mxu0
    %v532 = vadd.f32 0.0, %v531
    %v533 = vpop.f32.mrb[0].mxu0
    %534 = vmatprep.mubr.f32.mxu0 0.0
    %535 = vmatmul.mubr.f32.gmra.mrb[0].mxu0 %v457
    %v536 = vpop.f32.mrb[0].mxu0
    %v537 = vadd.f32 0.0, %v536
    %v538 = vpop.f32.mrb[0].mxu0
    %539 = vmatprep.mubr.f32.mxu0 0.0
    %540 = vmatmul.mubr.f32.gmra.mrb[0].mxu0 %v460
    %v541 = vpop.f32.mrb[0].mxu0
    %v542 = vadd.f32 0.0, %v541
    %v543 = vpop.f32.mrb[0].mxu0
    %544 = vmatprep.mubr.f32.mxu0 0.0
    %545 = vmatmul.mubr.f32.gmra.mrb[0].mxu0 %v463
    %v546 = vpop.f32.mrb[0].mxu0
    %v547 = vadd.f32 0.0, %v546
    %v548 = vpop.f32.mrb[0].mxu0
    %549 = vdwg.mxu0
    %v550 = vadd.f32 %v405, %v532
    %v551 = vadd.f32 %v410, %v537
    %v552 = vadd.f32 %v415, %v542
    %v553 = vadd.f32 %v420, %v547
    %v554 = vlaneseq
    %v555 = vshrl.u32 %v554, 7
    %v556 = vsub.s32 0, %v555
    %v557 = vrot.slane %v86, %v556
    %v558 = vadd.f32 %v550, %v557
    %v559 = vadd.f32 %v551, %v557
    %v560 = vadd.f32 %v552, %v557
    %v561 = vadd.f32 %v553, %v557
    %v562 = vmax.f32 %v558, 0.0
    %v563 = vmax.f32 %v559, 0.0
    %v564 = vmax.f32 %v560, 0.0
    %v565 = vmax.f32 %v561, 0.0
    %vm566 = vcmask 261120
    %v568 = vsel %vm566, %v91, 0
    %570 = vmatprep.subr.mxu0 0.0
    %571 = vmatpush1.msra.mxu0 %v562
    %572 = vmatprep.subr.mxu0 0.0
    %573 = vmatpush1.msra.mxu0 %v563
    %574 = vmatprep.subr.mxu0 0.0
    %575 = vmatpush1.msra.mxu0 %v564
    %576 = vmatprep.subr.mxu0 0.0
    %577 = vmatpush1.msra.mxu0 %v565
    %578 = vmatprep.subr.mxu0 0.0
    %579 = vmatpush1.msra.mxu0 0.0
    %580 = vmatprep.subr.mxu0 0.0
    %581 = vmatpush1.msra.mxu0 0.0
    %582 = vmatprep.subr.mxu0 0.0
    %583 = vmatpush1.msra.mxu0 0.0
    %584 = vmatprep.subr.mxu0 0.0
    %585 = vmatpush1.msra.mxu0 0.0
    %586 = vmatprep.subr.mxu0 0.0
    %587 = vmatpush1.msra.mxu0 0.0
    %588 = vmatprep.subr.mxu0 0.0
    %589 = vmatpush1.msra.mxu0 0.0
    %590 = vmatprep.subr.mxu0 0.0
    %591 = vmatpush1.msra.mxu0 0.0
    %592 = vmatprep.subr.mxu0 0.0
    %593 = vmatpush1.msra.mxu0 0.0
    %594 = vmatprep.subr.mxu0 0.0
    %595 = vmatpush1.msra.mxu0 0.0
    %596 = vmatprep.subr.mxu0 0.0
    %597 = vmatpush1.msra.mxu0 0.0
    %598 = vmatprep.subr.mxu0 0.0
    %599 = vmatpush1.msra.mxu0 0.0
    %600 = vmatprep.subr.mxu0 0.0
    %601 = vmatpush1.msra.mxu0 0.0
    %602 = vmatprep.subr.mxu0 0.0
    %603 = vmatpush1.msra.mxu0 0.0
    %604 = vmatprep.subr.mxu0 0.0
    %605 = vmatpush1.msra.mxu0 0.0
    %606 = vmatprep.subr.mxu0 0.0
    %607 = vmatpush1.msra.mxu0 0.0
    %608 = vmatprep.subr.mxu0 0.0
    %609 = vmatpush1.msra.mxu0 0.0
    %610 = vmatprep.subr.mxu0 0.0
    %611 = vmatpush1.msra.mxu0 0.0
    %612 = vmatprep.subr.mxu0 0.0
    %613 = vmatpush1.msra.mxu0 0.0
    %614 = vmatprep.subr.mxu0 0.0
    %615 = vmatpush1.msra.mxu0 0.0
    %616 = vmatprep.subr.mxu0 0.0
    %617 = vmatpush1.msra.mxu0 0.0
    %618 = vmatprep.subr.mxu0 0.0
    %619 = vmatpush1.msra.mxu0 0.0
    %620 = vmatprep.subr.mxu0 0.0
    %621 = vmatpush1.msra.mxu0 0.0
    %622 = vmatprep.subr.mxu0 0.0
    %623 = vmatpush1.msra.mxu0 0.0
    %624 = vmatprep.subr.mxu0 0.0
    %625 = vmatpush1.msra.mxu0 0.0
    %626 = vmatprep.subr.mxu0 0.0
    %627 = vmatpush1.msra.mxu0 0.0
    %628 = vmatprep.subr.mxu0 0.0
    %629 = vmatpush1.msra.mxu0 0.0
    %630 = vmatprep.subr.mxu0 0.0
    %631 = vmatpush1.msra.mxu0 0.0
    %632 = vmatprep.subr.mxu0 0.0
    %633 = vmatpush1.msra.mxu0 0.0
    %634 = vmatprep.mubr.f32.mxu0 0.0
    %635 = vmatmul.mubr.f32.gmra.mrb[0].mxu0 %v568
    %v636 = vpop.f32.mrb[0].mxu0
    %v637 = vadd.f32 0.0, %v636
    %v638 = vpop.f32.mrb[0].mxu0
    %639 = vdwg.mxu0
    %640 = vmatprep.subr.mxu0 0.0
    %641 = vmatpush1.msra.mxu0 %v92
    %642 = vmatprep.subr.mxu0 0.0
    %643 = vmatpush1.msra.mxu0 %v93
    %644 = vmatprep.subr.mxu0 0.0
    %645 = vmatpush1.msra.mxu0 %v94
    %646 = vmatprep.subr.mxu0 0.0
    %647 = vmatpush1.msra.mxu0 %v95
    %648 = vmatprep.subr.mxu0 0.0
    %649 = vmatpush1.msra.mxu0 %v96
    %650 = vmatprep.subr.mxu0 0.0
    %651 = vmatpush1.msra.mxu0 %v97
    %652 = vmatprep.subr.mxu0 0.0
    %653 = vmatpush1.msra.mxu0 %v98
    %654 = vmatprep.subr.mxu0 0.0
    %655 = vmatpush1.msra.mxu0 %v99
    %656 = vmatprep.subr.mxu0 0.0
    %657 = vmatpush1.msra.mxu0 %v100
    %658 = vmatprep.subr.mxu0 0.0
    %659 = vmatpush1.msra.mxu0 %v101
    %660 = vmatprep.subr.mxu0 0.0
    %661 = vmatpush1.msra.mxu0 %v102
    %662 = vmatprep.subr.mxu0 0.0
    %663 = vmatpush1.msra.mxu0 %v103
    %664 = vmatprep.subr.mxu0 0.0
    %665 = vmatpush1.msra.mxu0 %v104
    %666 = vmatprep.subr.mxu0 0.0
    %667 = vmatpush1.msra.mxu0 %v105
    %668 = vmatprep.subr.mxu0 0.0
    %669 = vmatpush1.msra.mxu0 %v106
    %670 = vmatprep.subr.mxu0 0.0
    %671 = vmatpush1.msra.mxu0 %v107
    %672 = vmatprep.subr.mxu0 0.0
    %673 = vmatpush1.msra.mxu0 0.0
    %674 = vmatprep.subr.mxu0 0.0
    %675 = vmatpush1.msra.mxu0 0.0
    %676 = vmatprep.subr.mxu0 0.0
    %677 = vmatpush1.msra.mxu0 0.0
    %678 = vmatprep.subr.mxu0 0.0
    %679 = vmatpush1.msra.mxu0 0.0
    %680 = vmatprep.subr.mxu0 0.0
    %681 = vmatpush1.msra.mxu0 0.0
    %682 = vmatprep.subr.mxu0 0.0
    %683 = vmatpush1.msra.mxu0 0.0
    %684 = vmatprep.subr.mxu0 0.0
    %685 = vmatpush1.msra.mxu0 0.0
    %686 = vmatprep.subr.mxu0 0.0
    %687 = vmatpush1.msra.mxu0 0.0
    %688 = vmatprep.subr.mxu0 0.0
    %689 = vmatpush1.msra.mxu0 0.0
    %690 = vmatprep.subr.mxu0 0.0
    %691 = vmatpush1.msra.mxu0 0.0
    %692 = vmatprep.subr.mxu0 0.0
    %693 = vmatpush1.msra.mxu0 0.0
    %694 = vmatprep.subr.mxu0 0.0
    %695 = vmatpush1.msra.mxu0 0.0
    %696 = vmatprep.subr.mxu0 0.0
    %697 = vmatpush1.msra.mxu0 0.0
    %698 = vmatprep.subr.mxu0 0.0
    %699 = vmatpush1.msra.mxu0 0.0
    %700 = vmatprep.subr.mxu0 0.0
    %701 = vmatpush1.msra.mxu0 0.0
    %702 = vmatprep.subr.mxu0 0.0
    %703 = vmatpush1.msra.mxu0 0.0
    %704 = vmatprep.mubr.f32.mxu0 0.0
    %705 = vmatmul.mubr.f32.gmra.mrb[0].mxu0 %v637
    %v706 = vpop.f32.mrb[0].mxu0
    %v707 = vadd.f32 0.0, %v706
    %v708 = vpop.f32.mrb[0].mxu0
    %709 = vdwg.mxu0
    %vm710 = vcmask 64512
    %v712 = vsel %vm710, %v87, 0
    %v715 = vsel %vm710, %v88, 0
    %v718 = vsel %vm710, %v89, 0
    %v721 = vsel %vm710, %v90, 0
    %723 = vmatprep.subr.mxu0 0.0
    %724 = vmatpush1.msra.mxu0 %v707
    %725 = vmatprep.subr.mxu0 0.0
    %726 = vmatpush1.msra.mxu0 0.0
    %727 = vmatprep.subr.mxu0 0.0
    %728 = vmatpush1.msra.mxu0 0.0
    %729 = vmatprep.subr.mxu0 0.0
    %730 = vmatpush1.msra.mxu0 0.0
    %731 = vmatprep.subr.mxu0 0.0
    %732 = vmatpush1.msra.mxu0 0.0
    %733 = vmatprep.subr.mxu0 0.0
    %734 = vmatpush1.msra.mxu0 0.0
    %735 = vmatprep.subr.mxu0 0.0
    %736 = vmatpush1.msra.mxu0 0.0
    %737 = vmatprep.subr.mxu0 0.0
    %738 = vmatpush1.msra.mxu0 0.0
    %739 = vmatprep.subr.mxu0 0.0
    %740 = vmatpush1.msra.mxu0 0.0
    %741 = vmatprep.subr.mxu0 0.0
    %742 = vmatpush1.msra.mxu0 0.0
    %743 = vmatprep.subr.mxu0 0.0
    %744 = vmatpush1.msra.mxu0 0.0
    %745 = vmatprep.subr.mxu0 0.0
    %746 = vmatpush1.msra.mxu0 0.0
    %747 = vmatprep.subr.mxu0 0.0
    %748 = vmatpush1.msra.mxu0 0.0
    %749 = vmatprep.subr.mxu0 0.0
    %750 = vmatpush1.msra.mxu0 0.0
    %751 = vmatprep.subr.mxu0 0.0
    %752 = vmatpush1.msra.mxu0 0.0
    %753 = vmatprep.subr.mxu0 0.0
    %754 = vmatpush1.msra.mxu0 0.0
    %755 = vmatprep.subr.mxu0 0.0
    %756 = vmatpush1.msra.mxu0 0.0
    %757 = vmatprep.subr.mxu0 0.0
    %758 = vmatpush1.msra.mxu0 0.0
    %759 = vmatprep.subr.mxu0 0.0
    %760 = vmatpush1.msra.mxu0 0.0
    %761 = vmatprep.subr.mxu0 0.0
    %762 = vmatpush1.msra.mxu0 0.0
    %763 = vmatprep.subr.mxu0 0.0
    %764 = vmatpush1.msra.mxu0 0.0
    %765 = vmatprep.subr.mxu0 0.0
    %766 = vmatpush1.msra.mxu0 0.0
    %767 = vmatprep.subr.mxu0 0.0
    %768 = vmatpush1.msra.mxu0 0.0
    %769 = vmatprep.subr.mxu0 0.0
    %770 = vmatpush1.msra.mxu0 0.0
    %771 = vmatprep.subr.mxu0 0.0
    %772 = vmatpush1.msra.mxu0 0.0
    %773 = vmatprep.subr.mxu0 0.0
    %774 = vmatpush1.msra.mxu0 0.0
    %775 = vmatprep.subr.mxu0 0.0
    %776 = vmatpush1.msra.mxu0 0.0
    %777 = vmatprep.subr.mxu0 0.0
    %778 = vmatpush1.msra.mxu0 0.0
    %779 = vmatprep.subr.mxu0 0.0
    %780 = vmatpush1.msra.mxu0 0.0
    %781 = vmatprep.subr.mxu0 0.0
    %782 = vmatpush1.msra.mxu0 0.0
    %783 = vmatprep.subr.mxu0 0.0
    %784 = vmatpush1.msra.mxu0 0.0
    %785 = vmatprep.subr.mxu0 0.0
    %786 = vmatpush1.msra.mxu0 0.0
    %787 = vmatprep.mubr.f32.mxu0 0.0
    %788 = vmatmul.mubr.f32.gmra.mrb[0].mxu0 %v712
    %v789 = vpop.f32.mrb[0].mxu0
    %v790 = vadd.f32 0.0, %v789
    %v791 = vpop.f32.mrb[0].mxu0
    %792 = vmatprep.mubr.f32.mxu0 0.0
    %793 = vmatmul.mubr.f32.gmra.mrb[0].mxu0 %v715
    %v794 = vpop.f32.mrb[0].mxu0
    %v795 = vadd.f32 0.0, %v794
    %v796 = vpop.f32.mrb[0].mxu0
    %797 = vmatprep.mubr.f32.mxu0 0.0
    %798 = vmatmul.mubr.f32.gmra.mrb[0].mxu0 %v718
    %v799 = vpop.f32.mrb[0].mxu0
    %v800 = vadd.f32 0.0, %v799
    %v801 = vpop.f32.mrb[0].mxu0
    %802 = vmatprep.mubr.f32.mxu0 0.0
    %803 = vmatmul.mubr.f32.gmra.mrb[0].mxu0 %v721
    %v804 = vpop.f32.mrb[0].mxu0
    %v805 = vadd.f32 0.0, %v804
    %v806 = vpop.f32.mrb[0].mxu0
    %807 = vdwg.mxu0
    %v809 = vsel %vm710, %v790, 0
    %v812 = vsel %vm710, %v795, 0
    %v815 = vsel %vm710, %v800, 0
    %v818 = vsel %vm710, %v805, 0
    %820 = vmatprep.subr.mxu0 0.0
    %821 = vmatpush1.msra.mxu0 %v108
    %822 = vmatprep.subr.mxu0 0.0
    %823 = vmatpush1.msra.mxu0 0.0
    %824 = vmatprep.subr.mxu0 0.0
    %825 = vmatpush1.msra.mxu0 0.0
    %826 = vmatprep.subr.mxu0 0.0
    %827 = vmatpush1.msra.mxu0 0.0
    %828 = vmatprep.subr.mxu0 0.0
    %829 = vmatpush1.msra.mxu0 0.0
    %830 = vmatprep.subr.mxu0 0.0
    %831 = vmatpush1.msra.mxu0 0.0
    %832 = vmatprep.subr.mxu0 0.0
    %833 = vmatpush1.msra.mxu0 0.0
    %834 = vmatprep.subr.mxu0 0.0
    %835 = vmatpush1.msra.mxu0 0.0
    %836 = vmatprep.subr.mxu0 0.0
    %837 = vmatpush1.msra.mxu0 0.0
    %838 = vmatprep.subr.mxu0 0.0
    %839 = vmatpush1.msra.mxu0 0.0
    %840 = vmatprep.subr.mxu0 0.0
    %841 = vmatpush1.msra.mxu0 0.0
    %842 = vmatprep.subr.mxu0 0.0
    %843 = vmatpush1.msra.mxu0 0.0
    %844 = vmatprep.subr.mxu0 0.0
    %845 = vmatpush1.msra.mxu0 0.0
    %846 = vmatprep.subr.mxu0 0.0
    %847 = vmatpush1.msra.mxu0 0.0
    %848 = vmatprep.subr.mxu0 0.0
    %849 = vmatpush1.msra.mxu0 0.0
    %850 = vmatprep.subr.mxu0 0.0
    %851 = vmatpush1.msra.mxu0 0.0
    %852 = vmatprep.subr.mxu0 0.0
    %853 = vmatpush1.msra.mxu0 0.0
    %854 = vmatprep.subr.mxu0 0.0
    %855 = vmatpush1.msra.mxu0 0.0
    %856 = vmatprep.subr.mxu0 0.0
    %857 = vmatpush1.msra.mxu0 0.0
    %858 = vmatprep.subr.mxu0 0.0
    %859 = vmatpush1.msra.mxu0 0.0
    %860 = vmatprep.subr.mxu0 0.0
    %861 = vmatpush1.msra.mxu0 0.0
    %862 = vmatprep.subr.mxu0 0.0
    %863 = vmatpush1.msra.mxu0 0.0
    %864 = vmatprep.subr.mxu0 0.0
    %865 = vmatpush1.msra.mxu0 0.0
    %866 = vmatprep.subr.mxu0 0.0
    %867 = vmatpush1.msra.mxu0 0.0
    %868 = vmatprep.subr.mxu0 0.0
    %869 = vmatpush1.msra.mxu0 0.0
    %870 = vmatprep.subr.mxu0 0.0
    %871 = vmatpush1.msra.mxu0 0.0
    %872 = vmatprep.subr.mxu0 0.0
    %873 = vmatpush1.msra.mxu0 0.0
    %874 = vmatprep.subr.mxu0 0.0
    %875 = vmatpush1.msra.mxu0 0.0
    %876 = vmatprep.subr.mxu0 0.0
    %877 = vmatpush1.msra.mxu0 0.0
    %878 = vmatprep.subr.mxu0 0.0
    %879 = vmatpush1.msra.mxu0 0.0
    %880 = vmatprep.subr.mxu0 0.0
    %881 = vmatpush1.msra.mxu0 0.0
    %882 = vmatprep.subr.mxu0 0.0
    %883 = vmatpush1.msra.mxu0 0.0
    %884 = vmatprep.mubr.f32.mxu0 0.0
    %885 = vmatmul.mubr.f32.gmra.mrb[0].mxu0 %v809
    %v886 = vpop.f32.mrb[0].mxu0
    %v887 = vadd.f32 0.0, %v886
    %v888 = vpop.f32.mrb[0].mxu0
    %889 = vmatprep.mubr.f32.mxu0 0.0
    %890 = vmatmul.mubr.f32.gmra.mrb[0].mxu0 %v812
    %v891 = vpop.f32.mrb[0].mxu0
    %v892 = vadd.f32 0.0, %v891
    %v893 = vpop.f32.mrb[0].mxu0
    %894 = vmatprep.mubr.f32.mxu0 0.0
    %895 = vmatmul.mubr.f32.gmra.mrb[0].mxu0 %v815
    %v896 = vpop.f32.mrb[0].mxu0
    %v897 = vadd.f32 0.0, %v896
    %v898 = vpop.f32.mrb[0].mxu0
    %899 = vmatprep.mubr.f32.mxu0 0.0
    %900 = vmatmul.mubr.f32.gmra.mrb[0].mxu0 %v818
    %v901 = vpop.f32.mrb[0].mxu0
    %v902 = vadd.f32 0.0, %v901
    %v903 = vpop.f32.mrb[0].mxu0
    %904 = vdwg.mxu0
    %v905 = vmul.f32 %v887, 0.001953125
    %v906 = vmul.f32 %v892, 0.001953125
    %v907 = vmul.f32 %v897, 0.001953125
    %v908 = vmul.f32 %v902, 0.001953125
    %v909 = vsub.f32 %v562, %v905
    %v910 = vsub.f32 %v563, %v906
    %v911 = vsub.f32 %v564, %v907
    %v912 = vsub.f32 %v565, %v908
    %v913 = vmul.f32 %v909, %v909
    %v914 = vmul.f32 %v910, %v910
    %v915 = vmul.f32 %v911, %v911
    %v916 = vmul.f32 %v912, %v912
    %917 = vmatprep.subr.mxu0 0.0
    %918 = vmatpush1.msra.mxu0 %v913
    %919 = vmatprep.subr.mxu0 0.0
    %920 = vmatpush1.msra.mxu0 %v914
    %921 = vmatprep.subr.mxu0 0.0
    %922 = vmatpush1.msra.mxu0 %v915
    %923 = vmatprep.subr.mxu0 0.0
    %924 = vmatpush1.msra.mxu0 %v916
    %925 = vmatprep.subr.mxu0 0.0
    %926 = vmatpush1.msra.mxu0 0.0
    %927 = vmatprep.subr.mxu0 0.0
    %928 = vmatpush1.msra.mxu0 0.0
    %929 = vmatprep.subr.mxu0 0.0
    %930 = vmatpush1.msra.mxu0 0.0
    %931 = vmatprep.subr.mxu0 0.0
    %932 = vmatpush1.msra.mxu0 0.0
    %933 = vmatprep.subr.mxu0 0.0
    %934 = vmatpush1.msra.mxu0 0.0
    %935 = vmatprep.subr.mxu0 0.0
    %936 = vmatpush1.msra.mxu0 0.0
    %937 = vmatprep.subr.mxu0 0.0
    %938 = vmatpush1.msra.mxu0 0.0
    %939 = vmatprep.subr.mxu0 0.0
    %940 = vmatpush1.msra.mxu0 0.0
    %941 = vmatprep.subr.mxu0 0.0
    %942 = vmatpush1.msra.mxu0 0.0
    %943 = vmatprep.subr.mxu0 0.0
    %944 = vmatpush1.msra.mxu0 0.0
    %945 = vmatprep.subr.mxu0 0.0
    %946 = vmatpush1.msra.mxu0 0.0
    %947 = vmatprep.subr.mxu0 0.0
    %948 = vmatpush1.msra.mxu0 0.0
    %949 = vmatprep.subr.mxu0 0.0
    %950 = vmatpush1.msra.mxu0 0.0
    %951 = vmatprep.subr.mxu0 0.0
    %952 = vmatpush1.msra.mxu0 0.0
    %953 = vmatprep.subr.mxu0 0.0
    %954 = vmatpush1.msra.mxu0 0.0
    %955 = vmatprep.subr.mxu0 0.0
    %956 = vmatpush1.msra.mxu0 0.0
    %957 = vmatprep.subr.mxu0 0.0
    %958 = vmatpush1.msra.mxu0 0.0
    %959 = vmatprep.subr.mxu0 0.0
    %960 = vmatpush1.msra.mxu0 0.0
    %961 = vmatprep.subr.mxu0 0.0
    %962 = vmatpush1.msra.mxu0 0.0
    %963 = vmatprep.subr.mxu0 0.0
    %964 = vmatpush1.msra.mxu0 0.0
    %965 = vmatprep.subr.mxu0 0.0
    %966 = vmatpush1.msra.mxu0 0.0
    %967 = vmatprep.subr.mxu0 0.0
    %968 = vmatpush1.msra.mxu0 0.0
    %969 = vmatprep.subr.mxu0 0.0
    %970 = vmatpush1.msra.mxu0 0.0
    %971 = vmatprep.subr.mxu0 0.0
    %972 = vmatpush1.msra.mxu0 0.0
    %973 = vmatprep.subr.mxu0 0.0
    %974 = vmatpush1.msra.mxu0 0.0
    %975 = vmatprep.subr.mxu0 0.0
    %976 = vmatpush1.msra.mxu0 0.0
    %977 = vmatprep.subr.mxu0 0.0
    %978 = vmatpush1.msra.mxu0 0.0
    %979 = vmatprep.subr.mxu0 0.0
    %980 = vmatpush1.msra.mxu0 0.0
    %981 = vmatprep.mubr.f32.mxu0 0.0
    %982 = vmatmul.mubr.f32.gmra.mrb[0].mxu0 %v568
    %v983 = vpop.f32.mrb[0].mxu0
    %v984 = vadd.f32 0.0, %v983
    %v985 = vpop.f32.mrb[0].mxu0
    %986 = vdwg.mxu0
    %987 = vmatprep.subr.mxu0 0.0
    %988 = vmatpush1.msra.mxu0 %v92
    %989 = vmatprep.subr.mxu0 0.0
    %990 = vmatpush1.msra.mxu0 %v93
    %991 = vmatprep.subr.mxu0 0.0
    %992 = vmatpush1.msra.mxu0 %v94
    %993 = vmatprep.subr.mxu0 0.0
    %994 = vmatpush1.msra.mxu0 %v95
    %995 = vmatprep.subr.mxu0 0.0
    %996 = vmatpush1.msra.mxu0 %v96
    %997 = vmatprep.subr.mxu0 0.0
    %998 = vmatpush1.msra.mxu0 %v97
    %999 = vmatprep.subr.mxu0 0.0
    %1000 = vmatpush1.msra.mxu0 %v98
    %1001 = vmatprep.subr.mxu0 0.0
    %1002 = vmatpush1.msra.mxu0 %v99
    %1003 = vmatprep.subr.mxu0 0.0
    %1004 = vmatpush1.msra.mxu0 %v100
    %1005 = vmatprep.subr.mxu0 0.0
    %1006 = vmatpush1.msra.mxu0 %v101
    %1007 = vmatprep.subr.mxu0 0.0
    %1008 = vmatpush1.msra.mxu0 %v102
    %1009 = vmatprep.subr.mxu0 0.0
    %1010 = vmatpush1.msra.mxu0 %v103
    %1011 = vmatprep.subr.mxu0 0.0
    %1012 = vmatpush1.msra.mxu0 %v104
    %1013 = vmatprep.subr.mxu0 0.0
    %1014 = vmatpush1.msra.mxu0 %v105
    %1015 = vmatprep.subr.mxu0 0.0
    %1016 = vmatpush1.msra.mxu0 %v106
    %1017 = vmatprep.subr.mxu0 0.0
    %1018 = vmatpush1.msra.mxu0 %v107
    %1019 = vmatprep.subr.mxu0 0.0
    %1020 = vmatpush1.msra.mxu0 0.0
    %1021 = vmatprep.subr.mxu0 0.0
    %1022 = vmatpush1.msra.mxu0 0.0
    %1023 = vmatprep.subr.mxu0 0.0
    %1024 = vmatpush1.msra.mxu0 0.0
    %1025 = vmatprep.subr.mxu0 0.0
    %1026 = vmatpush1.msra.mxu0 0.0
    %1027 = vmatprep.subr.mxu0 0.0
    %1028 = vmatpush1.msra.mxu0 0.0
    %1029 = vmatprep.subr.mxu0 0.0
    %1030 = vmatpush1.msra.mxu0 0.0
    %1031 = vmatprep.subr.mxu0 0.0
    %1032 = vmatpush1.msra.mxu0 0.0
    %1033 = vmatprep.subr.mxu0 0.0
    %1034 = vmatpush1.msra.mxu0 0.0
    %1035 = vmatprep.subr.mxu0 0.0
    %1036 = vmatpush1.msra.mxu0 0.0
    %1037 = vmatprep.subr.mxu0 0.0
    %1038 = vmatpush1.msra.mxu0 0.0
    %1039 = vmatprep.subr.mxu0 0.0
    %1040 = vmatpush1.msra.mxu0 0.0
    %1041 = vmatprep.subr.mxu0 0.0
    %1042 = vmatpush1.msra.mxu0 0.0
    %1043 = vmatprep.subr.mxu0 0.0
    %1044 = vmatpush1.msra.mxu0 0.0
    %1045 = vmatprep.subr.mxu0 0.0
    %1046 = vmatpush1.msra.mxu0 0.0
    %1047 = vmatprep.subr.mxu0 0.0
    %1048 = vmatpush1.msra.mxu0 0.0
    %1049 = vmatprep.subr.mxu0 0.0
    %1050 = vmatpush1.msra.mxu0 0.0
    %1051 = vmatprep.mubr.f32.mxu0 0.0
    %1052 = vmatmul.mubr.f32.gmra.mrb[0].mxu0 %v984
    %v1053 = vpop.f32.mrb[0].mxu0
    %v1054 = vadd.f32 0.0, %v1053
    %v1055 = vpop.f32.mrb[0].mxu0
    %1056 = vdwg.mxu0
    %1057 = vmatprep.subr.mxu0 0.0
    %1058 = vmatpush1.msra.mxu0 %v1054
    %1059 = vmatprep.subr.mxu0 0.0
    %1060 = vmatpush1.msra.mxu0 0.0
    %1061 = vmatprep.subr.mxu0 0.0
    %1062 = vmatpush1.msra.mxu0 0.0
    %1063 = vmatprep.subr.mxu0 0.0
    %1064 = vmatpush1.msra.mxu0 0.0
    %1065 = vmatprep.subr.mxu0 0.0
    %1066 = vmatpush1.msra.mxu0 0.0
    %1067 = vmatprep.subr.mxu0 0.0
    %1068 = vmatpush1.msra.mxu0 0.0
    %1069 = vmatprep.subr.mxu0 0.0
    %1070 = vmatpush1.msra.mxu0 0.0
    %1071 = vmatprep.subr.mxu0 0.0
    %1072 = vmatpush1.msra.mxu0 0.0
    %1073 = vmatprep.subr.mxu0 0.0
    %1074 = vmatpush1.msra.mxu0 0.0
    %1075 = vmatprep.subr.mxu0 0.0
    %1076 = vmatpush1.msra.mxu0 0.0
    %1077 = vmatprep.subr.mxu0 0.0
    %1078 = vmatpush1.msra.mxu0 0.0
    %1079 = vmatprep.subr.mxu0 0.0
    %1080 = vmatpush1.msra.mxu0 0.0
    %1081 = vmatprep.subr.mxu0 0.0
    %1082 = vmatpush1.msra.mxu0 0.0
    %1083 = vmatprep.subr.mxu0 0.0
    %1084 = vmatpush1.msra.mxu0 0.0
    %1085 = vmatprep.subr.mxu0 0.0
    %1086 = vmatpush1.msra.mxu0 0.0
    %1087 = vmatprep.subr.mxu0 0.0
    %1088 = vmatpush1.msra.mxu0 0.0
    %1089 = vmatprep.subr.mxu0 0.0
    %1090 = vmatpush1.msra.mxu0 0.0
    %1091 = vmatprep.subr.mxu0 0.0
    %1092 = vmatpush1.msra.mxu0 0.0
    %1093 = vmatprep.subr.mxu0 0.0
    %1094 = vmatpush1.msra.mxu0 0.0
    %1095 = vmatprep.subr.mxu0 0.0
    %1096 = vmatpush1.msra.mxu0 0.0
    %1097 = vmatprep.subr.mxu0 0.0
    %1098 = vmatpush1.msra.mxu0 0.0
    %1099 = vmatprep.subr.mxu0 0.0
    %1100 = vmatpush1.msra.mxu0 0.0
    %1101 = vmatprep.subr.mxu0 0.0
    %1102 = vmatpush1.msra.mxu0 0.0
    %1103 = vmatprep.subr.mxu0 0.0
    %1104 = vmatpush1.msra.mxu0 0.0
    %1105 = vmatprep.subr.mxu0 0.0
    %1106 = vmatpush1.msra.mxu0 0.0
    %1107 = vmatprep.subr.mxu0 0.0
    %1108 = vmatpush1.msra.mxu0 0.0
    %1109 = vmatprep.subr.mxu0 0.0
    %1110 = vmatpush1.msra.mxu0 0.0
    %1111 = vmatprep.subr.mxu0 0.0
    %1112 = vmatpush1.msra.mxu0 0.0
    %1113 = vmatprep.subr.mxu0 0.0
    %1114 = vmatpush1.msra.mxu0 0.0
    %1115 = vmatprep.subr.mxu0 0.0
    %1116 = vmatpush1.msra.mxu0 0.0
    %1117 = vmatprep.subr.mxu0 0.0
    %1118 = vmatpush1.msra.mxu0 0.0
    %1119 = vmatprep.subr.mxu0 0.0
    %1120 = vmatpush1.msra.mxu0 0.0
    %1121 = vmatprep.mubr.f32.mxu0 0.0
    %1122 = vmatmul.mubr.f32.gmra.mrb[0].mxu0 %v712
    %v1123 = vpop.f32.mrb[0].mxu0
    %v1124 = vadd.f32 0.0, %v1123
    %v1125 = vpop.f32.mrb[0].mxu0
    %1126 = vmatprep.mubr.f32.mxu0 0.0
    %1127 = vmatmul.mubr.f32.gmra.mrb[0].mxu0 %v715
    %v1128 = vpop.f32.mrb[0].mxu0
    %v1129 = vadd.f32 0.0, %v1128
    %v1130 = vpop.f32.mrb[0].mxu0
    %1131 = vmatprep.mubr.f32.mxu0 0.0
    %1132 = vmatmul.mubr.f32.gmra.mrb[0].mxu0 %v718
    %v1133 = vpop.f32.mrb[0].mxu0
    %v1134 = vadd.f32 0.0, %v1133
    %v1135 = vpop.f32.mrb[0].mxu0
    %1136 = vmatprep.mubr.f32.mxu0 0.0
    %1137 = vmatmul.mubr.f32.gmra.mrb[0].mxu0 %v721
    %v1138 = vpop.f32.mrb[0].mxu0
    %v1139 = vadd.f32 0.0, %v1138
    %v1140 = vpop.f32.mrb[0].mxu0
    %1141 = vdwg.mxu0
    %v1143 = vsel %vm710, %v1124, 0
    %v1146 = vsel %vm710, %v1129, 0
    %v1149 = vsel %vm710, %v1134, 0
    %v1152 = vsel %vm710, %v1139, 0
    %1154 = vmatprep.subr.mxu0 0.0
    %1155 = vmatpush1.msra.mxu0 %v108
    %1156 = vmatprep.subr.mxu0 0.0
    %1157 = vmatpush1.msra.mxu0 0.0
    %1158 = vmatprep.subr.mxu0 0.0
    %1159 = vmatpush1.msra.mxu0 0.0
    %1160 = vmatprep.subr.mxu0 0.0
    %1161 = vmatpush1.msra.mxu0 0.0
    %1162 = vmatprep.subr.mxu0 0.0
    %1163 = vmatpush1.msra.mxu0 0.0
    %1164 = vmatprep.subr.mxu0 0.0
    %1165 = vmatpush1.msra.mxu0 0.0
    %1166 = vmatprep.subr.mxu0 0.0
    %1167 = vmatpush1.msra.mxu0 0.0
    %1168 = vmatprep.subr.mxu0 0.0
    %1169 = vmatpush1.msra.mxu0 0.0
    %1170 = vmatprep.subr.mxu0 0.0
    %1171 = vmatpush1.msra.mxu0 0.0
    %1172 = vmatprep.subr.mxu0 0.0
    %1173 = vmatpush1.msra.mxu0 0.0
    %1174 = vmatprep.subr.mxu0 0.0
    %1175 = vmatpush1.msra.mxu0 0.0
    %1176 = vmatprep.subr.mxu0 0.0
    %1177 = vmatpush1.msra.mxu0 0.0
    %1178 = vmatprep.subr.mxu0 0.0
    %1179 = vmatpush1.msra.mxu0 0.0
    %1180 = vmatprep.subr.mxu0 0.0
    %1181 = vmatpush1.msra.mxu0 0.0
    %1182 = vmatprep.subr.mxu0 0.0
    %1183 = vmatpush1.msra.mxu0 0.0
    %1184 = vmatprep.subr.mxu0 0.0
    %1185 = vmatpush1.msra.mxu0 0.0
    %1186 = vmatprep.subr.mxu0 0.0
    %1187 = vmatpush1.msra.mxu0 0.0
    %1188 = vmatprep.subr.mxu0 0.0
    %1189 = vmatpush1.msra.mxu0 0.0
    %1190 = vmatprep.subr.mxu0 0.0
    %1191 = vmatpush1.msra.mxu0 0.0
    %1192 = vmatprep.subr.mxu0 0.0
    %1193 = vmatpush1.msra.mxu0 0.0
    %1194 = vmatprep.subr.mxu0 0.0
    %1195 = vmatpush1.msra.mxu0 0.0
    %1196 = vmatprep.subr.mxu0 0.0
    %1197 = vmatpush1.msra.mxu0 0.0
    %1198 = vmatprep.subr.mxu0 0.0
    %1199 = vmatpush1.msra.mxu0 0.0
    %1200 = vmatprep.subr.mxu0 0.0
    %1201 = vmatpush1.msra.mxu0 0.0
    %1202 = vmatprep.subr.mxu0 0.0
    %1203 = vmatpush1.msra.mxu0 0.0
    %1204 = vmatprep.subr.mxu0 0.0
    %1205 = vmatpush1.msra.mxu0 0.0
    %1206 = vmatprep.subr.mxu0 0.0
    %1207 = vmatpush1.msra.mxu0 0.0
    %1208 = vmatprep.subr.mxu0 0.0
    %1209 = vmatpush1.msra.mxu0 0.0
    %1210 = vmatprep.subr.mxu0 0.0
    %1211 = vmatpush1.msra.mxu0 0.0
    %1212 = vmatprep.subr.mxu0 0.0
    %1213 = vmatpush1.msra.mxu0 0.0
    %1214 = vmatprep.subr.mxu0 0.0
    %1215 = vmatpush1.msra.mxu0 0.0
    %1216 = vmatprep.subr.mxu0 0.0
    %1217 = vmatpush1.msra.mxu0 0.0
    %1218 = vmatprep.mubr.f32.mxu0 0.0
    %1219 = vmatmul.mubr.f32.gmra.mrb[0].mxu0 %v1143
    %v1220 = vpop.f32.mrb[0].mxu0
    %v1221 = vadd.f32 0.0, %v1220
    %v1222 = vpop.f32.mrb[0].mxu0
    %1223 = vmatprep.mubr.f32.mxu0 0.0
    %1224 = vmatmul.mubr.f32.gmra.mrb[0].mxu0 %v1146
    %v1225 = vpop.f32.mrb[0].mxu0
    %v1226 = vadd.f32 0.0, %v1225
    %v1227 = vpop.f32.mrb[0].mxu0
    %1228 = vmatprep.mubr.f32.mxu0 0.0
    %1229 = vmatmul.mubr.f32.gmra.mrb[0].mxu0 %v1149
    %v1230 = vpop.f32.mrb[0].mxu0
    %v1231 = vadd.f32 0.0, %v1230
    %v1232 = vpop.f32.mrb[0].mxu0
    %1233 = vmatprep.mubr.f32.mxu0 0.0
    %1234 = vmatmul.mubr.f32.gmra.mrb[0].mxu0 %v1152
    %v1235 = vpop.f32.mrb[0].mxu0
    %v1236 = vadd.f32 0.0, %v1235
    %v1237 = vpop.f32.mrb[0].mxu0
    %1238 = vdwg.mxu0
    %v1239 = vmul.f32 %v1221, 0.001953125
    %v1240 = vmul.f32 %v1226, 0.001953125
    %v1241 = vmul.f32 %v1231, 0.001953125
    %v1242 = vmul.f32 %v1236, 0.001953125
    %v1243 = vadd.f32 %v1239, 1e-05
    %v1244 = vadd.f32 %v1240, 1e-05
    %v1245 = vadd.f32 %v1241, 1e-05
    %v1246 = vadd.f32 %v1242, 1e-05
    %v1247 = vrsqrt.pop %v1243
    %v1248 = vrsqrt.pop %v1244
    %v1249 = vrsqrt.pop %v1245
    %v1250 = vrsqrt.pop %v1246
    %v1251 = vmul.f32 %v909, %v1247
    %v1252 = vmul.f32 %v910, %v1248
    %v1253 = vmul.f32 %v911, %v1249
    %v1254 = vmul.f32 %v912, %v1250
    %v1255 = vlaneseq
    %v1256 = vshrl.u32 %v1255, 7
    %v1257 = vsub.s32 2, %v1256
    %v1258 = vrot.slane %v86, %v1257
    %v1259 = vmul.f32 %v1251, %v1258
    %v1260 = vmul.f32 %v1252, %v1258
    %v1261 = vmul.f32 %v1253, %v1258
    %v1262 = vmul.f32 %v1254, %v1258
    %v1263 = vlaneseq
    %v1264 = vshrl.u32 %v1263, 7
    %v1265 = vsub.s32 3, %v1264
    %v1266 = vrot.slane %v86, %v1265
    %v1267 = vadd.f32 %v1259, %v1266
    %v1268 = vadd.f32 %v1260, %v1266
    %v1269 = vadd.f32 %v1261, %v1266
    %v1270 = vadd.f32 %v1262, %v1266
    %v1271 = vrot.slane %v1267, 7
    %v1272 = vrot.slane %v1268, 7
    %v1273 = vrot.slane %v1269, 7
    %v1274 = vrot.slane %v1270, 7
    %v1275 = vsel %vm194, %v1273, %v1274
    %v1276 = vsel %vm194, %v1272, %v1273
    %v1277 = vsel %vm194, %v1271, %v1272
    %v1278 = vsel %vm194, %v1274, %v1271
    %v1279 = vsel %vm203, %v1278, 0.0
    %v1280 = vsel %vm204, %v1277, 0.0
    %v1281 = vsel %vm205, %v1276, 0.0
    %v1282 = vsel %vm206, %v1275, 0.0
    %v1283 = vld [vmem:[%s2] sm:$0xff]
    %v1284 = vld [vmem:[%s2 + $0x8] sm:$0xff]
    %v1285 = vld [vmem:[%s2 + $0x10] sm:$0xff]
    %v1286 = vld [vmem:[%s2 + $0x18] sm:$0xff]
    %v1287 = vld [vmem:[%s2 + $0x20] sm:$0xff]
    %v1288 = vld [vmem:[%s2 + $0x28] sm:$0xff]
    %v1289 = vld [vmem:[%s2 + $0x30] sm:$0xff]
    %v1290 = vld [vmem:[%s2 + $0x38] sm:$0xff]
    %v1291 = vld [vmem:[%s2 + $0x40] sm:$0xff]
    %v1292 = vld [vmem:[%s2 + $0x48] sm:$0xff]
    %v1293 = vld [vmem:[%s2 + $0x50] sm:$0xff]
    %v1294 = vld [vmem:[%s2 + $0x58] sm:$0xff]
    %v1295 = vld [vmem:[%s2 + $0x60] sm:$0xff]
    %v1296 = vld [vmem:[%s2 + $0x68] sm:$0xff]
    %v1297 = vld [vmem:[%s2 + $0x70] sm:$0xff]
    %v1298 = vld [vmem:[%s2 + $0x78] sm:$0xff]
    %s1299 = scalar_lea.vmem %s2, 128
    %v1300 = vld [vmem:[%s1299] sm:$0xff]
    %v1301 = vld [vmem:[%s1299 + $0x8] sm:$0xff]
    %v1302 = vld [vmem:[%s1299 + $0x10] sm:$0xff]
    %v1303 = vld [vmem:[%s1299 + $0x18] sm:$0xff]
    %v1304 = vld [vmem:[%s1299 + $0x20] sm:$0xff]
    %v1305 = vld [vmem:[%s1299 + $0x28] sm:$0xff]
    %v1306 = vld [vmem:[%s1299 + $0x30] sm:$0xff]
    %v1307 = vld [vmem:[%s1299 + $0x38] sm:$0xff]
    %v1308 = vld [vmem:[%s1299 + $0x40] sm:$0xff]
    %v1309 = vld [vmem:[%s1299 + $0x48] sm:$0xff]
    %v1310 = vld [vmem:[%s1299 + $0x50] sm:$0xff]
    %v1311 = vld [vmem:[%s1299 + $0x58] sm:$0xff]
    %v1312 = vld [vmem:[%s1299 + $0x60] sm:$0xff]
    %v1313 = vld [vmem:[%s1299 + $0x68] sm:$0xff]
    %v1314 = vld [vmem:[%s1299 + $0x70] sm:$0xff]
    %v1315 = vld [vmem:[%s1299 + $0x78] sm:$0xff]
    %1316 = vmatprep.subr.mxu0 0.0
    %1317 = vmatpush1.msra.mxu0 %v1300
    %1318 = vmatprep.subr.mxu0 0.0
    %1319 = vmatpush1.msra.mxu0 %v1301
    %1320 = vmatprep.subr.mxu0 0.0
    %1321 = vmatpush1.msra.mxu0 %v1302
    %1322 = vmatprep.subr.mxu0 0.0
    %1323 = vmatpush1.msra.mxu0 %v1303
    %1324 = vmatprep.subr.mxu0 0.0
    %1325 = vmatpush1.msra.mxu0 %v1304
    %1326 = vmatprep.subr.mxu0 0.0
    %1327 = vmatpush1.msra.mxu0 %v1305
    %1328 = vmatprep.subr.mxu0 0.0
    %1329 = vmatpush1.msra.mxu0 %v1306
    %1330 = vmatprep.subr.mxu0 0.0
    %1331 = vmatpush1.msra.mxu0 %v1307
    %1332 = vmatprep.subr.mxu0 0.0
    %1333 = vmatpush1.msra.mxu0 %v1308
    %1334 = vmatprep.subr.mxu0 0.0
    %1335 = vmatpush1.msra.mxu0 %v1309
    %1336 = vmatprep.subr.mxu0 0.0
    %1337 = vmatpush1.msra.mxu0 %v1310
    %1338 = vmatprep.subr.mxu0 0.0
    %1339 = vmatpush1.msra.mxu0 %v1311
    %1340 = vmatprep.subr.mxu0 0.0
    %1341 = vmatpush1.msra.mxu0 %v1312
    %1342 = vmatprep.subr.mxu0 0.0
    %1343 = vmatpush1.msra.mxu0 %v1313
    %1344 = vmatprep.subr.mxu0 0.0
    %1345 = vmatpush1.msra.mxu0 %v1314
    %1346 = vmatprep.subr.mxu0 0.0
    %1347 = vmatpush1.msra.mxu0 %v1315
    %1348 = vmatprep.subr.mxu0 0.0
    %1349 = vmatpush1.msra.mxu0 0.0
    %1350 = vmatprep.subr.mxu0 0.0
    %1351 = vmatpush1.msra.mxu0 0.0
    %1352 = vmatprep.subr.mxu0 0.0
    %1353 = vmatpush1.msra.mxu0 0.0
    %1354 = vmatprep.subr.mxu0 0.0
    %1355 = vmatpush1.msra.mxu0 0.0
    %1356 = vmatprep.subr.mxu0 0.0
    %1357 = vmatpush1.msra.mxu0 0.0
    %1358 = vmatprep.subr.mxu0 0.0
    %1359 = vmatpush1.msra.mxu0 0.0
    %1360 = vmatprep.subr.mxu0 0.0
    %1361 = vmatpush1.msra.mxu0 0.0
    %1362 = vmatprep.subr.mxu0 0.0
    %1363 = vmatpush1.msra.mxu0 0.0
    %1364 = vmatprep.subr.mxu0 0.0
    %1365 = vmatpush1.msra.mxu0 0.0
    %1366 = vmatprep.subr.mxu0 0.0
    %1367 = vmatpush1.msra.mxu0 0.0
    %1368 = vmatprep.subr.mxu0 0.0
    %1369 = vmatpush1.msra.mxu0 0.0
    %1370 = vmatprep.subr.mxu0 0.0
    %1371 = vmatpush1.msra.mxu0 0.0
    %1372 = vmatprep.subr.mxu0 0.0
    %1373 = vmatpush1.msra.mxu0 0.0
    %1374 = vmatprep.subr.mxu0 0.0
    %1375 = vmatpush1.msra.mxu0 0.0
    %1376 = vmatprep.subr.mxu0 0.0
    %1377 = vmatpush1.msra.mxu0 0.0
    %1378 = vmatprep.subr.mxu0 0.0
    %1379 = vmatpush1.msra.mxu0 0.0
    %1380 = vmatprep.mubr.f32.mxu0 0.0
    %1381 = vmatmul.mubr.f32.gmra.mrb[0].mxu0 %v1267
    %v1382 = vpop.f32.mrb[0].mxu0
    %v1383 = vadd.f32 0.0, %v1382
    %v1384 = vpop.f32.mrb[0].mxu0
    %1385 = vmatprep.mubr.f32.mxu0 0.0
    %1386 = vmatmul.mubr.f32.gmra.mrb[0].mxu0 %v1268
    %v1387 = vpop.f32.mrb[0].mxu0
    %v1388 = vadd.f32 0.0, %v1387
    %v1389 = vpop.f32.mrb[0].mxu0
    %1390 = vmatprep.mubr.f32.mxu0 0.0
    %1391 = vmatmul.mubr.f32.gmra.mrb[0].mxu0 %v1269
    %v1392 = vpop.f32.mrb[0].mxu0
    %v1393 = vadd.f32 0.0, %v1392
    %v1394 = vpop.f32.mrb[0].mxu0
    %1395 = vmatprep.mubr.f32.mxu0 0.0
    %1396 = vmatmul.mubr.f32.gmra.mrb[0].mxu0 %v1270
    %v1397 = vpop.f32.mrb[0].mxu0
    %v1398 = vadd.f32 0.0, %v1397
    %v1399 = vpop.f32.mrb[0].mxu0
    %1400 = vdwg.mxu0
    %1401 = vmatprep.subr.mxu0 0.0
    %1402 = vmatpush1.msra.mxu0 %v1283
    %1403 = vmatprep.subr.mxu0 0.0
    %1404 = vmatpush1.msra.mxu0 %v1284
    %1405 = vmatprep.subr.mxu0 0.0
    %1406 = vmatpush1.msra.mxu0 %v1285
    %1407 = vmatprep.subr.mxu0 0.0
    %1408 = vmatpush1.msra.mxu0 %v1286
    %1409 = vmatprep.subr.mxu0 0.0
    %1410 = vmatpush1.msra.mxu0 %v1287
    %1411 = vmatprep.subr.mxu0 0.0
    %1412 = vmatpush1.msra.mxu0 %v1288
    %1413 = vmatprep.subr.mxu0 0.0
    %1414 = vmatpush1.msra.mxu0 %v1289
    %1415 = vmatprep.subr.mxu0 0.0
    %1416 = vmatpush1.msra.mxu0 %v1290
    %1417 = vmatprep.subr.mxu0 0.0
    %1418 = vmatpush1.msra.mxu0 %v1291
    %1419 = vmatprep.subr.mxu0 0.0
    %1420 = vmatpush1.msra.mxu0 %v1292
    %1421 = vmatprep.subr.mxu0 0.0
    %1422 = vmatpush1.msra.mxu0 %v1293
    %1423 = vmatprep.subr.mxu0 0.0
    %1424 = vmatpush1.msra.mxu0 %v1294
    %1425 = vmatprep.subr.mxu0 0.0
    %1426 = vmatpush1.msra.mxu0 %v1295
    %1427 = vmatprep.subr.mxu0 0.0
    %1428 = vmatpush1.msra.mxu0 %v1296
    %1429 = vmatprep.subr.mxu0 0.0
    %1430 = vmatpush1.msra.mxu0 %v1297
    %1431 = vmatprep.subr.mxu0 0.0
    %1432 = vmatpush1.msra.mxu0 %v1298
    %1433 = vmatprep.subr.mxu0 0.0
    %1434 = vmatpush1.msra.mxu0 0.0
    %1435 = vmatprep.subr.mxu0 0.0
    %1436 = vmatpush1.msra.mxu0 0.0
    %1437 = vmatprep.subr.mxu0 0.0
    %1438 = vmatpush1.msra.mxu0 0.0
    %1439 = vmatprep.subr.mxu0 0.0
    %1440 = vmatpush1.msra.mxu0 0.0
    %1441 = vmatprep.subr.mxu0 0.0
    %1442 = vmatpush1.msra.mxu0 0.0
    %1443 = vmatprep.subr.mxu0 0.0
    %1444 = vmatpush1.msra.mxu0 0.0
    %1445 = vmatprep.subr.mxu0 0.0
    %1446 = vmatpush1.msra.mxu0 0.0
    %1447 = vmatprep.subr.mxu0 0.0
    %1448 = vmatpush1.msra.mxu0 0.0
    %1449 = vmatprep.subr.mxu0 0.0
    %1450 = vmatpush1.msra.mxu0 0.0
    %1451 = vmatprep.subr.mxu0 0.0
    %1452 = vmatpush1.msra.mxu0 0.0
    %1453 = vmatprep.subr.mxu0 0.0
    %1454 = vmatpush1.msra.mxu0 0.0
    %1455 = vmatprep.subr.mxu0 0.0
    %1456 = vmatpush1.msra.mxu0 0.0
    %1457 = vmatprep.subr.mxu0 0.0
    %1458 = vmatpush1.msra.mxu0 0.0
    %1459 = vmatprep.subr.mxu0 0.0
    %1460 = vmatpush1.msra.mxu0 0.0
    %1461 = vmatprep.subr.mxu0 0.0
    %1462 = vmatpush1.msra.mxu0 0.0
    %1463 = vmatprep.subr.mxu0 0.0
    %1464 = vmatpush1.msra.mxu0 0.0
    %1465 = vmatprep.mubr.f32.mxu0 0.0
    %1466 = vmatmul.mubr.f32.gmra.mrb[0].mxu0 %v1279
    %v1467 = vpop.f32.mrb[0].mxu0
    %v1468 = vadd.f32 %v1383, %v1467
    %v1469 = vpop.f32.mrb[0].mxu0
    %1470 = vmatprep.mubr.f32.mxu0 0.0
    %1471 = vmatmul.mubr.f32.gmra.mrb[0].mxu0 %v1280
    %v1472 = vpop.f32.mrb[0].mxu0
    %v1473 = vadd.f32 %v1388, %v1472
    %v1474 = vpop.f32.mrb[0].mxu0
    %1475 = vmatprep.mubr.f32.mxu0 0.0
    %1476 = vmatmul.mubr.f32.gmra.mrb[0].mxu0 %v1281
    %v1477 = vpop.f32.mrb[0].mxu0
    %v1478 = vadd.f32 %v1393, %v1477
    %v1479 = vpop.f32.mrb[0].mxu0
    %1480 = vmatprep.mubr.f32.mxu0 0.0
    %1481 = vmatmul.mubr.f32.gmra.mrb[0].mxu0 %v1282
    %v1482 = vpop.f32.mrb[0].mxu0
    %v1483 = vadd.f32 %v1398, %v1482
    %v1484 = vpop.f32.mrb[0].mxu0
    %1485 = vdwg.mxu0
    %v1486 = vrot.slane %v1267, 1
    %v1487 = vrot.slane %v1268, 1
    %v1488 = vrot.slane %v1269, 1
    %v1489 = vrot.slane %v1270, 1
    %v1490 = vsel %vm427, %v1488, %v1489
    %v1491 = vsel %vm427, %v1487, %v1488
    %v1492 = vsel %vm427, %v1486, %v1487
    %v1493 = vsel %vm427, %v1489, %v1486
    %v1494 = vsel %vm436, %v1492, 0.0
    %v1495 = vsel %vm437, %v1491, 0.0
    %v1496 = vsel %vm438, %v1490, 0.0
    %v1497 = vsel %vm439, %v1493, 0.0
    %s1498 = scalar_lea.vmem %s2, 256
    %v1499 = vld [vmem:[%s1498] sm:$0xff]
    %v1500 = vld [vmem:[%s1498 + $0x8] sm:$0xff]
    %v1501 = vld [vmem:[%s1498 + $0x10] sm:$0xff]
    %v1502 = vld [vmem:[%s1498 + $0x18] sm:$0xff]
    %v1503 = vld [vmem:[%s1498 + $0x20] sm:$0xff]
    %v1504 = vld [vmem:[%s1498 + $0x28] sm:$0xff]
    %v1505 = vld [vmem:[%s1498 + $0x30] sm:$0xff]
    %v1506 = vld [vmem:[%s1498 + $0x38] sm:$0xff]
    %v1507 = vld [vmem:[%s1498 + $0x40] sm:$0xff]
    %v1508 = vld [vmem:[%s1498 + $0x48] sm:$0xff]
    %v1509 = vld [vmem:[%s1498 + $0x50] sm:$0xff]
    %v1510 = vld [vmem:[%s1498 + $0x58] sm:$0xff]
    %v1511 = vld [vmem:[%s1498 + $0x60] sm:$0xff]
    %v1512 = vld [vmem:[%s1498 + $0x68] sm:$0xff]
    %v1513 = vld [vmem:[%s1498 + $0x70] sm:$0xff]
    %v1514 = vld [vmem:[%s1498 + $0x78] sm:$0xff]
    %1515 = vmatprep.subr.mxu0 0.0
    %1516 = vmatpush1.msra.mxu0 %v1499
    %1517 = vmatprep.subr.mxu0 0.0
    %1518 = vmatpush1.msra.mxu0 %v1500
    %1519 = vmatprep.subr.mxu0 0.0
    %1520 = vmatpush1.msra.mxu0 %v1501
    %1521 = vmatprep.subr.mxu0 0.0
    %1522 = vmatpush1.msra.mxu0 %v1502
    %1523 = vmatprep.subr.mxu0 0.0
    %1524 = vmatpush1.msra.mxu0 %v1503
    %1525 = vmatprep.subr.mxu0 0.0
    %1526 = vmatpush1.msra.mxu0 %v1504
    %1527 = vmatprep.subr.mxu0 0.0
    %1528 = vmatpush1.msra.mxu0 %v1505
    %1529 = vmatprep.subr.mxu0 0.0
    %1530 = vmatpush1.msra.mxu0 %v1506
    %1531 = vmatprep.subr.mxu0 0.0
    %1532 = vmatpush1.msra.mxu0 %v1507
    %1533 = vmatprep.subr.mxu0 0.0
    %1534 = vmatpush1.msra.mxu0 %v1508
    %1535 = vmatprep.subr.mxu0 0.0
    %1536 = vmatpush1.msra.mxu0 %v1509
    %1537 = vmatprep.subr.mxu0 0.0
    %1538 = vmatpush1.msra.mxu0 %v1510
    %1539 = vmatprep.subr.mxu0 0.0
    %1540 = vmatpush1.msra.mxu0 %v1511
    %1541 = vmatprep.subr.mxu0 0.0
    %1542 = vmatpush1.msra.mxu0 %v1512
    %1543 = vmatprep.subr.mxu0 0.0
    %1544 = vmatpush1.msra.mxu0 %v1513
    %1545 = vmatprep.subr.mxu0 0.0
    %1546 = vmatpush1.msra.mxu0 %v1514
    %1547 = vmatprep.subr.mxu0 0.0
    %1548 = vmatpush1.msra.mxu0 0.0
    %1549 = vmatprep.subr.mxu0 0.0
    %1550 = vmatpush1.msra.mxu0 0.0
    %1551 = vmatprep.subr.mxu0 0.0
    %1552 = vmatpush1.msra.mxu0 0.0
    %1553 = vmatprep.subr.mxu0 0.0
    %1554 = vmatpush1.msra.mxu0 0.0
    %1555 = vmatprep.subr.mxu0 0.0
    %1556 = vmatpush1.msra.mxu0 0.0
    %1557 = vmatprep.subr.mxu0 0.0
    %1558 = vmatpush1.msra.mxu0 0.0
    %1559 = vmatprep.subr.mxu0 0.0
    %1560 = vmatpush1.msra.mxu0 0.0
    %1561 = vmatprep.subr.mxu0 0.0
    %1562 = vmatpush1.msra.mxu0 0.0
    %1563 = vmatprep.subr.mxu0 0.0
    %1564 = vmatpush1.msra.mxu0 0.0
    %1565 = vmatprep.subr.mxu0 0.0
    %1566 = vmatpush1.msra.mxu0 0.0
    %1567 = vmatprep.subr.mxu0 0.0
    %1568 = vmatpush1.msra.mxu0 0.0
    %1569 = vmatprep.subr.mxu0 0.0
    %1570 = vmatpush1.msra.mxu0 0.0
    %1571 = vmatprep.subr.mxu0 0.0
    %1572 = vmatpush1.msra.mxu0 0.0
    %1573 = vmatprep.subr.mxu0 0.0
    %1574 = vmatpush1.msra.mxu0 0.0
    %1575 = vmatprep.subr.mxu0 0.0
    %1576 = vmatpush1.msra.mxu0 0.0
    %1577 = vmatprep.subr.mxu0 0.0
    %1578 = vmatpush1.msra.mxu0 0.0
    %1579 = vmatprep.mubr.f32.mxu0 0.0
    %1580 = vmatmul.mubr.f32.gmra.mrb[0].mxu0 %v1494
    %v1581 = vpop.f32.mrb[0].mxu0
    %v1582 = vadd.f32 0.0, %v1581
    %v1583 = vpop.f32.mrb[0].mxu0
    %1584 = vmatprep.mubr.f32.mxu0 0.0
    %1585 = vmatmul.mubr.f32.gmra.mrb[0].mxu0 %v1495
    %v1586 = vpop.f32.mrb[0].mxu0
    %v1587 = vadd.f32 0.0, %v1586
    %v1588 = vpop.f32.mrb[0].mxu0
    %1589 = vmatprep.mubr.f32.mxu0 0.0
    %1590 = vmatmul.mubr.f32.gmra.mrb[0].mxu0 %v1496
    %v1591 = vpop.f32.mrb[0].mxu0
    %v1592 = vadd.f32 0.0, %v1591
    %v1593 = vpop.f32.mrb[0].mxu0
    %1594 = vmatprep.mubr.f32.mxu0 0.0
    %1595 = vmatmul.mubr.f32.gmra.mrb[0].mxu0 %v1497
    %v1596 = vpop.f32.mrb[0].mxu0
    %v1597 = vadd.f32 0.0, %v1596
    %v1598 = vpop.f32.mrb[0].mxu0
    %1599 = vdwg.mxu0
    %v1600 = vadd.f32 %v1468, %v1582
    %v1601 = vadd.f32 %v1473, %v1587
    %v1602 = vadd.f32 %v1478, %v1592
    %v1603 = vadd.f32 %v1483, %v1597
    %v1604 = vlaneseq
    %v1605 = vshrl.u32 %v1604, 7
    %v1606 = vsub.s32 1, %v1605
    %v1607 = vrot.slane %v86, %v1606
    %v1608 = vadd.f32 %v1600, %v1607
    %v1609 = vadd.f32 %v1601, %v1607
    %v1610 = vadd.f32 %v1602, %v1607
    %v1611 = vadd.f32 %v1603, %v1607
    %v1612 = vmax.f32 %v1608, 0.0
    %v1613 = vmax.f32 %v1609, 0.0
    %v1614 = vmax.f32 %v1610, 0.0
    %v1615 = vmax.f32 %v1611, 0.0
    %1616 = vmatprep.subr.mxu0 0.0
    %1617 = vmatpush1.msra.mxu0 %v1612
    %1618 = vmatprep.subr.mxu0 0.0
    %1619 = vmatpush1.msra.mxu0 %v1613
    %1620 = vmatprep.subr.mxu0 0.0
    %1621 = vmatpush1.msra.mxu0 %v1614
    %1622 = vmatprep.subr.mxu0 0.0
    %1623 = vmatpush1.msra.mxu0 %v1615
    %1624 = vmatprep.subr.mxu0 0.0
    %1625 = vmatpush1.msra.mxu0 0.0
    %1626 = vmatprep.subr.mxu0 0.0
    %1627 = vmatpush1.msra.mxu0 0.0
    %1628 = vmatprep.subr.mxu0 0.0
    %1629 = vmatpush1.msra.mxu0 0.0
    %1630 = vmatprep.subr.mxu0 0.0
    %1631 = vmatpush1.msra.mxu0 0.0
    %1632 = vmatprep.subr.mxu0 0.0
    %1633 = vmatpush1.msra.mxu0 0.0
    %1634 = vmatprep.subr.mxu0 0.0
    %1635 = vmatpush1.msra.mxu0 0.0
    %1636 = vmatprep.subr.mxu0 0.0
    %1637 = vmatpush1.msra.mxu0 0.0
    %1638 = vmatprep.subr.mxu0 0.0
    %1639 = vmatpush1.msra.mxu0 0.0
    %1640 = vmatprep.subr.mxu0 0.0
    %1641 = vmatpush1.msra.mxu0 0.0
    %1642 = vmatprep.subr.mxu0 0.0
    %1643 = vmatpush1.msra.mxu0 0.0
    %1644 = vmatprep.subr.mxu0 0.0
    %1645 = vmatpush1.msra.mxu0 0.0
    %1646 = vmatprep.subr.mxu0 0.0
    %1647 = vmatpush1.msra.mxu0 0.0
    %1648 = vmatprep.subr.mxu0 0.0
    %1649 = vmatpush1.msra.mxu0 0.0
    %1650 = vmatprep.subr.mxu0 0.0
    %1651 = vmatpush1.msra.mxu0 0.0
    %1652 = vmatprep.subr.mxu0 0.0
    %1653 = vmatpush1.msra.mxu0 0.0
    %1654 = vmatprep.subr.mxu0 0.0
    %1655 = vmatpush1.msra.mxu0 0.0
    %1656 = vmatprep.subr.mxu0 0.0
    %1657 = vmatpush1.msra.mxu0 0.0
    %1658 = vmatprep.subr.mxu0 0.0
    %1659 = vmatpush1.msra.mxu0 0.0
    %1660 = vmatprep.subr.mxu0 0.0
    %1661 = vmatpush1.msra.mxu0 0.0
    %1662 = vmatprep.subr.mxu0 0.0
    %1663 = vmatpush1.msra.mxu0 0.0
    %1664 = vmatprep.subr.mxu0 0.0
    %1665 = vmatpush1.msra.mxu0 0.0
    %1666 = vmatprep.subr.mxu0 0.0
    %1667 = vmatpush1.msra.mxu0 0.0
    %1668 = vmatprep.subr.mxu0 0.0
    %1669 = vmatpush1.msra.mxu0 0.0
    %1670 = vmatprep.subr.mxu0 0.0
    %1671 = vmatpush1.msra.mxu0 0.0
    %1672 = vmatprep.subr.mxu0 0.0
    %1673 = vmatpush1.msra.mxu0 0.0
    %1674 = vmatprep.subr.mxu0 0.0
    %1675 = vmatpush1.msra.mxu0 0.0
    %1676 = vmatprep.subr.mxu0 0.0
    %1677 = vmatpush1.msra.mxu0 0.0
    %1678 = vmatprep.subr.mxu0 0.0
    %1679 = vmatpush1.msra.mxu0 0.0
    %1680 = vmatprep.mubr.f32.mxu0 0.0
    %1681 = vmatmul.mubr.f32.gmra.mrb[0].mxu0 %v568
    %v1682 = vpop.f32.mrb[0].mxu0
    %v1683 = vadd.f32 0.0, %v1682
    %v1684 = vpop.f32.mrb[0].mxu0
    %1685 = vdwg.mxu0
    %1686 = vmatprep.subr.mxu0 0.0
    %1687 = vmatpush1.msra.mxu0 %v92
    %1688 = vmatprep.subr.mxu0 0.0
    %1689 = vmatpush1.msra.mxu0 %v93
    %1690 = vmatprep.subr.mxu0 0.0
    %1691 = vmatpush1.msra.mxu0 %v94
    %1692 = vmatprep.subr.mxu0 0.0
    %1693 = vmatpush1.msra.mxu0 %v95
    %1694 = vmatprep.subr.mxu0 0.0
    %1695 = vmatpush1.msra.mxu0 %v96
    %1696 = vmatprep.subr.mxu0 0.0
    %1697 = vmatpush1.msra.mxu0 %v97
    %1698 = vmatprep.subr.mxu0 0.0
    %1699 = vmatpush1.msra.mxu0 %v98
    %1700 = vmatprep.subr.mxu0 0.0
    %1701 = vmatpush1.msra.mxu0 %v99
    %1702 = vmatprep.subr.mxu0 0.0
    %1703 = vmatpush1.msra.mxu0 %v100
    %1704 = vmatprep.subr.mxu0 0.0
    %1705 = vmatpush1.msra.mxu0 %v101
    %1706 = vmatprep.subr.mxu0 0.0
    %1707 = vmatpush1.msra.mxu0 %v102
    %1708 = vmatprep.subr.mxu0 0.0
    %1709 = vmatpush1.msra.mxu0 %v103
    %1710 = vmatprep.subr.mxu0 0.0
    %1711 = vmatpush1.msra.mxu0 %v104
    %1712 = vmatprep.subr.mxu0 0.0
    %1713 = vmatpush1.msra.mxu0 %v105
    %1714 = vmatprep.subr.mxu0 0.0
    %1715 = vmatpush1.msra.mxu0 %v106
    %1716 = vmatprep.subr.mxu0 0.0
    %1717 = vmatpush1.msra.mxu0 %v107
    %1718 = vmatprep.subr.mxu0 0.0
    %1719 = vmatpush1.msra.mxu0 0.0
    %1720 = vmatprep.subr.mxu0 0.0
    %1721 = vmatpush1.msra.mxu0 0.0
    %1722 = vmatprep.subr.mxu0 0.0
    %1723 = vmatpush1.msra.mxu0 0.0
    %1724 = vmatprep.subr.mxu0 0.0
    %1725 = vmatpush1.msra.mxu0 0.0
    %1726 = vmatprep.subr.mxu0 0.0
    %1727 = vmatpush1.msra.mxu0 0.0
    %1728 = vmatprep.subr.mxu0 0.0
    %1729 = vmatpush1.msra.mxu0 0.0
    %1730 = vmatprep.subr.mxu0 0.0
    %1731 = vmatpush1.msra.mxu0 0.0
    %1732 = vmatprep.subr.mxu0 0.0
    %1733 = vmatpush1.msra.mxu0 0.0
    %1734 = vmatprep.subr.mxu0 0.0
    %1735 = vmatpush1.msra.mxu0 0.0
    %1736 = vmatprep.subr.mxu0 0.0
    %1737 = vmatpush1.msra.mxu0 0.0
    %1738 = vmatprep.subr.mxu0 0.0
    %1739 = vmatpush1.msra.mxu0 0.0
    %1740 = vmatprep.subr.mxu0 0.0
    %1741 = vmatpush1.msra.mxu0 0.0
    %1742 = vmatprep.subr.mxu0 0.0
    %1743 = vmatpush1.msra.mxu0 0.0
    %1744 = vmatprep.subr.mxu0 0.0
    %1745 = vmatpush1.msra.mxu0 0.0
    %1746 = vmatprep.subr.mxu0 0.0
    %1747 = vmatpush1.msra.mxu0 0.0
    %1748 = vmatprep.subr.mxu0 0.0
    %1749 = vmatpush1.msra.mxu0 0.0
    %1750 = vmatprep.mubr.f32.mxu0 0.0
    %1751 = vmatmul.mubr.f32.gmra.mrb[0].mxu0 %v1683
    %v1752 = vpop.f32.mrb[0].mxu0
    %v1753 = vadd.f32 0.0, %v1752
    %v1754 = vpop.f32.mrb[0].mxu0
    %1755 = vdwg.mxu0
    %1756 = vmatprep.subr.mxu0 0.0
    %1757 = vmatpush1.msra.mxu0 %v1753
    %1758 = vmatprep.subr.mxu0 0.0
    %1759 = vmatpush1.msra.mxu0 0.0
    %1760 = vmatprep.subr.mxu0 0.0
    %1761 = vmatpush1.msra.mxu0 0.0
    %1762 = vmatprep.subr.mxu0 0.0
    %1763 = vmatpush1.msra.mxu0 0.0
    %1764 = vmatprep.subr.mxu0 0.0
    %1765 = vmatpush1.msra.mxu0 0.0
    %1766 = vmatprep.subr.mxu0 0.0
    %1767 = vmatpush1.msra.mxu0 0.0
    %1768 = vmatprep.subr.mxu0 0.0
    %1769 = vmatpush1.msra.mxu0 0.0
    %1770 = vmatprep.subr.mxu0 0.0
    %1771 = vmatpush1.msra.mxu0 0.0
    %1772 = vmatprep.subr.mxu0 0.0
    %1773 = vmatpush1.msra.mxu0 0.0
    %1774 = vmatprep.subr.mxu0 0.0
    %1775 = vmatpush1.msra.mxu0 0.0
    %1776 = vmatprep.subr.mxu0 0.0
    %1777 = vmatpush1.msra.mxu0 0.0
    %1778 = vmatprep.subr.mxu0 0.0
    %1779 = vmatpush1.msra.mxu0 0.0
    %1780 = vmatprep.subr.mxu0 0.0
    %1781 = vmatpush1.msra.mxu0 0.0
    %1782 = vmatprep.subr.mxu0 0.0
    %1783 = vmatpush1.msra.mxu0 0.0
    %1784 = vmatprep.subr.mxu0 0.0
    %1785 = vmatpush1.msra.mxu0 0.0
    %1786 = vmatprep.subr.mxu0 0.0
    %1787 = vmatpush1.msra.mxu0 0.0
    %1788 = vmatprep.subr.mxu0 0.0
    %1789 = vmatpush1.msra.mxu0 0.0
    %1790 = vmatprep.subr.mxu0 0.0
    %1791 = vmatpush1.msra.mxu0 0.0
    %1792 = vmatprep.subr.mxu0 0.0
    %1793 = vmatpush1.msra.mxu0 0.0
    %1794 = vmatprep.subr.mxu0 0.0
    %1795 = vmatpush1.msra.mxu0 0.0
    %1796 = vmatprep.subr.mxu0 0.0
    %1797 = vmatpush1.msra.mxu0 0.0
    %1798 = vmatprep.subr.mxu0 0.0
    %1799 = vmatpush1.msra.mxu0 0.0
    %1800 = vmatprep.subr.mxu0 0.0
    %1801 = vmatpush1.msra.mxu0 0.0
    %1802 = vmatprep.subr.mxu0 0.0
    %1803 = vmatpush1.msra.mxu0 0.0
    %1804 = vmatprep.subr.mxu0 0.0
    %1805 = vmatpush1.msra.mxu0 0.0
    %1806 = vmatprep.subr.mxu0 0.0
    %1807 = vmatpush1.msra.mxu0 0.0
    %1808 = vmatprep.subr.mxu0 0.0
    %1809 = vmatpush1.msra.mxu0 0.0
    %1810 = vmatprep.subr.mxu0 0.0
    %1811 = vmatpush1.msra.mxu0 0.0
    %1812 = vmatprep.subr.mxu0 0.0
    %1813 = vmatpush1.msra.mxu0 0.0
    %1814 = vmatprep.subr.mxu0 0.0
    %1815 = vmatpush1.msra.mxu0 0.0
    %1816 = vmatprep.subr.mxu0 0.0
    %1817 = vmatpush1.msra.mxu0 0.0
    %1818 = vmatprep.subr.mxu0 0.0
    %1819 = vmatpush1.msra.mxu0 0.0
    %1820 = vmatprep.mubr.f32.mxu0 0.0
    %1821 = vmatmul.mubr.f32.gmra.mrb[0].mxu0 %v712
    %v1822 = vpop.f32.mrb[0].mxu0
    %v1823 = vadd.f32 0.0, %v1822
    %v1824 = vpop.f32.mrb[0].mxu0
    %1825 = vmatprep.mubr.f32.mxu0 0.0
    %1826 = vmatmul.mubr.f32.gmra.mrb[0].mxu0 %v715
    %v1827 = vpop.f32.mrb[0].mxu0
    %v1828 = vadd.f32 0.0, %v1827
    %v1829 = vpop.f32.mrb[0].mxu0
    %1830 = vmatprep.mubr.f32.mxu0 0.0
    %1831 = vmatmul.mubr.f32.gmra.mrb[0].mxu0 %v718
    %v1832 = vpop.f32.mrb[0].mxu0
    %v1833 = vadd.f32 0.0, %v1832
    %v1834 = vpop.f32.mrb[0].mxu0
    %1835 = vmatprep.mubr.f32.mxu0 0.0
    %1836 = vmatmul.mubr.f32.gmra.mrb[0].mxu0 %v721
    %v1837 = vpop.f32.mrb[0].mxu0
    %v1838 = vadd.f32 0.0, %v1837
    %v1839 = vpop.f32.mrb[0].mxu0
    %1840 = vdwg.mxu0
    %v1842 = vsel %vm710, %v1823, 0
    %v1845 = vsel %vm710, %v1828, 0
    %v1848 = vsel %vm710, %v1833, 0
    %v1851 = vsel %vm710, %v1838, 0
    %1853 = vmatprep.subr.mxu0 0.0
    %1854 = vmatpush1.msra.mxu0 %v108
    %1855 = vmatprep.subr.mxu0 0.0
    %1856 = vmatpush1.msra.mxu0 0.0
    %1857 = vmatprep.subr.mxu0 0.0
    %1858 = vmatpush1.msra.mxu0 0.0
    %1859 = vmatprep.subr.mxu0 0.0
    %1860 = vmatpush1.msra.mxu0 0.0
    %1861 = vmatprep.subr.mxu0 0.0
    %1862 = vmatpush1.msra.mxu0 0.0
    %1863 = vmatprep.subr.mxu0 0.0
    %1864 = vmatpush1.msra.mxu0 0.0
    %1865 = vmatprep.subr.mxu0 0.0
    %1866 = vmatpush1.msra.mxu0 0.0
    %1867 = vmatprep.subr.mxu0 0.0
    %1868 = vmatpush1.msra.mxu0 0.0
    %1869 = vmatprep.subr.mxu0 0.0
    %1870 = vmatpush1.msra.mxu0 0.0
    %1871 = vmatprep.subr.mxu0 0.0
    %1872 = vmatpush1.msra.mxu0 0.0
    %1873 = vmatprep.subr.mxu0 0.0
    %1874 = vmatpush1.msra.mxu0 0.0
    %1875 = vmatprep.subr.mxu0 0.0
    %1876 = vmatpush1.msra.mxu0 0.0
    %1877 = vmatprep.subr.mxu0 0.0
    %1878 = vmatpush1.msra.mxu0 0.0
    %1879 = vmatprep.subr.mxu0 0.0
    %1880 = vmatpush1.msra.mxu0 0.0
    %1881 = vmatprep.subr.mxu0 0.0
    %1882 = vmatpush1.msra.mxu0 0.0
    %1883 = vmatprep.subr.mxu0 0.0
    %1884 = vmatpush1.msra.mxu0 0.0
    %1885 = vmatprep.subr.mxu0 0.0
    %1886 = vmatpush1.msra.mxu0 0.0
    %1887 = vmatprep.subr.mxu0 0.0
    %1888 = vmatpush1.msra.mxu0 0.0
    %1889 = vmatprep.subr.mxu0 0.0
    %1890 = vmatpush1.msra.mxu0 0.0
    %1891 = vmatprep.subr.mxu0 0.0
    %1892 = vmatpush1.msra.mxu0 0.0
    %1893 = vmatprep.subr.mxu0 0.0
    %1894 = vmatpush1.msra.mxu0 0.0
    %1895 = vmatprep.subr.mxu0 0.0
    %1896 = vmatpush1.msra.mxu0 0.0
    %1897 = vmatprep.subr.mxu0 0.0
    %1898 = vmatpush1.msra.mxu0 0.0
    %1899 = vmatprep.subr.mxu0 0.0
    %1900 = vmatpush1.msra.mxu0 0.0
    %1901 = vmatprep.subr.mxu0 0.0
    %1902 = vmatpush1.msra.mxu0 0.0
    %1903 = vmatprep.subr.mxu0 0.0
    %1904 = vmatpush1.msra.mxu0 0.0
    %1905 = vmatprep.subr.mxu0 0.0
    %1906 = vmatpush1.msra.mxu0 0.0
    %1907 = vmatprep.subr.mxu0 0.0
    %1908 = vmatpush1.msra.mxu0 0.0
    %1909 = vmatprep.subr.mxu0 0.0
    %1910 = vmatpush1.msra.mxu0 0.0
    %1911 = vmatprep.subr.mxu0 0.0
    %1912 = vmatpush1.msra.mxu0 0.0
    %1913 = vmatprep.subr.mxu0 0.0
    %1914 = vmatpush1.msra.mxu0 0.0
    %1915 = vmatprep.subr.mxu0 0.0
    %1916 = vmatpush1.msra.mxu0 0.0
    %1917 = vmatprep.mubr.f32.mxu0 0.0
    %1918 = vmatmul.mubr.f32.gmra.mrb[0].mxu0 %v1842
    %v1919 = vpop.f32.mrb[0].mxu0
    %v1920 = vadd.f32 0.0, %v1919
    %v1921 = vpop.f32.mrb[0].mxu0
    %1922 = vmatprep.mubr.f32.mxu0 0.0
    %1923 = vmatmul.mubr.f32.gmra.mrb[0].mxu0 %v1845
    %v1924 = vpop.f32.mrb[0].mxu0
    %v1925 = vadd.f32 0.0, %v1924
    %v1926 = vpop.f32.mrb[0].mxu0
    %1927 = vmatprep.mubr.f32.mxu0 0.0
    %1928 = vmatmul.mubr.f32.gmra.mrb[0].mxu0 %v1848
    %v1929 = vpop.f32.mrb[0].mxu0
    %v1930 = vadd.f32 0.0, %v1929
    %v1931 = vpop.f32.mrb[0].mxu0
    %1932 = vmatprep.mubr.f32.mxu0 0.0
    %1933 = vmatmul.mubr.f32.gmra.mrb[0].mxu0 %v1851
    %v1934 = vpop.f32.mrb[0].mxu0
    %v1935 = vadd.f32 0.0, %v1934
    %v1936 = vpop.f32.mrb[0].mxu0
    %1937 = vdwg.mxu0
    %v1938 = vmul.f32 %v1920, 0.001953125
    %v1939 = vmul.f32 %v1925, 0.001953125
    %v1940 = vmul.f32 %v1930, 0.001953125
    %v1941 = vmul.f32 %v1935, 0.001953125
    %v1942 = vsub.f32 %v1612, %v1938
    %v1943 = vsub.f32 %v1613, %v1939
    %v1944 = vsub.f32 %v1614, %v1940
    %v1945 = vsub.f32 %v1615, %v1941
    %v1946 = vmul.f32 %v1942, %v1942
    %v1947 = vmul.f32 %v1943, %v1943
    %v1948 = vmul.f32 %v1944, %v1944
    %v1949 = vmul.f32 %v1945, %v1945
    %1950 = vmatprep.subr.mxu0 0.0
    %1951 = vmatpush1.msra.mxu0 %v1946
    %1952 = vmatprep.subr.mxu0 0.0
    %1953 = vmatpush1.msra.mxu0 %v1947
    %1954 = vmatprep.subr.mxu0 0.0
    %1955 = vmatpush1.msra.mxu0 %v1948
    %1956 = vmatprep.subr.mxu0 0.0
    %1957 = vmatpush1.msra.mxu0 %v1949
    %1958 = vmatprep.subr.mxu0 0.0
    %1959 = vmatpush1.msra.mxu0 0.0
    %1960 = vmatprep.subr.mxu0 0.0
    %1961 = vmatpush1.msra.mxu0 0.0
    %1962 = vmatprep.subr.mxu0 0.0
    %1963 = vmatpush1.msra.mxu0 0.0
    %1964 = vmatprep.subr.mxu0 0.0
    %1965 = vmatpush1.msra.mxu0 0.0
    %1966 = vmatprep.subr.mxu0 0.0
    %1967 = vmatpush1.msra.mxu0 0.0
    %1968 = vmatprep.subr.mxu0 0.0
    %1969 = vmatpush1.msra.mxu0 0.0
    %1970 = vmatprep.subr.mxu0 0.0
    %1971 = vmatpush1.msra.mxu0 0.0
    %1972 = vmatprep.subr.mxu0 0.0
    %1973 = vmatpush1.msra.mxu0 0.0
    %1974 = vmatprep.subr.mxu0 0.0
    %1975 = vmatpush1.msra.mxu0 0.0
    %1976 = vmatprep.subr.mxu0 0.0
    %1977 = vmatpush1.msra.mxu0 0.0
    %1978 = vmatprep.subr.mxu0 0.0
    %1979 = vmatpush1.msra.mxu0 0.0
    %1980 = vmatprep.subr.mxu0 0.0
    %1981 = vmatpush1.msra.mxu0 0.0
    %1982 = vmatprep.subr.mxu0 0.0
    %1983 = vmatpush1.msra.mxu0 0.0
    %1984 = vmatprep.subr.mxu0 0.0
    %1985 = vmatpush1.msra.mxu0 0.0
    %1986 = vmatprep.subr.mxu0 0.0
    %1987 = vmatpush1.msra.mxu0 0.0
    %1988 = vmatprep.subr.mxu0 0.0
    %1989 = vmatpush1.msra.mxu0 0.0
    %1990 = vmatprep.subr.mxu0 0.0
    %1991 = vmatpush1.msra.mxu0 0.0
    %1992 = vmatprep.subr.mxu0 0.0
    %1993 = vmatpush1.msra.mxu0 0.0
    %1994 = vmatprep.subr.mxu0 0.0
    %1995 = vmatpush1.msra.mxu0 0.0
    %1996 = vmatprep.subr.mxu0 0.0
    %1997 = vmatpush1.msra.mxu0 0.0
    %1998 = vmatprep.subr.mxu0 0.0
    %1999 = vmatpush1.msra.mxu0 0.0
    %2000 = vmatprep.subr.mxu0 0.0
    %2001 = vmatpush1.msra.mxu0 0.0
    %2002 = vmatprep.subr.mxu0 0.0
    %2003 = vmatpush1.msra.mxu0 0.0
    %2004 = vmatprep.subr.mxu0 0.0
    %2005 = vmatpush1.msra.mxu0 0.0
    %2006 = vmatprep.subr.mxu0 0.0
    %2007 = vmatpush1.msra.mxu0 0.0
    %2008 = vmatprep.subr.mxu0 0.0
    %2009 = vmatpush1.msra.mxu0 0.0
    %2010 = vmatprep.subr.mxu0 0.0
    %2011 = vmatpush1.msra.mxu0 0.0
    %2012 = vmatprep.subr.mxu0 0.0
    %2013 = vmatpush1.msra.mxu0 0.0
    %2014 = vmatprep.mubr.f32.mxu0 0.0
    %2015 = vmatmul.mubr.f32.gmra.mrb[0].mxu0 %v568
    %v2016 = vpop.f32.mrb[0].mxu0
    %v2017 = vadd.f32 0.0, %v2016
    %v2018 = vpop.f32.mrb[0].mxu0
    %2019 = vdwg.mxu0
    %2020 = vmatprep.subr.mxu0 0.0
    %2021 = vmatpush1.msra.mxu0 %v92
    %2022 = vmatprep.subr.mxu0 0.0
    %2023 = vmatpush1.msra.mxu0 %v93
    %2024 = vmatprep.subr.mxu0 0.0
    %2025 = vmatpush1.msra.mxu0 %v94
    %2026 = vmatprep.subr.mxu0 0.0
    %2027 = vmatpush1.msra.mxu0 %v95
    %2028 = vmatprep.subr.mxu0 0.0
    %2029 = vmatpush1.msra.mxu0 %v96
    %2030 = vmatprep.subr.mxu0 0.0
    %2031 = vmatpush1.msra.mxu0 %v97
    %2032 = vmatprep.subr.mxu0 0.0
    %2033 = vmatpush1.msra.mxu0 %v98
    %2034 = vmatprep.subr.mxu0 0.0
    %2035 = vmatpush1.msra.mxu0 %v99
    %2036 = vmatprep.subr.mxu0 0.0
    %2037 = vmatpush1.msra.mxu0 %v100
    %2038 = vmatprep.subr.mxu0 0.0
    %2039 = vmatpush1.msra.mxu0 %v101
    %2040 = vmatprep.subr.mxu0 0.0
    %2041 = vmatpush1.msra.mxu0 %v102
    %2042 = vmatprep.subr.mxu0 0.0
    %2043 = vmatpush1.msra.mxu0 %v103
    %2044 = vmatprep.subr.mxu0 0.0
    %2045 = vmatpush1.msra.mxu0 %v104
    %2046 = vmatprep.subr.mxu0 0.0
    %2047 = vmatpush1.msra.mxu0 %v105
    %2048 = vmatprep.subr.mxu0 0.0
    %2049 = vmatpush1.msra.mxu0 %v106
    %2050 = vmatprep.subr.mxu0 0.0
    %2051 = vmatpush1.msra.mxu0 %v107
    %2052 = vmatprep.subr.mxu0 0.0
    %2053 = vmatpush1.msra.mxu0 0.0
    %2054 = vmatprep.subr.mxu0 0.0
    %2055 = vmatpush1.msra.mxu0 0.0
    %2056 = vmatprep.subr.mxu0 0.0
    %2057 = vmatpush1.msra.mxu0 0.0
    %2058 = vmatprep.subr.mxu0 0.0
    %2059 = vmatpush1.msra.mxu0 0.0
    %2060 = vmatprep.subr.mxu0 0.0
    %2061 = vmatpush1.msra.mxu0 0.0
    %2062 = vmatprep.subr.mxu0 0.0
    %2063 = vmatpush1.msra.mxu0 0.0
    %2064 = vmatprep.subr.mxu0 0.0
    %2065 = vmatpush1.msra.mxu0 0.0
    %2066 = vmatprep.subr.mxu0 0.0
    %2067 = vmatpush1.msra.mxu0 0.0
    %2068 = vmatprep.subr.mxu0 0.0
    %2069 = vmatpush1.msra.mxu0 0.0
    %2070 = vmatprep.subr.mxu0 0.0
    %2071 = vmatpush1.msra.mxu0 0.0
    %2072 = vmatprep.subr.mxu0 0.0
    %2073 = vmatpush1.msra.mxu0 0.0
    %2074 = vmatprep.subr.mxu0 0.0
    %2075 = vmatpush1.msra.mxu0 0.0
    %2076 = vmatprep.subr.mxu0 0.0
    %2077 = vmatpush1.msra.mxu0 0.0
    %2078 = vmatprep.subr.mxu0 0.0
    %2079 = vmatpush1.msra.mxu0 0.0
    %2080 = vmatprep.subr.mxu0 0.0
    %2081 = vmatpush1.msra.mxu0 0.0
    %2082 = vmatprep.subr.mxu0 0.0
    %2083 = vmatpush1.msra.mxu0 0.0
    %2084 = vmatprep.mubr.f32.mxu0 0.0
    %2085 = vmatmul.mubr.f32.gmra.mrb[0].mxu0 %v2017
    %v2086 = vpop.f32.mrb[0].mxu0
    %v2087 = vadd.f32 0.0, %v2086
    %v2088 = vpop.f32.mrb[0].mxu0
    %2089 = vdwg.mxu0
    %2090 = vmatprep.subr.mxu0 0.0
    %2091 = vmatpush1.msra.mxu0 %v2087
    %2092 = vmatprep.subr.mxu0 0.0
    %2093 = vmatpush1.msra.mxu0 0.0
    %2094 = vmatprep.subr.mxu0 0.0
    %2095 = vmatpush1.msra.mxu0 0.0
    %2096 = vmatprep.subr.mxu0 0.0
    %2097 = vmatpush1.msra.mxu0 0.0
    %2098 = vmatprep.subr.mxu0 0.0
    %2099 = vmatpush1.msra.mxu0 0.0
    %2100 = vmatprep.subr.mxu0 0.0
    %2101 = vmatpush1.msra.mxu0 0.0
    %2102 = vmatprep.subr.mxu0 0.0
    %2103 = vmatpush1.msra.mxu0 0.0
    %2104 = vmatprep.subr.mxu0 0.0
    %2105 = vmatpush1.msra.mxu0 0.0
    %2106 = vmatprep.subr.mxu0 0.0
    %2107 = vmatpush1.msra.mxu0 0.0
    %2108 = vmatprep.subr.mxu0 0.0
    %2109 = vmatpush1.msra.mxu0 0.0
    %2110 = vmatprep.subr.mxu0 0.0
    %2111 = vmatpush1.msra.mxu0 0.0
    %2112 = vmatprep.subr.mxu0 0.0
    %2113 = vmatpush1.msra.mxu0 0.0
    %2114 = vmatprep.subr.mxu0 0.0
    %2115 = vmatpush1.msra.mxu0 0.0
    %2116 = vmatprep.subr.mxu0 0.0
    %2117 = vmatpush1.msra.mxu0 0.0
    %2118 = vmatprep.subr.mxu0 0.0
    %2119 = vmatpush1.msra.mxu0 0.0
    %2120 = vmatprep.subr.mxu0 0.0
    %2121 = vmatpush1.msra.mxu0 0.0
    %2122 = vmatprep.subr.mxu0 0.0
    %2123 = vmatpush1.msra.mxu0 0.0
    %2124 = vmatprep.subr.mxu0 0.0
    %2125 = vmatpush1.msra.mxu0 0.0
    %2126 = vmatprep.subr.mxu0 0.0
    %2127 = vmatpush1.msra.mxu0 0.0
    %2128 = vmatprep.subr.mxu0 0.0
    %2129 = vmatpush1.msra.mxu0 0.0
    %2130 = vmatprep.subr.mxu0 0.0
    %2131 = vmatpush1.msra.mxu0 0.0
    %2132 = vmatprep.subr.mxu0 0.0
    %2133 = vmatpush1.msra.mxu0 0.0
    %2134 = vmatprep.subr.mxu0 0.0
    %2135 = vmatpush1.msra.mxu0 0.0
    %2136 = vmatprep.subr.mxu0 0.0
    %2137 = vmatpush1.msra.mxu0 0.0
    %2138 = vmatprep.subr.mxu0 0.0
    %2139 = vmatpush1.msra.mxu0 0.0
    %2140 = vmatprep.subr.mxu0 0.0
    %2141 = vmatpush1.msra.mxu0 0.0
    %2142 = vmatprep.subr.mxu0 0.0
    %2143 = vmatpush1.msra.mxu0 0.0
    %2144 = vmatprep.subr.mxu0 0.0
    %2145 = vmatpush1.msra.mxu0 0.0
    %2146 = vmatprep.subr.mxu0 0.0
    %2147 = vmatpush1.msra.mxu0 0.0
    %2148 = vmatprep.subr.mxu0 0.0
    %2149 = vmatpush1.msra.mxu0 0.0
    %2150 = vmatprep.subr.mxu0 0.0
    %2151 = vmatpush1.msra.mxu0 0.0
    %2152 = vmatprep.subr.mxu0 0.0
    %2153 = vmatpush1.msra.mxu0 0.0
    %2154 = vmatprep.mubr.f32.mxu0 0.0
    %2155 = vmatmul.mubr.f32.gmra.mrb[0].mxu0 %v712
    %v2156 = vpop.f32.mrb[0].mxu0
    %v2157 = vadd.f32 0.0, %v2156
    %v2158 = vpop.f32.mrb[0].mxu0
    %2159 = vmatprep.mubr.f32.mxu0 0.0
    %2160 = vmatmul.mubr.f32.gmra.mrb[0].mxu0 %v715
    %v2161 = vpop.f32.mrb[0].mxu0
    %v2162 = vadd.f32 0.0, %v2161
    %v2163 = vpop.f32.mrb[0].mxu0
    %2164 = vmatprep.mubr.f32.mxu0 0.0
    %2165 = vmatmul.mubr.f32.gmra.mrb[0].mxu0 %v718
    %v2166 = vpop.f32.mrb[0].mxu0
    %v2167 = vadd.f32 0.0, %v2166
    %v2168 = vpop.f32.mrb[0].mxu0
    %2169 = vmatprep.mubr.f32.mxu0 0.0
    %2170 = vmatmul.mubr.f32.gmra.mrb[0].mxu0 %v721
    %v2171 = vpop.f32.mrb[0].mxu0
    %v2172 = vadd.f32 0.0, %v2171
    %v2173 = vpop.f32.mrb[0].mxu0
    %2174 = vdwg.mxu0
    %v2176 = vsel %vm710, %v2157, 0
    %v2179 = vsel %vm710, %v2162, 0
    %v2182 = vsel %vm710, %v2167, 0
    %v2185 = vsel %vm710, %v2172, 0
    %2187 = vmatprep.subr.mxu0 0.0
    %2188 = vmatpush1.msra.mxu0 %v108
    %2189 = vmatprep.subr.mxu0 0.0
    %2190 = vmatpush1.msra.mxu0 0.0
    %2191 = vmatprep.subr.mxu0 0.0
    %2192 = vmatpush1.msra.mxu0 0.0
    %2193 = vmatprep.subr.mxu0 0.0
    %2194 = vmatpush1.msra.mxu0 0.0
    %2195 = vmatprep.subr.mxu0 0.0
    %2196 = vmatpush1.msra.mxu0 0.0
    %2197 = vmatprep.subr.mxu0 0.0
    %2198 = vmatpush1.msra.mxu0 0.0
    %2199 = vmatprep.subr.mxu0 0.0
    %2200 = vmatpush1.msra.mxu0 0.0
    %2201 = vmatprep.subr.mxu0 0.0
    %2202 = vmatpush1.msra.mxu0 0.0
    %2203 = vmatprep.subr.mxu0 0.0
    %2204 = vmatpush1.msra.mxu0 0.0
    %2205 = vmatprep.subr.mxu0 0.0
    %2206 = vmatpush1.msra.mxu0 0.0
    %2207 = vmatprep.subr.mxu0 0.0
    %2208 = vmatpush1.msra.mxu0 0.0
    %2209 = vmatprep.subr.mxu0 0.0
    %2210 = vmatpush1.msra.mxu0 0.0
    %2211 = vmatprep.subr.mxu0 0.0
    %2212 = vmatpush1.msra.mxu0 0.0
    %2213 = vmatprep.subr.mxu0 0.0
    %2214 = vmatpush1.msra.mxu0 0.0
    %2215 = vmatprep.subr.mxu0 0.0
    %2216 = vmatpush1.msra.mxu0 0.0
    %2217 = vmatprep.subr.mxu0 0.0
    %2218 = vmatpush1.msra.mxu0 0.0
    %2219 = vmatprep.subr.mxu0 0.0
    %2220 = vmatpush1.msra.mxu0 0.0
    %2221 = vmatprep.subr.mxu0 0.0
    %2222 = vmatpush1.msra.mxu0 0.0
    %2223 = vmatprep.subr.mxu0 0.0
    %2224 = vmatpush1.msra.mxu0 0.0
    %2225 = vmatprep.subr.mxu0 0.0
    %2226 = vmatpush1.msra.mxu0 0.0
    %2227 = vmatprep.subr.mxu0 0.0
    %2228 = vmatpush1.msra.mxu0 0.0
    %2229 = vmatprep.subr.mxu0 0.0
    %2230 = vmatpush1.msra.mxu0 0.0
    %2231 = vmatprep.subr.mxu0 0.0
    %2232 = vmatpush1.msra.mxu0 0.0
    %2233 = vmatprep.subr.mxu0 0.0
    %2234 = vmatpush1.msra.mxu0 0.0
    %2235 = vmatprep.subr.mxu0 0.0
    %2236 = vmatpush1.msra.mxu0 0.0
    %2237 = vmatprep.subr.mxu0 0.0
    %2238 = vmatpush1.msra.mxu0 0.0
    %2239 = vmatprep.subr.mxu0 0.0
    %2240 = vmatpush1.msra.mxu0 0.0
    %2241 = vmatprep.subr.mxu0 0.0
    %2242 = vmatpush1.msra.mxu0 0.0
    %2243 = vmatprep.subr.mxu0 0.0
    %2244 = vmatpush1.msra.mxu0 0.0
    %2245 = vmatprep.subr.mxu0 0.0
    %2246 = vmatpush1.msra.mxu0 0.0
    %2247 = vmatprep.subr.mxu0 0.0
    %2248 = vmatpush1.msra.mxu0 0.0
    %2249 = vmatprep.subr.mxu0 0.0
    %2250 = vmatpush1.msra.mxu0 0.0
    %2251 = vmatprep.mubr.f32.mxu0 0.0
    %2252 = vmatmul.mubr.f32.gmra.mrb[0].mxu0 %v2176
    %v2253 = vpop.f32.mrb[0].mxu0
    %v2254 = vadd.f32 0.0, %v2253
    %v2255 = vpop.f32.mrb[0].mxu0
    %2256 = vmatprep.mubr.f32.mxu0 0.0
    %2257 = vmatmul.mubr.f32.gmra.mrb[0].mxu0 %v2179
    %v2258 = vpop.f32.mrb[0].mxu0
    %v2259 = vadd.f32 0.0, %v2258
    %v2260 = vpop.f32.mrb[0].mxu0
    %2261 = vmatprep.mubr.f32.mxu0 0.0
    %2262 = vmatmul.mubr.f32.gmra.mrb[0].mxu0 %v2182
    %v2263 = vpop.f32.mrb[0].mxu0
    %v2264 = vadd.f32 0.0, %v2263
    %v2265 = vpop.f32.mrb[0].mxu0
    %2266 = vmatprep.mubr.f32.mxu0 0.0
    %2267 = vmatmul.mubr.f32.gmra.mrb[0].mxu0 %v2185
    %v2268 = vpop.f32.mrb[0].mxu0
    %v2269 = vadd.f32 0.0, %v2268
    %v2270 = vpop.f32.mrb[0].mxu0
    %2271 = vdwg.mxu0
    %v2272 = vmul.f32 %v2254, 0.001953125
    %v2273 = vmul.f32 %v2259, 0.001953125
    %v2274 = vmul.f32 %v2264, 0.001953125
    %v2275 = vmul.f32 %v2269, 0.001953125
    %v2276 = vadd.f32 %v2272, 1e-05
    %v2277 = vadd.f32 %v2273, 1e-05
    %v2278 = vadd.f32 %v2274, 1e-05
    %v2279 = vadd.f32 %v2275, 1e-05
    %v2280 = vrsqrt.pop %v2276
    %v2281 = vrsqrt.pop %v2277
    %v2282 = vrsqrt.pop %v2278
    %v2283 = vrsqrt.pop %v2279
    %v2284 = vmul.f32 %v1942, %v2280
    %v2285 = vmul.f32 %v1943, %v2281
    %v2286 = vmul.f32 %v1944, %v2282
    %v2287 = vmul.f32 %v1945, %v2283
    %v2288 = vmul.f32 %v2284, %v1258
    %v2289 = vmul.f32 %v2285, %v1258
    %v2290 = vmul.f32 %v2286, %v1258
    %v2291 = vmul.f32 %v2287, %v1258
    %v2292 = vadd.f32 %v2288, %v1266
    %v2293 = vadd.f32 %v2289, %v1266
    %v2294 = vadd.f32 %v2290, %v1266
    %v2295 = vadd.f32 %v2291, %v1266
    %v2296 = vrot.slane %v2292, 1
    %v2297 = vrot.slane %v2293, 1
    %v2298 = vrot.slane %v2294, 1
    %v2299 = vrot.slane %v2295, 1
    %v2300 = vsel %vm427, %v2298, %v2299
    %v2301 = vsel %vm427, %v2297, %v2298
    %v2302 = vsel %vm427, %v2296, %v2297
    %v2303 = vsel %vm427, %v2299, %v2296
    %v2304 = vmax.f32 %v2292, %v2302
    %v2305 = vmax.f32 %v2293, %v2301
    %v2306 = vmax.f32 %v2294, %v2300
    %v2307 = vmax.f32 %v2295, %v2303
    %v2308 = vld [vmem:[%s8] sm:$0xff]
    %v2309 = vld [vmem:[%s8 + $0x8] sm:$0xff]
    %v2311 = vsel %vm566, %v2308, 0
    %v2314 = vsel %vm566, %v2309, 0
    %2316 = vmatprep.subr.mxu0 0.0
    %2317 = vmatpush1.msra.mxu0 %v2304
    %2318 = vmatprep.subr.mxu0 0.0
    %2319 = vmatpush1.msra.mxu0 %v2305
    %2320 = vmatprep.subr.mxu0 0.0
    %2321 = vmatpush1.msra.mxu0 %v2306
    %2322 = vmatprep.subr.mxu0 0.0
    %2323 = vmatpush1.msra.mxu0 %v2307
    %2324 = vmatprep.subr.mxu0 0.0
    %2325 = vmatpush1.msra.mxu0 0.0
    %2326 = vmatprep.subr.mxu0 0.0
    %2327 = vmatpush1.msra.mxu0 0.0
    %2328 = vmatprep.subr.mxu0 0.0
    %2329 = vmatpush1.msra.mxu0 0.0
    %2330 = vmatprep.subr.mxu0 0.0
    %2331 = vmatpush1.msra.mxu0 0.0
    %2332 = vmatprep.subr.mxu0 0.0
    %2333 = vmatpush1.msra.mxu0 0.0
    %2334 = vmatprep.subr.mxu0 0.0
    %2335 = vmatpush1.msra.mxu0 0.0
    %2336 = vmatprep.subr.mxu0 0.0
    %2337 = vmatpush1.msra.mxu0 0.0
    %2338 = vmatprep.subr.mxu0 0.0
    %2339 = vmatpush1.msra.mxu0 0.0
    %2340 = vmatprep.subr.mxu0 0.0
    %2341 = vmatpush1.msra.mxu0 0.0
    %2342 = vmatprep.subr.mxu0 0.0
    %2343 = vmatpush1.msra.mxu0 0.0
    %2344 = vmatprep.subr.mxu0 0.0
    %2345 = vmatpush1.msra.mxu0 0.0
    %2346 = vmatprep.subr.mxu0 0.0
    %2347 = vmatpush1.msra.mxu0 0.0
    %2348 = vmatprep.subr.mxu0 0.0
    %2349 = vmatpush1.msra.mxu0 0.0
    %2350 = vmatprep.subr.mxu0 0.0
    %2351 = vmatpush1.msra.mxu0 0.0
    %2352 = vmatprep.subr.mxu0 0.0
    %2353 = vmatpush1.msra.mxu0 0.0
    %2354 = vmatprep.subr.mxu0 0.0
    %2355 = vmatpush1.msra.mxu0 0.0
    %2356 = vmatprep.subr.mxu0 0.0
    %2357 = vmatpush1.msra.mxu0 0.0
    %2358 = vmatprep.subr.mxu0 0.0
    %2359 = vmatpush1.msra.mxu0 0.0
    %2360 = vmatprep.subr.mxu0 0.0
    %2361 = vmatpush1.msra.mxu0 0.0
    %2362 = vmatprep.subr.mxu0 0.0
    %2363 = vmatpush1.msra.mxu0 0.0
    %2364 = vmatprep.subr.mxu0 0.0
    %2365 = vmatpush1.msra.mxu0 0.0
    %2366 = vmatprep.subr.mxu0 0.0
    %2367 = vmatpush1.msra.mxu0 0.0
    %2368 = vmatprep.subr.mxu0 0.0
    %2369 = vmatpush1.msra.mxu0 0.0
    %2370 = vmatprep.subr.mxu0 0.0
    %2371 = vmatpush1.msra.mxu0 0.0
    %2372 = vmatprep.subr.mxu0 0.0
    %2373 = vmatpush1.msra.mxu0 0.0
    %2374 = vmatprep.subr.mxu0 0.0
    %2375 = vmatpush1.msra.mxu0 0.0
    %2376 = vmatprep.subr.mxu0 0.0
    %2377 = vmatpush1.msra.mxu0 0.0
    %2378 = vmatprep.subr.mxu0 0.0
    %2379 = vmatpush1.msra.mxu0 0.0
    %2380 = vmatprep.mubr.f32.mxu0 0.0
    %2381 = vmatmul.mubr.f32.gmra.mrb[0].mxu0 %v2311
    %v2382 = vpop.f32.mrb[0].mxu0
    %v2383 = vadd.f32 0.0, %v2382
    %v2384 = vpop.f32.mrb[0].mxu0
    %2385 = vmatprep.mubr.f32.mxu0 0.0
    %2386 = vmatmul.mubr.f32.gmra.mrb[0].mxu0 %v2314
    %v2387 = vpop.f32.mrb[0].mxu0
    %v2388 = vadd.f32 0.0, %v2387
    %v2389 = vpop.f32.mrb[0].mxu0
    %2390 = vdwg.mxu0
    %2391 = vrot.lane.b32.xlu0 %v2383, 120
    %v2392 = vpop.permute.xlu0 %2391
    %2393 = vrot.lane.b32.xlu0 %v2388, 120
    %v2394 = vpop.permute.xlu0 %2393
    %v2395 = vmax.f32 %v2383, %v2392
    %v2396 = vmax.f32 %v2388, %v2394
    %v2397 = vld [vmem:[%s9] sm:$0xff]
    %v2398 = vld [vmem:[%s9 + $0x8] sm:$0xff]
    %v2399 = vld [vmem:[%s9 + $0x10] sm:$0xff]
    %v2400 = vld [vmem:[%s9 + $0x18] sm:$0xff]
    %v2401 = vld [vmem:[%s9 + $0x20] sm:$0xff]
    %v2402 = vld [vmem:[%s9 + $0x28] sm:$0xff]
    %v2403 = vld [vmem:[%s9 + $0x30] sm:$0xff]
    %v2404 = vld [vmem:[%s9 + $0x38] sm:$0xff]
    %v2405 = vld [vmem:[%s9 + $0x40] sm:$0xff]
    %v2406 = vld [vmem:[%s9 + $0x48] sm:$0xff]
    %v2407 = vld [vmem:[%s9 + $0x50] sm:$0xff]
    %v2408 = vld [vmem:[%s9 + $0x58] sm:$0xff]
    %v2409 = vld [vmem:[%s9 + $0x60] sm:$0xff]
    %v2410 = vld [vmem:[%s9 + $0x68] sm:$0xff]
    %v2411 = vld [vmem:[%s9 + $0x70] sm:$0xff]
    %v2412 = vld [vmem:[%s9 + $0x78] sm:$0xff]
    %2413 = vmatprep.subr.mxu0 0.0
    %2414 = vmatpush1.msra.mxu0 %v2397
    %2415 = vmatprep.subr.mxu0 0.0
    %2416 = vmatpush1.msra.mxu0 %v2398
    %2417 = vmatprep.subr.mxu0 0.0
    %2418 = vmatpush1.msra.mxu0 %v2399
    %2419 = vmatprep.subr.mxu0 0.0
    %2420 = vmatpush1.msra.mxu0 %v2400
    %2421 = vmatprep.subr.mxu0 0.0
    %2422 = vmatpush1.msra.mxu0 %v2401
    %2423 = vmatprep.subr.mxu0 0.0
    %2424 = vmatpush1.msra.mxu0 %v2402
    %2425 = vmatprep.subr.mxu0 0.0
    %2426 = vmatpush1.msra.mxu0 %v2403
    %2427 = vmatprep.subr.mxu0 0.0
    %2428 = vmatpush1.msra.mxu0 %v2404
    %2429 = vmatprep.subr.mxu0 0.0
    %2430 = vmatpush1.msra.mxu0 %v2405
    %2431 = vmatprep.subr.mxu0 0.0
    %2432 = vmatpush1.msra.mxu0 %v2406
    %2433 = vmatprep.subr.mxu0 0.0
    %2434 = vmatpush1.msra.mxu0 %v2407
    %2435 = vmatprep.subr.mxu0 0.0
    %2436 = vmatpush1.msra.mxu0 %v2408
    %2437 = vmatprep.subr.mxu0 0.0
    %2438 = vmatpush1.msra.mxu0 %v2409
    %2439 = vmatprep.subr.mxu0 0.0
    %2440 = vmatpush1.msra.mxu0 %v2410
    %2441 = vmatprep.subr.mxu0 0.0
    %2442 = vmatpush1.msra.mxu0 %v2411
    %2443 = vmatprep.subr.mxu0 0.0
    %2444 = vmatpush1.msra.mxu0 %v2412
    %2445 = vmatprep.subr.mxu0 0.0
    %2446 = vmatpush1.msra.mxu0 0.0
    %2447 = vmatprep.subr.mxu0 0.0
    %2448 = vmatpush1.msra.mxu0 0.0
    %2449 = vmatprep.subr.mxu0 0.0
    %2450 = vmatpush1.msra.mxu0 0.0
    %2451 = vmatprep.subr.mxu0 0.0
    %2452 = vmatpush1.msra.mxu0 0.0
    %2453 = vmatprep.subr.mxu0 0.0
    %2454 = vmatpush1.msra.mxu0 0.0
    %2455 = vmatprep.subr.mxu0 0.0
    %2456 = vmatpush1.msra.mxu0 0.0
    %2457 = vmatprep.subr.mxu0 0.0
    %2458 = vmatpush1.msra.mxu0 0.0
    %2459 = vmatprep.subr.mxu0 0.0
    %2460 = vmatpush1.msra.mxu0 0.0
    %2461 = vmatprep.subr.mxu0 0.0
    %2462 = vmatpush1.msra.mxu0 0.0
    %2463 = vmatprep.subr.mxu0 0.0
    %2464 = vmatpush1.msra.mxu0 0.0
    %2465 = vmatprep.subr.mxu0 0.0
    %2466 = vmatpush1.msra.mxu0 0.0
    %2467 = vmatprep.subr.mxu0 0.0
    %2468 = vmatpush1.msra.mxu0 0.0
    %2469 = vmatprep.subr.mxu0 0.0
    %2470 = vmatpush1.msra.mxu0 0.0
    %2471 = vmatprep.subr.mxu0 0.0
    %2472 = vmatpush1.msra.mxu0 0.0
    %2473 = vmatprep.subr.mxu0 0.0
    %2474 = vmatpush1.msra.mxu0 0.0
    %2475 = vmatprep.subr.mxu0 0.0
    %2476 = vmatpush1.msra.mxu0 0.0
    %2477 = vmatprep.mubr.f32.mxu0 0.0
    %2478 = vmatmul.mubr.f32.gmra.mrb[0].mxu0 %v2395
    %v2479 = vpop.f32.mrb[0].mxu0
    %v2480 = vadd.f32 0.0, %v2479
    %v2481 = vpop.f32.mrb[0].mxu0
    %2482 = vmatprep.mubr.f32.mxu0 0.0
    %2483 = vmatmul.mubr.f32.gmra.mrb[0].mxu0 %v2396
    %v2484 = vpop.f32.mrb[0].mxu0
    %v2485 = vadd.f32 0.0, %v2484
    %v2486 = vpop.f32.mrb[0].mxu0
    %2487 = vdwg.mxu0
    %2488 = vst.msk [vmem:[%s10] sm:$0xff] %vm228, %v2480
    %2489 = vst.msk [vmem:[%s10 + $0x8] sm:$0xff] %vm228, %v2485
    // Predicated region
    $region58: #{forward.1} parent=1 // pred_check
      _
    $region59: #{forward.1} parent=1 // pred_check_branch
      %2491 = sbr.rel (0) target = $region61
    $region60: #{forward.1} parent=1 // pred_region
      _
    $region61: #{forward.1} parent=1 // pred_fallthru
      _
    // Predicated region
    $region62: #{forward.1} parent=1 // pred_check
      _
    $region63: #{forward.1} parent=1 // pred_check_branch
      %2493 = sbr.rel (0) target = $region65
    $region64: #{forward.1} parent=1 // pred_region
      _
    $region65: #{forward.1} parent=1 // pred_fallthru
      _
    %2494 = vsyncpa [#allocation3], 1
    %2495 = vsyncpa [#allocation5], 1
    %2496 = vsyncpa [#allocation8], 1

// kernel: forward.1
$region0: #{forward.1}
  #allocation0 [shape = 'u32[]', space=smem, size = 0x4, offset = 0x4, fixed_abs, tag = 'smem constant byte address 0x4 - core index']
  #allocation1 [shape = 'u32[144,128]{1,0:T(1,128)}', space=vmem, size = 0x12000, scoped, tag = 'internal scratch']
  %s0 = inlined_call_operand.vmem [shape: f32[32,64], index: 0, kind: input, shape index: {}]
  %s1 = inlined_call_operand.hbm [shape: f32[3,64,128], index: 1, kind: input, shape index: {}]
  %s2 = inlined_call_operand.vmem [shape: f32[3,128,128], index: 2, kind: input, shape index: {}]
  %s3 = inlined_call_operand.hbm [shape: f32[8,128], index: 3, kind: input, shape index: {}]
  %s4 = inlined_call_operand.vmem [shape: f32[32,8], index: 4, kind: input, shape index: {}]
  %s5 = inlined_call_operand.hbm [shape: f32[8,32], index: 5, kind: input, shape index: {}]
  %s6 = inlined_call_operand.hbm [shape: f32[128,8], index: 6, kind: input, shape index: {}]
  %s7 = inlined_call_operand.vmem [shape: f32[8,128], index: 7, kind: input, shape index: {}]
  %s8 = inlined_call_operand.vmem [shape: f32[16,32], index: 8, kind: input, shape index: {}]
  %s9 = inlined_call_operand.vmem [shape: f32[128,64], index: 9, kind: input, shape index: {}]
  %s10 = inlined_call_operand.vmem [shape: f32[16,64], index: 10, kind: output, shape index: {}]
  %s11 = sld [smem:[#allocation0]]
  $region66: #{forward.1} parent=0
    _
  %s13 = ssub.s32 1, %s11
  %s14 = scalar_select 0, %s13, %s11
  $region1: #{forward.1} parent=0
    #allocation2 [shape = 'u8[98304]{0}', space=vmem, size = 0x18000, scoped, tag = 'input window, operand 1, single buffered']
    #allocation3 [shape = 's32[1]{0}', space=sflag, size = 0x4, scoped, tag = 'scoped memory for forward.1']
    #allocation4 [shape = 'u8[4096]{0}', space=vmem, size = 0x1000, scoped, tag = 'input window, operand 3, single buffered']
    #allocation5 [shape = 's32[1]{0}', space=sflag, size = 0x4, scoped, tag = 'scoped memory for forward.1']
    #allocation6 [shape = 'u8[4096]{0}', space=vmem, size = 0x1000, scoped, tag = 'input window, operand 5, single buffered']
    #allocation7 [shape = 'u8[65536]{0}', space=vmem, size = 0x10000, scoped, tag = 'input window, operand 6, single buffered']
    #allocation8 [shape = 's32[1]{0}', space=sflag, size = 0x4, scoped, tag = 'scoped memory for forward.1']
    %15 = vsyncpa [#allocation3], 0
    %16 = vsyncpa [#allocation5], 0
    %17 = vsyncpa [#allocation8], 0
    // Predicated region
    $region2: #{forward.1} parent=1 // pred_check
      _
    $region3: #{forward.1} parent=1 // pred_check_branch
      %19 = sbr.rel (0) target = $region5
    $region4: #{forward.1} parent=1 // pred_region
      _
    $region5: #{forward.1} parent=1 // pred_fallthru
      _
    // Predicated region
    $region6: #{forward.1} parent=1 // pred_check
      _
    $region7: #{forward.1} parent=1 // pred_check_branch
      %21 = sbr.rel (0) target = $region9
    $region8: #{forward.1} parent=1 // pred_region
      %s23 = ssub.s32 3072, 3072
      %24 = vsyncadd [#allocation3], %s23
      %s25 = sshll.u32 [#allocation2], 4
      %s26 = int_to_ptr.vmem [resolvable:$true] %s25
      %31 = dma.hbm_to_vmem [thread:$0]  %s1, 3072, %s26, [#allocation3], 128, 128, 8
    $region9: #{forward.1} parent=1 // pred_fallthru
      _
    // Predicated region
    $region10: #{forward.1} parent=1 // pred_check
      _
    $region11: #{forward.1} parent=1 // pred_check_branch
      %33 = sbr.rel (0) target = $region13
    $region12: #{forward.1} parent=1 // pred_region
      _
    $region13: #{forward.1} parent=1 // pred_fallthru
      _
    // Predicated region
    $region14: #{forward.1} parent=1 // pred_check
      _
    $region15: #{forward.1} parent=1 // pred_check_branch
      %35 = sbr.rel (0) target = $region17
    $region16: #{forward.1} parent=1 // pred_region
      %s37 = ssub.s32 128, 128
      %38 = vsyncadd [#allocation5], %s37
      %s40 = sshll.u32 [#allocation4], 4
      %s41 = int_to_ptr.vmem [resolvable:$true] %s40
      %43 = dma.hbm_to_vmem [thread:$0]  %s3, 128, %s41, [#allocation5]
    $region17: #{forward.1} parent=1 // pred_fallthru
      _
    // Predicated region
    $region18: #{forward.1} parent=1 // pred_check
      _
    $region19: #{forward.1} parent=1 // pred_check_branch
      %45 = sbr.rel (0) target = $region21
    $region20: #{forward.1} parent=1 // pred_region
      _
    $region21: #{forward.1} parent=1 // pred_fallthru
      _
    // Predicated region
    $region22: #{forward.1} parent=1 // pred_check
      _
    $region23: #{forward.1} parent=1 // pred_check_branch
      %47 = sbr.rel (0) target = $region25
    $region24: #{forward.1} parent=1 // pred_region
      %s49 = ssub.s32 128, 128
      %50 = vsyncadd [#allocation5], %s49
      %s52 = sshll.u32 [#allocation6], 4
      %s53 = int_to_ptr.vmem [resolvable:$true] %s52
      %55 = dma.hbm_to_vmem [thread:$0]  %s5, 128, %s53, [#allocation5]
    $region25: #{forward.1} parent=1 // pred_fallthru
      _
    // Predicated region
    $region26: #{forward.1} parent=1 // pred_check
      _
    $region27: #{forward.1} parent=1 // pred_check_branch
      %57 = sbr.rel (0) target = $region29
    $region28: #{forward.1} parent=1 // pred_region
      %s59 = ssub.s32 2048, 2048
      %60 = vsyncadd [#allocation8], %s59
      %s61 = sshll.u32 [#allocation7], 4
      %s62 = int_to_ptr.vmem [resolvable:$true] %s61
      %67 = dma.hbm_to_vmem [thread:$0]  %s6, 2048, %s62, [#allocation8], 128, 128, 8
    $region29: #{forward.1} parent=1 // pred_fallthru
      _
    // Predicated region
    $region30: #{forward.1} parent=1 // pred_check
      _
    $region31: #{forward.1} parent=1 // pred_check_branch
      %69 = sbr.rel (0) target = $region33
    $region32: #{forward.1} parent=1 // pred_region
      _
    $region33: #{forward.1} parent=1 // pred_fallthru
      _
    // Predicated region
    $region34: #{forward.1} parent=1 // pred_check
      _
    $region35: #{forward.1} parent=1 // pred_check_branch
      %71 = sbr.rel (0) target = $region37
    $region36: #{forward.1} parent=1 // pred_region
      _
    $region37: #{forward.1} parent=1 // pred_fallthru
      _
    // Predicated region
    $region38: #{forward.1} parent=1 // pred_check
      _
    $region39: #{forward.1} parent=1 // pred_check_branch
      %73 = sbr.rel (0) target = $region41
    $region40: #{forward.1} parent=1 // pred_region
      _
    $region41: #{forward.1} parent=1 // pred_fallthru
      _
    // Predicated region
    $region42: #{forward.1} parent=1 // pred_check
      _
    $region43: #{forward.1} parent=1 // pred_check_branch
      %75 = sbr.rel (0) target = $region45
    $region44: #{forward.1} parent=1 // pred_region
      %76 = dma.done [#allocation3], 3072
    $region45: #{forward.1} parent=1 // pred_fallthru
      _
    // Predicated region
    $region46: #{forward.1} parent=1 // pred_check
      _
    $region47: #{forward.1} parent=1 // pred_check_branch
      %78 = sbr.rel (0) target = $region49
    $region48: #{forward.1} parent=1 // pred_region
      %79 = dma.done [#allocation5], 128
    $region49: #{forward.1} parent=1 // pred_fallthru
      _
    // Predicated region
    $region50: #{forward.1} parent=1 // pred_check
      _
    $region51: #{forward.1} parent=1 // pred_check_branch
      %81 = sbr.rel (0) target = $region53
    $region52: #{forward.1} parent=1 // pred_region
      %82 = dma.done [#allocation5], 128
    $region53: #{forward.1} parent=1 // pred_fallthru
      _
    // Predicated region
    $region54: #{forward.1} parent=1 // pred_check
      _
    $region55: #{forward.1} parent=1 // pred_check_branch
      %84 = sbr.rel (0) target = $region57
    $region56: #{forward.1} parent=1 // pred_region
      %85 = dma.done [#allocation8], 2048
    $region57: #{forward.1} parent=1 // pred_fallthru
      _
    %v86 = vld [vmem:[#allocation4] sm:$0xff]
    %v87 = vld [vmem:[%s4] sm:$0xff]
    %v88 = vld [vmem:[%s4 + $0x8] sm:$0xff]
    %v89 = vld [vmem:[%s4 + $0x10] sm:$0xff]
    %v90 = vld [vmem:[%s4 + $0x18] sm:$0xff]
    %v91 = vld [vmem:[#allocation6] sm:$0xff]
    %v92 = vld [vmem:[#allocation7] sm:$0xff]
    %v93 = vld [vmem:[#allocation7 + $0x8] sm:$0xff]
    %v94 = vld [vmem:[#allocation7 + $0x10] sm:$0xff]
    %v95 = vld [vmem:[#allocation7 + $0x18] sm:$0xff]
    %v96 = vld [vmem:[#allocation7 + $0x20] sm:$0xff]
    %v97 = vld [vmem:[#allocation7 + $0x28] sm:$0xff]
    %v98 = vld [vmem:[#allocation7 + $0x30] sm:$0xff]
    %v99 = vld [vmem:[#allocation7 + $0x38] sm:$0xff]
    %v100 = vld [vmem:[#allocation7 + $0x40] sm:$0xff]
    %v101 = vld [vmem:[#allocation7 + $0x48] sm:$0xff]
    %v102 = vld [vmem:[#allocation7 + $0x50] sm:$0xff]
    %v103 = vld [vmem:[#allocation7 + $0x58] sm:$0xff]
    %v104 = vld [vmem:[#allocation7 + $0x60] sm:$0xff]
    %v105 = vld [vmem:[#allocation7 + $0x68] sm:$0xff]
    %v106 = vld [vmem:[#allocation7 + $0x70] sm:$0xff]
    %v107 = vld [vmem:[#allocation7 + $0x78] sm:$0xff]
    %v108 = vld [vmem:[%s7] sm:$0xff]
    %v109 = vlaneseq
    %v110 = vshrl.u32 %v109, 7
    %v111 = vadd.s32 %v110, 8
    %v112 = vadd.s32 %v110, 16
    %v113 = vadd.s32 %v110, 24
    %vm114 = vcmp.lt.s32.totalorder %v110, 0
    %v115 = vsub.s32 0, %v110
    %v116 = vsel %vm114, %v115, %v110
    %v117 = vshrl.u32 %v116, 4
    %v118 = vand.u32 %v116, 15
    %v119 = vsub.s32 0, %v118
    %v120 = vsel %vm114, %v119, %v118
    %vm121 = vcmp.lt.s32.totalorder %v111, 0
    %v122 = vsub.s32 0, %v111
    %v123 = vsel %vm121, %v122, %v111
    %v124 = vshrl.u32 %v123, 4
    %v125 = vand.u32 %v123, 15
    %v126 = vsub.s32 0, %v125
    %v127 = vsel %vm121, %v126, %v125
    %vm128 = vcmp.lt.s32.totalorder %v112, 0
    %v129 = vsub.s32 0, %v112
    %v130 = vsel %vm128, %v129, %v112
    %v131 = vshrl.u32 %v130, 4
    %v132 = vand.u32 %v130, 15
    %v133 = vsub.s32 0, %v132
    %v134 = vsel %vm128, %v133, %v132
    %vm135 = vcmp.lt.s32.totalorder %v113, 0
    %v136 = vsub.s32 0, %v113
    %v137 = vsel %vm135, %v136, %v113
    %v138 = vshrl.u32 %v137, 4
    %v139 = vand.u32 %v137, 15
    %v140 = vsub.s32 0, %v139
    %v141 = vsel %vm135, %v140, %v139
    %vm142 = vcmp.ne.s32.totalorder %v120, 0
    %vm143 = vcmp.ne.s32.totalorder %v127, 0
    %vm144 = vcmp.ne.s32.totalorder %v134, 0
    %vm145 = vcmp.ne.s32.totalorder %v141, 0
    %vm146 = vcmp.lt.s32.totalorder %v120, 0
    %vm147 = vcmp.lt.s32.totalorder %v127, 0
    %vm148 = vcmp.lt.s32.totalorder %v134, 0
    %vm149 = vcmp.lt.s32.totalorder %v141, 0
    %vm150 = vmand %vm146, %vm142
    %vm151 = vmand %vm147, %vm143
    %vm152 = vmand %vm148, %vm144
    %vm153 = vmand %vm149, %vm145
    %v154 = vadd.s32 %v120, 16
    %v155 = vadd.s32 %v127, 16
    %v156 = vadd.s32 %v134, 16
    %v157 = vadd.s32 %v141, 16
    %v158 = vsel %vm150, %v154, %v120
    %v159 = vsel %vm151, %v155, %v127
    %v160 = vsel %vm152, %v156, %v134
    %v161 = vsel %vm153, %v157, %v141
    %vm162 = vcmp.ge.s32.totalorder %v158, 1
    %vm163 = vcmp.ge.s32.totalorder %v159, 1
    %vm164 = vcmp.ge.s32.totalorder %v160, 1
    %vm165 = vcmp.ge.s32.totalorder %v161, 1
    %vm166 = vcmp.lt.s32.totalorder %v158, 16
    %vm167 = vcmp.lt.s32.totalorder %v159, 16
    %vm168 = vcmp.lt.s32.totalorder %v160, 16
    %vm169 = vcmp.lt.s32.totalorder %v161, 16
    %vm170 = vmand %vm162, %vm166
    %vm171 = vmand %vm163, %vm167
    %vm172 = vmand %vm164, %vm168
    %vm173 = vmand %vm165, %vm169
    %vm174 = vcmp.ge.s32.totalorder %v158, 0
    %vm175 = vcmp.ge.s32.totalorder %v159, 0
    %vm176 = vcmp.ge.s32.totalorder %v160, 0
    %vm177 = vcmp.ge.s32.totalorder %v161, 0
    %vm178 = vcmp.lt.s32.totalorder %v158, 15
    %vm179 = vcmp.lt.s32.totalorder %v159, 15
    %vm180 = vcmp.lt.s32.totalorder %v160, 15
    %vm181 = vcmp.lt.s32.totalorder %v161, 15
    %vm182 = vmand %vm174, %vm178
    %vm183 = vmand %vm175, %vm179
    %vm184 = vmand %vm176, %vm180
    %vm185 = vmand %vm177, %vm181
    %v186 = vld [vmem:[%s0] sm:$0xff]
    %v187 = vld [vmem:[%s0 + $0x8] sm:$0xff]
    %v188 = vld [vmem:[%s0 + $0x10] sm:$0xff]
    %v189 = vld [vmem:[%s0 + $0x18] sm:$0xff]
    %v190 = vrot.slane %v186, 7
    %v191 = vrot.slane %v187, 7
    %v192 = vrot.slane %v188, 7
    %v193 = vrot.slane %v189, 7
    %vm194 = vcmp.lt.s32.totalorder %v110, 1
    %v195 = vsel %vm194, %v192, %v193
    %v196 = vsel %vm194, %v191, %v192
    %v197 = vsel %vm194, %v190, %v191
    %v198 = vsel %vm194, %v193, %v190
    %v199 = vsel %vm170, 1, 0
    %v200 = vsel %vm171, 1, 0
    %v201 = vsel %vm172, 1, 0
    %v202 = vsel %vm173, 1, 0
    %vm203 = vcmp.eq.s32.totalorder %v199, 1
    %vm204 = vcmp.eq.s32.totalorder %v200, 1
    %vm205 = vcmp.eq.s32.totalorder %v201, 1
    %vm206 = vcmp.eq.s32.totalorder %v202, 1
    %v207 = vsel %vm203, %v198, 0.0
    %v208 = vsel %vm204, %v197, 0.0
    %v209 = vsel %vm205, %v196, 0.0
    %v210 = vsel %vm206, %v195, 0.0
    %v211 = vld [vmem:[#allocation2] sm:$0xff]
    %v212 = vld [vmem:[#allocation2 + $0x8] sm:$0xff]
    %v213 = vld [vmem:[#allocation2 + $0x10] sm:$0xff]
    %v214 = vld [vmem:[#allocation2 + $0x18] sm:$0xff]
    %v215 = vld [vmem:[#allocation2 + $0x20] sm:$0xff]
    %v216 = vld [vmem:[#allocation2 + $0x28] sm:$0xff]
    %v217 = vld [vmem:[#allocation2 + $0x30] sm:$0xff]
    %v218 = vld [vmem:[#allocation2 + $0x38] sm:$0xff]
    %s219 = scalar_lea.vmem [#allocation2], 64
    %v220 = vld [vmem:[%s219] sm:$0xff]
    %v221 = vld [vmem:[%s219 + $0x8] sm:$0xff]
    %v222 = vld [vmem:[%s219 + $0x10] sm:$0xff]
    %v223 = vld [vmem:[%s219 + $0x18] sm:$0xff]
    %v224 = vld [vmem:[%s219 + $0x20] sm:$0xff]
    %v225 = vld [vmem:[%s219 + $0x28] sm:$0xff]
    %v226 = vld [vmem:[%s219 + $0x30] sm:$0xff]
    %v227 = vld [vmem:[%s219 + $0x38] sm:$0xff]
    %vm228 = vcmask 523264
    %v230 = vsel %vm228, %v186, 0
    %v233 = vsel %vm228, %v187, 0
    %v236 = vsel %vm228, %v188, 0
    %v239 = vsel %vm228, %v189, 0
    %241 = vmatprep.subr.mxu0 0.0
    %242 = vmatpush1.msra.mxu0 %v220
    %243 = vmatprep.subr.mxu0 0.0
    %244 = vmatpush1.msra.mxu0 %v221
    %245 = vmatprep.subr.mxu0 0.0
    %246 = vmatpush1.msra.mxu0 %v222
    %247 = vmatprep.subr.mxu0 0.0
    %248 = vmatpush1.msra.mxu0 %v223
    %249 = vmatprep.subr.mxu0 0.0
    %250 = vmatpush1.msra.mxu0 %v224
    %251 = vmatprep.subr.mxu0 0.0
    %252 = vmatpush1.msra.mxu0 %v225
    %253 = vmatprep.subr.mxu0 0.0
    %254 = vmatpush1.msra.mxu0 %v226
    %255 = vmatprep.subr.mxu0 0.0
    %256 = vmatpush1.msra.mxu0 %v227
    %257 = vmatprep.subr.mxu0 0.0
    %258 = vmatpush1.msra.mxu0 0.0
    %259 = vmatprep.subr.mxu0 0.0
    %260 = vmatpush1.msra.mxu0 0.0
    %261 = vmatprep.subr.mxu0 0.0
    %262 = vmatpush1.msra.mxu0 0.0
    %263 = vmatprep.subr.mxu0 0.0
    %264 = vmatpush1.msra.mxu0 0.0
    %265 = vmatprep.subr.mxu0 0.0
    %266 = vmatpush1.msra.mxu0 0.0
    %267 = vmatprep.subr.mxu0 0.0
    %268 = vmatpush1.msra.mxu0 0.0
    %269 = vmatprep.subr.mxu0 0.0
    %270 = vmatpush1.msra.mxu0 0.0
    %271 = vmatprep.subr.mxu0 0.0
    %272 = vmatpush1.msra.mxu0 0.0
    %273 = vmatprep.subr.mxu0 0.0
    %274 = vmatpush1.msra.mxu0 0.0
    %275 = vmatprep.subr.mxu0 0.0
    %276 = vmatpush1.msra.mxu0 0.0
    %277 = vmatprep.subr.mxu0 0.0
    %278 = vmatpush1.msra.mxu0 0.0
    %279 = vmatprep.subr.mxu0 0.0
    %280 = vmatpush1.msra.mxu0 0.0
    %281 = vmatprep.subr.mxu0 0.0
    %282 = vmatpush1.msra.mxu0 0.0
    %283 = vmatprep.subr.mxu0 0.0
    %284 = vmatpush1.msra.mxu0 0.0
    %285 = vmatprep.subr.mxu0 0.0
    %286 = vmatpush1.msra.mxu0 0.0
    %287 = vmatprep.subr.mxu0 0.0
    %288 = vmatpush1.msra.mxu0 0.0
    %289 = vmatprep.subr.mxu0 0.0
    %290 = vmatpush1.msra.mxu0 0.0
    %291 = vmatprep.subr.mxu0 0.0
    %292 = vmatpush1.msra.mxu0 0.0
    %293 = vmatprep.subr.mxu0 0.0
    %294 = vmatpush1.msra.mxu0 0.0
    %295 = vmatprep.subr.mxu0 0.0
    %296 = vmatpush1.msra.mxu0 0.0
    %297 = vmatprep.subr.mxu0 0.0
    %298 = vmatpush1.msra.mxu0 0.0
    %299 = vmatprep.subr.mxu0 0.0
    %300 = vmatpush1.msra.mxu0 0.0
    %301 = vmatprep.subr.mxu0 0.0
    %302 = vmatpush1.msra.mxu0 0.0
    %303 = vmatprep.subr.mxu0 0.0
    %304 = vmatpush1.msra.mxu0 0.0
    %305 = vmatprep.mubr.f32.mxu0 0.0
    %306 = vmatmul.mubr.f32.gmra.mrb[0].mxu0 %v230
    %v307 = vpop.f32.mrb[0].mxu0
    %v308 = vadd.f32 0.0, %v307
    %v309 = vpop.f32.mrb[0].mxu0
    %310 = vmatprep.mubr.f32.mxu0 0.0
    %311 = vmatmul.mubr.f32.gmra.mrb[0].mxu0 %v233
    %v312 = vpop.f32.mrb[0].mxu0
    %v313 = vadd.f32 0.0, %v312
    %v314 = vpop.f32.mrb[0].mxu0
    %315 = vmatprep.mubr.f32.mxu0 0.0
    %316 = vmatmul.mubr.f32.gmra.mrb[0].mxu0 %v236
    %v317 = vpop.f32.mrb[0].mxu0
    %v318 = vadd.f32 0.0, %v317
    %v319 = vpop.f32.mrb[0].mxu0
    %320 = vmatprep.mubr.f32.mxu0 0.0
    %321 = vmatmul.mubr.f32.gmra.mrb[0].mxu0 %v239
    %v322 = vpop.f32.mrb[0].mxu0
    %v323 = vadd.f32 0.0, %v322
    %v324 = vpop.f32.mrb[0].mxu0
    %325 = vdwg.mxu0
    %v327 = vsel %vm228, %v207, 0
    %v330 = vsel %vm228, %v208, 0
    %v333 = vsel %vm228, %v209, 0
    %v336 = vsel %vm228, %v210, 0
    %338 = vmatprep.subr.mxu0 0.0
    %339 = vmatpush1.msra.mxu0 %v211
    %340 = vmatprep.subr.mxu0 0.0
    %341 = vmatpush1.msra.mxu0 %v212
    %342 = vmatprep.subr.mxu0 0.0
    %343 = vmatpush1.msra.mxu0 %v213
    %344 = vmatprep.subr.mxu0 0.0
    %345 = vmatpush1.msra.mxu0 %v214
    %346 = vmatprep.subr.mxu0 0.0
    %347 = vmatpush1.msra.mxu0 %v215
    %348 = vmatprep.subr.mxu0 0.0
    %349 = vmatpush1.msra.mxu0 %v216
    %350 = vmatprep.subr.mxu0 0.0
    %351 = vmatpush1.msra.mxu0 %v217
    %352 = vmatprep.subr.mxu0 0.0
    %353 = vmatpush1.msra.mxu0 %v218
    %354 = vmatprep.subr.mxu0 0.0
    %355 = vmatpush1.msra.mxu0 0.0
    %356 = vmatprep.subr.mxu0 0.0
    %357 = vmatpush1.msra.mxu0 0.0
    %358 = vmatprep.subr.mxu0 0.0
    %359 = vmatpush1.msra.mxu0 0.0
    %360 = vmatprep.subr.mxu0 0.0
    %361 = vmatpush1.msra.mxu0 0.0
    %362 = vmatprep.subr.mxu0 0.0
    %363 = vmatpush1.msra.mxu0 0.0
    %364 = vmatprep.subr.mxu0 0.0
    %365 = vmatpush1.msra.mxu0 0.0
    %366 = vmatprep.subr.mxu0 0.0
    %367 = vmatpush1.msra.mxu0 0.0
    %368 = vmatprep.subr.mxu0 0.0
    %369 = vmatpush1.msra.mxu0 0.0
    %370 = vmatprep.subr.mxu0 0.0
    %371 = vmatpush1.msra.mxu0 0.0
    %372 = vmatprep.subr.mxu0 0.0
    %373 = vmatpush1.msra.mxu0 0.0
    %374 = vmatprep.subr.mxu0 0.0
    %375 = vmatpush1.msra.mxu0 0.0
    %376 = vmatprep.subr.mxu0 0.0
    %377 = vmatpush1.msra.mxu0 0.0
    %378 = vmatprep.subr.mxu0 0.0
    %379 = vmatpush1.msra.mxu0 0.0
    %380 = vmatprep.subr.mxu0 0.0
    %381 = vmatpush1.msra.mxu0 0.0
    %382 = vmatprep.subr.mxu0 0.0
    %383 = vmatpush1.msra.mxu0 0.0
    %384 = vmatprep.subr.mxu0 0.0
    %385 = vmatpush1.msra.mxu0 0.0
    %386 = vmatprep.subr.mxu0 0.0
    %387 = vmatpush1.msra.mxu0 0.0
    %388 = vmatprep.subr.mxu0 0.0
    %389 = vmatpush1.msra.mxu0 0.0
    %390 = vmatprep.subr.mxu0 0.0
    %391 = vmatpush1.msra.mxu0 0.0
    %392 = vmatprep.subr.mxu0 0.0
    %393 = vmatpush1.msra.mxu0 0.0
    %394 = vmatprep.subr.mxu0 0.0
    %395 = vmatpush1.msra.mxu0 0.0
    %396 = vmatprep.subr.mxu0 0.0
    %397 = vmatpush1.msra.mxu0 0.0
    %398 = vmatprep.subr.mxu0 0.0
    %399 = vmatpush1.msra.mxu0 0.0
    %400 = vmatprep.subr.mxu0 0.0
    %401 = vmatpush1.msra.mxu0 0.0
    %402 = vmatprep.mubr.f32.mxu0 0.0
    %403 = vmatmul.mubr.f32.gmra.mrb[0].mxu0 %v327
    %v404 = vpop.f32.mrb[0].mxu0
    %v405 = vadd.f32 %v308, %v404
    %v406 = vpop.f32.mrb[0].mxu0
    %407 = vmatprep.mubr.f32.mxu0 0.0
    %408 = vmatmul.mubr.f32.gmra.mrb[0].mxu0 %v330
    %v409 = vpop.f32.mrb[0].mxu0
    %v410 = vadd.f32 %v313, %v409
    %v411 = vpop.f32.mrb[0].mxu0
    %412 = vmatprep.mubr.f32.mxu0 0.0
    %413 = vmatmul.mubr.f32.gmra.mrb[0].mxu0 %v333
    %v414 = vpop.f32.mrb[0].mxu0
    %v415 = vadd.f32 %v318, %v414
    %v416 = vpop.f32.mrb[0].mxu0
    %417 = vmatprep.mubr.f32.mxu0 0.0
    %418 = vmatmul.mubr.f32.gmra.mrb[0].mxu0 %v336
    %v419 = vpop.f32.mrb[0].mxu0
    %v420 = vadd.f32 %v323, %v419
    %v421 = vpop.f32.mrb[0].mxu0
    %422 = vdwg.mxu0
    %v423 = vrot.slane %v186, 1
    %v424 = vrot.slane %v187, 1
    %v425 = vrot.slane %v188, 1
    %v426 = vrot.slane %v189, 1
    %vm427 = vcmp.lt.s32.totalorder %v110, 7
    %v428 = vsel %vm427, %v425, %v426
    %v429 = vsel %vm427, %v424, %v425
    %v430 = vsel %vm427, %v423, %v424
    %v431 = vsel %vm427, %v426, %v423
    %v432 = vsel %vm182, 1, 0
    %v433 = vsel %vm183, 1, 0
    %v434 = vsel %vm184, 1, 0
    %v435 = vsel %vm185, 1, 0
    %vm436 = vcmp.eq.s32.totalorder %v432, 1
    %vm437 = vcmp.eq.s32.totalorder %v433, 1
    %vm438 = vcmp.eq.s32.totalorder %v434, 1
    %vm439 = vcmp.eq.s32.totalorder %v435, 1
    %v440 = vsel %vm436, %v430, 0.0
    %v441 = vsel %vm437, %v429, 0.0
    %v442 = vsel %vm438, %v428, 0.0
    %v443 = vsel %vm439, %v431, 0.0
    %s444 = scalar_lea.vmem [#allocation2], 128
    %v445 = vld [vmem:[%s444] sm:$0xff]
    %v446 = vld [vmem:[%s444 + $0x8] sm:$0xff]
    %v447 = vld [vmem:[%s444 + $0x10] sm:$0xff]
    %v448 = vld [vmem:[%s444 + $0x18] sm:$0xff]
    %v449 = vld [vmem:[%s444 + $0x20] sm:$0xff]
    %v450 = vld [vmem:[%s444 + $0x28] sm:$0xff]
    %v451 = vld [vmem:[%s444 + $0x30] sm:$0xff]
    %v452 = vld [vmem:[%s444 + $0x38] sm:$0xff]
    %v454 = vsel %vm228, %v440, 0
    %v457 = vsel %vm228, %v441, 0
    %v460 = vsel %vm228, %v442, 0
    %v463 = vsel %vm228, %v443, 0
    %465 = vmatprep.subr.mxu0 0.0
    %466 = vmatpush1.msra.mxu0 %v445
    %467 = vmatprep.subr.mxu0 0.0
    %468 = vmatpush1.msra.mxu0 %v446
    %469 = vmatprep.subr.mxu0 0.0
    %470 = vmatpush1.msra.mxu0 %v447
    %471 = vmatprep.subr.mxu0 0.0
    %472 = vmatpush1.msra.mxu0 %v448
    %473 = vmatprep.subr.mxu0 0.0
    %474 = vmatpush1.msra.mxu0 %v449
    %475 = vmatprep.subr.mxu0 0.0
    %476 = vmatpush1.msra.mxu0 %v450
    %477 = vmatprep.subr.mxu0 0.0
    %478 = vmatpush1.msra.mxu0 %v451
    %479 = vmatprep.subr.mxu0 0.0
    %480 = vmatpush1.msra.mxu0 %v452
    %481 = vmatprep.subr.mxu0 0.0
    %482 = vmatpush1.msra.mxu0 0.0
    %483 = vmatprep.subr.mxu0 0.0
    %484 = vmatpush1.msra.mxu0 0.0
    %485 = vmatprep.subr.mxu0 0.0
    %486 = vmatpush1.msra.mxu0 0.0
    %487 = vmatprep.subr.mxu0 0.0
    %488 = vmatpush1.msra.mxu0 0.0
    %489 = vmatprep.subr.mxu0 0.0
    %490 = vmatpush1.msra.mxu0 0.0
    %491 = vmatprep.subr.mxu0 0.0
    %492 = vmatpush1.msra.mxu0 0.0
    %493 = vmatprep.subr.mxu0 0.0
    %494 = vmatpush1.msra.mxu0 0.0
    %495 = vmatprep.subr.mxu0 0.0
    %496 = vmatpush1.msra.mxu0 0.0
    %497 = vmatprep.subr.mxu0 0.0
    %498 = vmatpush1.msra.mxu0 0.0
    %499 = vmatprep.subr.mxu0 0.0
    %500 = vmatpush1.msra.mxu0 0.0
    %501 = vmatprep.subr.mxu0 0.0
    %502 = vmatpush1.msra.mxu0 0.0
    %503 = vmatprep.subr.mxu0 0.0
    %504 = vmatpush1.msra.mxu0 0.0
    %505 = vmatprep.subr.mxu0 0.0
    %506 = vmatpush1.msra.mxu0 0.0
    %507 = vmatprep.subr.mxu0 0.0
    %508 = vmatpush1.msra.mxu0 0.0
    %509 = vmatprep.subr.mxu0 0.0
    %510 = vmatpush1.msra.mxu0 0.0
    %511 = vmatprep.subr.mxu0 0.0
    %512 = vmatpush1.msra.mxu0 0.0
    %513 = vmatprep.subr.mxu0 0.0
    %514 = vmatpush1.msra.mxu0 0.0
    %515 = vmatprep.subr.mxu0 0.0
    %516 = vmatpush1.msra.mxu0 0.0
    %517 = vmatprep.subr.mxu0 0.0
    %518 = vmatpush1.msra.mxu0 0.0
    %519 = vmatprep.subr.mxu0 0.0
    %520 = vmatpush1.msra.mxu0 0.0
    %521 = vmatprep.subr.mxu0 0.0
    %522 = vmatpush1.msra.mxu0 0.0
    %523 = vmatprep.subr.mxu0 0.0
    %524 = vmatpush1.msra.mxu0 0.0
    %525 = vmatprep.subr.mxu0 0.0
    %526 = vmatpush1.msra.mxu0 0.0
    %527 = vmatprep.subr.mxu0 0.0
    %528 = vmatpush1.msra.mxu0 0.0
    %529 = vmatprep.mubr.f32.mxu0 0.0
    %530 = vmatmul.mubr.f32.gmra.mrb[0].mxu0 %v454
    %v531 = vpop.f32.mrb[0].mxu0
    %v532 = vadd.f32 0.0, %v531
    %v533 = vpop.f32.mrb[0].mxu0
    %534 = vmatprep.mubr.f32.mxu0 0.0
    %535 = vmatmul.mubr.f32.gmra.mrb[0].mxu0 %v457
    %v536 = vpop.f32.mrb[0].mxu0
    %v537 = vadd.f32 0.0, %v536
    %v538 = vpop.f32.mrb[0].mxu0
    %539 = vmatprep.mubr.f32.mxu0 0.0
    %540 = vmatmul.mubr.f32.gmra.mrb[0].mxu0 %v460
    %v541 = vpop.f32.mrb[0].mxu0
    %v542 = vadd.f32 0.0, %v541
    %v543 = vpop.f32.mrb[0].mxu0
    %544 = vmatprep.mubr.f32.mxu0 0.0
    %545 = vmatmul.mubr.f32.gmra.mrb[0].mxu0 %v463
    %v546 = vpop.f32.mrb[0].mxu0
    %v547 = vadd.f32 0.0, %v546
    %v548 = vpop.f32.mrb[0].mxu0
    %549 = vdwg.mxu0
    %v550 = vadd.f32 %v405, %v532
    %v551 = vadd.f32 %v410, %v537
    %v552 = vadd.f32 %v415, %v542
    %v553 = vadd.f32 %v420, %v547
    %v554 = vlaneseq
    %v555 = vshrl.u32 %v554, 7
    %v556 = vsub.s32 0, %v555
    %v557 = vrot.slane %v86, %v556
    %v558 = vadd.f32 %v550, %v557
    %v559 = vadd.f32 %v551, %v557
    %v560 = vadd.f32 %v552, %v557
    %v561 = vadd.f32 %v553, %v557
    %v562 = vmax.f32 %v558, 0.0
    %v563 = vmax.f32 %v559, 0.0
    %v564 = vmax.f32 %v560, 0.0
    %v565 = vmax.f32 %v561, 0.0
    %vm566 = vcmask 261120
    %v568 = vsel %vm566, %v91, 0
    %570 = vmatprep.subr.mxu0 0.0
    %571 = vmatpush1.msra.mxu0 %v562
    %572 = vmatprep.subr.mxu0 0.0
    %573 = vmatpush1.msra.mxu0 %v563
    %574 = vmatprep.subr.mxu0 0.0
    %575 = vmatpush1.msra.mxu0 %v564
    %576 = vmatprep.subr.mxu0 0.0
    %577 = vmatpush1.msra.mxu0 %v565
    %578 = vmatprep.subr.mxu0 0.0
    %579 = vmatpush1.msra.mxu0 0.0
    %580 = vmatprep.subr.mxu0 0.0
    %581 = vmatpush1.msra.mxu0 0.0
    %582 = vmatprep.subr.mxu0 0.0
    %583 = vmatpush1.msra.mxu0 0.0
    %584 = vmatprep.subr.mxu0 0.0
    %585 = vmatpush1.msra.mxu0 0.0
    %586 = vmatprep.subr.mxu0 0.0
    %587 = vmatpush1.msra.mxu0 0.0
    %588 = vmatprep.subr.mxu0 0.0
    %589 = vmatpush1.msra.mxu0 0.0
    %590 = vmatprep.subr.mxu0 0.0
    %591 = vmatpush1.msra.mxu0 0.0
    %592 = vmatprep.subr.mxu0 0.0
    %593 = vmatpush1.msra.mxu0 0.0
    %594 = vmatprep.subr.mxu0 0.0
    %595 = vmatpush1.msra.mxu0 0.0
    %596 = vmatprep.subr.mxu0 0.0
    %597 = vmatpush1.msra.mxu0 0.0
    %598 = vmatprep.subr.mxu0 0.0
    %599 = vmatpush1.msra.mxu0 0.0
    %600 = vmatprep.subr.mxu0 0.0
    %601 = vmatpush1.msra.mxu0 0.0
    %602 = vmatprep.subr.mxu0 0.0
    %603 = vmatpush1.msra.mxu0 0.0
    %604 = vmatprep.subr.mxu0 0.0
    %605 = vmatpush1.msra.mxu0 0.0
    %606 = vmatprep.subr.mxu0 0.0
    %607 = vmatpush1.msra.mxu0 0.0
    %608 = vmatprep.subr.mxu0 0.0
    %609 = vmatpush1.msra.mxu0 0.0
    %610 = vmatprep.subr.mxu0 0.0
    %611 = vmatpush1.msra.mxu0 0.0
    %612 = vmatprep.subr.mxu0 0.0
    %613 = vmatpush1.msra.mxu0 0.0
    %614 = vmatprep.subr.mxu0 0.0
    %615 = vmatpush1.msra.mxu0 0.0
    %616 = vmatprep.subr.mxu0 0.0
    %617 = vmatpush1.msra.mxu0 0.0
    %618 = vmatprep.subr.mxu0 0.0
    %619 = vmatpush1.msra.mxu0 0.0
    %620 = vmatprep.subr.mxu0 0.0
    %621 = vmatpush1.msra.mxu0 0.0
    %622 = vmatprep.subr.mxu0 0.0
    %623 = vmatpush1.msra.mxu0 0.0
    %624 = vmatprep.subr.mxu0 0.0
    %625 = vmatpush1.msra.mxu0 0.0
    %626 = vmatprep.subr.mxu0 0.0
    %627 = vmatpush1.msra.mxu0 0.0
    %628 = vmatprep.subr.mxu0 0.0
    %629 = vmatpush1.msra.mxu0 0.0
    %630 = vmatprep.subr.mxu0 0.0
    %631 = vmatpush1.msra.mxu0 0.0
    %632 = vmatprep.subr.mxu0 0.0
    %633 = vmatpush1.msra.mxu0 0.0
    %634 = vmatprep.mubr.f32.mxu0 0.0
    %635 = vmatmul.mubr.f32.gmra.mrb[0].mxu0 %v568
    %v636 = vpop.f32.mrb[0].mxu0
    %v637 = vadd.f32 0.0, %v636
    %v638 = vpop.f32.mrb[0].mxu0
    %639 = vdwg.mxu0
    %640 = vmatprep.subr.mxu0 0.0
    %641 = vmatpush1.msra.mxu0 %v92
    %642 = vmatprep.subr.mxu0 0.0
    %643 = vmatpush1.msra.mxu0 %v93
    %644 = vmatprep.subr.mxu0 0.0
    %645 = vmatpush1.msra.mxu0 %v94
    %646 = vmatprep.subr.mxu0 0.0
    %647 = vmatpush1.msra.mxu0 %v95
    %648 = vmatprep.subr.mxu0 0.0
    %649 = vmatpush1.msra.mxu0 %v96
    %650 = vmatprep.subr.mxu0 0.0
    %651 = vmatpush1.msra.mxu0 %v97
    %652 = vmatprep.subr.mxu0 0.0
    %653 = vmatpush1.msra.mxu0 %v98
    %654 = vmatprep.subr.mxu0 0.0
    %655 = vmatpush1.msra.mxu0 %v99
    %656 = vmatprep.subr.mxu0 0.0
    %657 = vmatpush1.msra.mxu0 %v100
    %658 = vmatprep.subr.mxu0 0.0
    %659 = vmatpush1.msra.mxu0 %v101
    %660 = vmatprep.subr.mxu0 0.0
    %661 = vmatpush1.msra.mxu0 %v102
    %662 = vmatprep.subr.mxu0 0.0
    %663 = vmatpush1.msra.mxu0 %v103
    %664 = vmatprep.subr.mxu0 0.0
    %665 = vmatpush1.msra.mxu0 %v104
    %666 = vmatprep.subr.mxu0 0.0
    %667 = vmatpush1.msra.mxu0 %v105
    %668 = vmatprep.subr.mxu0 0.0
    %669 = vmatpush1.msra.mxu0 %v106
    %670 = vmatprep.subr.mxu0 0.0
    %671 = vmatpush1.msra.mxu0 %v107
    %672 = vmatprep.subr.mxu0 0.0
    %673 = vmatpush1.msra.mxu0 0.0
    %674 = vmatprep.subr.mxu0 0.0
    %675 = vmatpush1.msra.mxu0 0.0
    %676 = vmatprep.subr.mxu0 0.0
    %677 = vmatpush1.msra.mxu0 0.0
    %678 = vmatprep.subr.mxu0 0.0
    %679 = vmatpush1.msra.mxu0 0.0
    %680 = vmatprep.subr.mxu0 0.0
    %681 = vmatpush1.msra.mxu0 0.0
    %682 = vmatprep.subr.mxu0 0.0
    %683 = vmatpush1.msra.mxu0 0.0
    %684 = vmatprep.subr.mxu0 0.0
    %685 = vmatpush1.msra.mxu0 0.0
    %686 = vmatprep.subr.mxu0 0.0
    %687 = vmatpush1.msra.mxu0 0.0
    %688 = vmatprep.subr.mxu0 0.0
    %689 = vmatpush1.msra.mxu0 0.0
    %690 = vmatprep.subr.mxu0 0.0
    %691 = vmatpush1.msra.mxu0 0.0
    %692 = vmatprep.subr.mxu0 0.0
    %693 = vmatpush1.msra.mxu0 0.0
    %694 = vmatprep.subr.mxu0 0.0
    %695 = vmatpush1.msra.mxu0 0.0
    %696 = vmatprep.subr.mxu0 0.0
    %697 = vmatpush1.msra.mxu0 0.0
    %698 = vmatprep.subr.mxu0 0.0
    %699 = vmatpush1.msra.mxu0 0.0
    %700 = vmatprep.subr.mxu0 0.0
    %701 = vmatpush1.msra.mxu0 0.0
    %702 = vmatprep.subr.mxu0 0.0
    %703 = vmatpush1.msra.mxu0 0.0
    %704 = vmatprep.mubr.f32.mxu0 0.0
    %705 = vmatmul.mubr.f32.gmra.mrb[0].mxu0 %v637
    %v706 = vpop.f32.mrb[0].mxu0
    %v707 = vadd.f32 0.0, %v706
    %v708 = vpop.f32.mrb[0].mxu0
    %709 = vdwg.mxu0
    %vm710 = vcmask 64512
    %v712 = vsel %vm710, %v87, 0
    %v715 = vsel %vm710, %v88, 0
    %v718 = vsel %vm710, %v89, 0
    %v721 = vsel %vm710, %v90, 0
    %723 = vmatprep.subr.mxu0 0.0
    %724 = vmatpush1.msra.mxu0 %v707
    %725 = vmatprep.subr.mxu0 0.0
    %726 = vmatpush1.msra.mxu0 0.0
    %727 = vmatprep.subr.mxu0 0.0
    %728 = vmatpush1.msra.mxu0 0.0
    %729 = vmatprep.subr.mxu0 0.0
    %730 = vmatpush1.msra.mxu0 0.0
    %731 = vmatprep.subr.mxu0 0.0
    %732 = vmatpush1.msra.mxu0 0.0
    %733 = vmatprep.subr.mxu0 0.0
    %734 = vmatpush1.msra.mxu0 0.0
    %735 = vmatprep.subr.mxu0 0.0
    %736 = vmatpush1.msra.mxu0 0.0
    %737 = vmatprep.subr.mxu0 0.0
    %738 = vmatpush1.msra.mxu0 0.0
    %739 = vmatprep.subr.mxu0 0.0
    %740 = vmatpush1.msra.mxu0 0.0
    %741 = vmatprep.subr.mxu0 0.0
    %742 = vmatpush1.msra.mxu0 0.0
    %743 = vmatprep.subr.mxu0 0.0
    %744 = vmatpush1.msra.mxu0 0.0
    %745 = vmatprep.subr.mxu0 0.0
    %746 = vmatpush1.msra.mxu0 0.0
    %747 = vmatprep.subr.mxu0 0.0
    %748 = vmatpush1.msra.mxu0 0.0
    %749 = vmatprep.subr.mxu0 0.0
    %750 = vmatpush1.msra.mxu0 0.0
    %751 = vmatprep.subr.mxu0 0.0
    %752 = vmatpush1.msra.mxu0 0.0
    %753 = vmatprep.subr.mxu0 0.0
    %754 = vmatpush1.msra.mxu0 0.0
    %755 = vmatprep.subr.mxu0 0.0
    %756 = vmatpush1.msra.mxu0 0.0
    %757 = vmatprep.subr.mxu0 0.0
    %758 = vmatpush1.msra.mxu0 0.0
    %759 = vmatprep.subr.mxu0 0.0
    %760 = vmatpush1.msra.mxu0 0.0
    %761 = vmatprep.subr.mxu0 0.0
    %762 = vmatpush1.msra.mxu0 0.0
    %763 = vmatprep.subr.mxu0 0.0
    %764 = vmatpush1.msra.mxu0 0.0
    %765 = vmatprep.subr.mxu0 0.0
    %766 = vmatpush1.msra.mxu0 0.0
    %767 = vmatprep.subr.mxu0 0.0
    %768 = vmatpush1.msra.mxu0 0.0
    %769 = vmatprep.subr.mxu0 0.0
    %770 = vmatpush1.msra.mxu0 0.0
    %771 = vmatprep.subr.mxu0 0.0
    %772 = vmatpush1.msra.mxu0 0.0
    %773 = vmatprep.subr.mxu0 0.0
    %774 = vmatpush1.msra.mxu0 0.0
    %775 = vmatprep.subr.mxu0 0.0
    %776 = vmatpush1.msra.mxu0 0.0
    %777 = vmatprep.subr.mxu0 0.0
    %778 = vmatpush1.msra.mxu0 0.0
    %779 = vmatprep.subr.mxu0 0.0
    %780 = vmatpush1.msra.mxu0 0.0
    %781 = vmatprep.subr.mxu0 0.0
    %782 = vmatpush1.msra.mxu0 0.0
    %783 = vmatprep.subr.mxu0 0.0
    %784 = vmatpush1.msra.mxu0 0.0
    %785 = vmatprep.subr.mxu0 0.0
    %786 = vmatpush1.msra.mxu0 0.0
    %787 = vmatprep.mubr.f32.mxu0 0.0
    %788 = vmatmul.mubr.f32.gmra.mrb[0].mxu0 %v712
    %v789 = vpop.f32.mrb[0].mxu0
    %v790 = vadd.f32 0.0, %v789
    %v791 = vpop.f32.mrb[0].mxu0
    %792 = vmatprep.mubr.f32.mxu0 0.0
    %793 = vmatmul.mubr.f32.gmra.mrb[0].mxu0 %v715
    %v794 = vpop.f32.mrb[0].mxu0
    %v795 = vadd.f32 0.0, %v794
    %v796 = vpop.f32.mrb[0].mxu0
    %797 = vmatprep.mubr.f32.mxu0 0.0
    %798 = vmatmul.mubr.f32.gmra.mrb[0].mxu0 %v718
    %v799 = vpop.f32.mrb[0].mxu0
    %v800 = vadd.f32 0.0, %v799
    %v801 = vpop.f32.mrb[0].mxu0
    %802 = vmatprep.mubr.f32.mxu0 0.0
    %803 = vmatmul.mubr.f32.gmra.mrb[0].mxu0 %v721
    %v804 = vpop.f32.mrb[0].mxu0
    %v805 = vadd.f32 0.0, %v804
    %v806 = vpop.f32.mrb[0].mxu0
    %807 = vdwg.mxu0
    %v809 = vsel %vm710, %v790, 0
    %v812 = vsel %vm710, %v795, 0
    %v815 = vsel %vm710, %v800, 0
    %v818 = vsel %vm710, %v805, 0
    %820 = vmatprep.subr.mxu0 0.0
    %821 = vmatpush1.msra.mxu0 %v108
    %822 = vmatprep.subr.mxu0 0.0
    %823 = vmatpush1.msra.mxu0 0.0
    %824 = vmatprep.subr.mxu0 0.0
    %825 = vmatpush1.msra.mxu0 0.0
    %826 = vmatprep.subr.mxu0 0.0
    %827 = vmatpush1.msra.mxu0 0.0
    %828 = vmatprep.subr.mxu0 0.0
    %829 = vmatpush1.msra.mxu0 0.0
    %830 = vmatprep.subr.mxu0 0.0
    %831 = vmatpush1.msra.mxu0 0.0
    %832 = vmatprep.subr.mxu0 0.0
    %833 = vmatpush1.msra.mxu0 0.0
    %834 = vmatprep.subr.mxu0 0.0
    %835 = vmatpush1.msra.mxu0 0.0
    %836 = vmatprep.subr.mxu0 0.0
    %837 = vmatpush1.msra.mxu0 0.0
    %838 = vmatprep.subr.mxu0 0.0
    %839 = vmatpush1.msra.mxu0 0.0
    %840 = vmatprep.subr.mxu0 0.0
    %841 = vmatpush1.msra.mxu0 0.0
    %842 = vmatprep.subr.mxu0 0.0
    %843 = vmatpush1.msra.mxu0 0.0
    %844 = vmatprep.subr.mxu0 0.0
    %845 = vmatpush1.msra.mxu0 0.0
    %846 = vmatprep.subr.mxu0 0.0
    %847 = vmatpush1.msra.mxu0 0.0
    %848 = vmatprep.subr.mxu0 0.0
    %849 = vmatpush1.msra.mxu0 0.0
    %850 = vmatprep.subr.mxu0 0.0
    %851 = vmatpush1.msra.mxu0 0.0
    %852 = vmatprep.subr.mxu0 0.0
    %853 = vmatpush1.msra.mxu0 0.0
    %854 = vmatprep.subr.mxu0 0.0
    %855 = vmatpush1.msra.mxu0 0.0
    %856 = vmatprep.subr.mxu0 0.0
    %857 = vmatpush1.msra.mxu0 0.0
    %858 = vmatprep.subr.mxu0 0.0
    %859 = vmatpush1.msra.mxu0 0.0
    %860 = vmatprep.subr.mxu0 0.0
    %861 = vmatpush1.msra.mxu0 0.0
    %862 = vmatprep.subr.mxu0 0.0
    %863 = vmatpush1.msra.mxu0 0.0
    %864 = vmatprep.subr.mxu0 0.0
    %865 = vmatpush1.msra.mxu0 0.0
    %866 = vmatprep.subr.mxu0 0.0
    %867 = vmatpush1.msra.mxu0 0.0
    %868 = vmatprep.subr.mxu0 0.0
    %869 = vmatpush1.msra.mxu0 0.0
    %870 = vmatprep.subr.mxu0 0.0
    %871 = vmatpush1.msra.mxu0 0.0
    %872 = vmatprep.subr.mxu0 0.0
    %873 = vmatpush1.msra.mxu0 0.0
    %874 = vmatprep.subr.mxu0 0.0
    %875 = vmatpush1.msra.mxu0 0.0
    %876 = vmatprep.subr.mxu0 0.0
    %877 = vmatpush1.msra.mxu0 0.0
    %878 = vmatprep.subr.mxu0 0.0
    %879 = vmatpush1.msra.mxu0 0.0
    %880 = vmatprep.subr.mxu0 0.0
    %881 = vmatpush1.msra.mxu0 0.0
    %882 = vmatprep.subr.mxu0 0.0
    %883 = vmatpush1.msra.mxu0 0.0
    %884 = vmatprep.mubr.f32.mxu0 0.0
    %885 = vmatmul.mubr.f32.gmra.mrb[0].mxu0 %v809
    %v886 = vpop.f32.mrb[0].mxu0
    %v887 = vadd.f32 0.0, %v886
    %v888 = vpop.f32.mrb[0].mxu0
    %889 = vmatprep.mubr.f32.mxu0 0.0
    %890 = vmatmul.mubr.f32.gmra.mrb[0].mxu0 %v812
    %v891 = vpop.f32.mrb[0].mxu0
    %v892 = vadd.f32 0.0, %v891
    %v893 = vpop.f32.mrb[0].mxu0
    %894 = vmatprep.mubr.f32.mxu0 0.0
    %895 = vmatmul.mubr.f32.gmra.mrb[0].mxu0 %v815
    %v896 = vpop.f32.mrb[0].mxu0
    %v897 = vadd.f32 0.0, %v896
    %v898 = vpop.f32.mrb[0].mxu0
    %899 = vmatprep.mubr.f32.mxu0 0.0
    %900 = vmatmul.mubr.f32.gmra.mrb[0].mxu0 %v818
    %v901 = vpop.f32.mrb[0].mxu0
    %v902 = vadd.f32 0.0, %v901
    %v903 = vpop.f32.mrb[0].mxu0
    %904 = vdwg.mxu0
    %v905 = vmul.f32 %v887, 0.001953125
    %v906 = vmul.f32 %v892, 0.001953125
    %v907 = vmul.f32 %v897, 0.001953125
    %v908 = vmul.f32 %v902, 0.001953125
    %v909 = vsub.f32 %v562, %v905
    %v910 = vsub.f32 %v563, %v906
    %v911 = vsub.f32 %v564, %v907
    %v912 = vsub.f32 %v565, %v908
    %v913 = vmul.f32 %v909, %v909
    %v914 = vmul.f32 %v910, %v910
    %v915 = vmul.f32 %v911, %v911
    %v916 = vmul.f32 %v912, %v912
    %917 = vmatprep.subr.mxu0 0.0
    %918 = vmatpush1.msra.mxu0 %v913
    %919 = vmatprep.subr.mxu0 0.0
    %920 = vmatpush1.msra.mxu0 %v914
    %921 = vmatprep.subr.mxu0 0.0
    %922 = vmatpush1.msra.mxu0 %v915
    %923 = vmatprep.subr.mxu0 0.0
    %924 = vmatpush1.msra.mxu0 %v916
    %925 = vmatprep.subr.mxu0 0.0
    %926 = vmatpush1.msra.mxu0 0.0
    %927 = vmatprep.subr.mxu0 0.0
    %928 = vmatpush1.msra.mxu0 0.0
    %929 = vmatprep.subr.mxu0 0.0
    %930 = vmatpush1.msra.mxu0 0.0
    %931 = vmatprep.subr.mxu0 0.0
    %932 = vmatpush1.msra.mxu0 0.0
    %933 = vmatprep.subr.mxu0 0.0
    %934 = vmatpush1.msra.mxu0 0.0
    %935 = vmatprep.subr.mxu0 0.0
    %936 = vmatpush1.msra.mxu0 0.0
    %937 = vmatprep.subr.mxu0 0.0
    %938 = vmatpush1.msra.mxu0 0.0
    %939 = vmatprep.subr.mxu0 0.0
    %940 = vmatpush1.msra.mxu0 0.0
    %941 = vmatprep.subr.mxu0 0.0
    %942 = vmatpush1.msra.mxu0 0.0
    %943 = vmatprep.subr.mxu0 0.0
    %944 = vmatpush1.msra.mxu0 0.0
    %945 = vmatprep.subr.mxu0 0.0
    %946 = vmatpush1.msra.mxu0 0.0
    %947 = vmatprep.subr.mxu0 0.0
    %948 = vmatpush1.msra.mxu0 0.0
    %949 = vmatprep.subr.mxu0 0.0
    %950 = vmatpush1.msra.mxu0 0.0
    %951 = vmatprep.subr.mxu0 0.0
    %952 = vmatpush1.msra.mxu0 0.0
    %953 = vmatprep.subr.mxu0 0.0
    %954 = vmatpush1.msra.mxu0 0.0
    %955 = vmatprep.subr.mxu0 0.0
    %956 = vmatpush1.msra.mxu0 0.0
    %957 = vmatprep.subr.mxu0 0.0
    %958 = vmatpush1.msra.mxu0 0.0
    %959 = vmatprep.subr.mxu0 0.0
    %960 = vmatpush1.msra.mxu0 0.0
    %961 = vmatprep.subr.mxu0 0.0
    %962 = vmatpush1.msra.mxu0 0.0
    %963 = vmatprep.subr.mxu0 0.0
    %964 = vmatpush1.msra.mxu0 0.0
    %965 = vmatprep.subr.mxu0 0.0
    %966 = vmatpush1.msra.mxu0 0.0
    %967 = vmatprep.subr.mxu0 0.0
    %968 = vmatpush1.msra.mxu0 0.0
    %969 = vmatprep.subr.mxu0 0.0
    %970 = vmatpush1.msra.mxu0 0.0
    %971 = vmatprep.subr.mxu0 0.0
    %972 = vmatpush1.msra.mxu0 0.0
    %973 = vmatprep.subr.mxu0 0.0
    %974 = vmatpush1.msra.mxu0 0.0
    %975 = vmatprep.subr.mxu0 0.0
    %976 = vmatpush1.msra.mxu0 0.0
    %977 = vmatprep.subr.mxu0 0.0
    %978 = vmatpush1.msra.mxu0 0.0
    %979 = vmatprep.subr.mxu0 0.0
    %980 = vmatpush1.msra.mxu0 0.0
    %981 = vmatprep.mubr.f32.mxu0 0.0
    %982 = vmatmul.mubr.f32.gmra.mrb[0].mxu0 %v568
    %v983 = vpop.f32.mrb[0].mxu0
    %v984 = vadd.f32 0.0, %v983
    %v985 = vpop.f32.mrb[0].mxu0
    %986 = vdwg.mxu0
    %987 = vmatprep.subr.mxu0 0.0
    %988 = vmatpush1.msra.mxu0 %v92
    %989 = vmatprep.subr.mxu0 0.0
    %990 = vmatpush1.msra.mxu0 %v93
    %991 = vmatprep.subr.mxu0 0.0
    %992 = vmatpush1.msra.mxu0 %v94
    %993 = vmatprep.subr.mxu0 0.0
    %994 = vmatpush1.msra.mxu0 %v95
    %995 = vmatprep.subr.mxu0 0.0
    %996 = vmatpush1.msra.mxu0 %v96
    %997 = vmatprep.subr.mxu0 0.0
    %998 = vmatpush1.msra.mxu0 %v97
    %999 = vmatprep.subr.mxu0 0.0
    %1000 = vmatpush1.msra.mxu0 %v98
    %1001 = vmatprep.subr.mxu0 0.0
    %1002 = vmatpush1.msra.mxu0 %v99
    %1003 = vmatprep.subr.mxu0 0.0
    %1004 = vmatpush1.msra.mxu0 %v100
    %1005 = vmatprep.subr.mxu0 0.0
    %1006 = vmatpush1.msra.mxu0 %v101
    %1007 = vmatprep.subr.mxu0 0.0
    %1008 = vmatpush1.msra.mxu0 %v102
    %1009 = vmatprep.subr.mxu0 0.0
    %1010 = vmatpush1.msra.mxu0 %v103
    %1011 = vmatprep.subr.mxu0 0.0
    %1012 = vmatpush1.msra.mxu0 %v104
    %1013 = vmatprep.subr.mxu0 0.0
    %1014 = vmatpush1.msra.mxu0 %v105
    %1015 = vmatprep.subr.mxu0 0.0
    %1016 = vmatpush1.msra.mxu0 %v106
    %1017 = vmatprep.subr.mxu0 0.0
    %1018 = vmatpush1.msra.mxu0 %v107
    %1019 = vmatprep.subr.mxu0 0.0
    %1020 = vmatpush1.msra.mxu0 0.0
    %1021 = vmatprep.subr.mxu0 0.0
    %1022 = vmatpush1.msra.mxu0 0.0
    %1023 = vmatprep.subr.mxu0 0.0
    %1024 = vmatpush1.msra.mxu0 0.0
    %1025 = vmatprep.subr.mxu0 0.0
    %1026 = vmatpush1.msra.mxu0 0.0
    %1027 = vmatprep.subr.mxu0 0.0
    %1028 = vmatpush1.msra.mxu0 0.0
    %1029 = vmatprep.subr.mxu0 0.0
    %1030 = vmatpush1.msra.mxu0 0.0
    %1031 = vmatprep.subr.mxu0 0.0
    %1032 = vmatpush1.msra.mxu0 0.0
    %1033 = vmatprep.subr.mxu0 0.0
    %1034 = vmatpush1.msra.mxu0 0.0
    %1035 = vmatprep.subr.mxu0 0.0
    %1036 = vmatpush1.msra.mxu0 0.0
    %1037 = vmatprep.subr.mxu0 0.0
    %1038 = vmatpush1.msra.mxu0 0.0
    %1039 = vmatprep.subr.mxu0 0.0
    %1040 = vmatpush1.msra.mxu0 0.0
    %1041 = vmatprep.subr.mxu0 0.0
    %1042 = vmatpush1.msra.mxu0 0.0
    %1043 = vmatprep.subr.mxu0 0.0
    %1044 = vmatpush1.msra.mxu0 0.0
    %1045 = vmatprep.subr.mxu0 0.0
    %1046 = vmatpush1.msra.mxu0 0.0
    %1047 = vmatprep.subr.mxu0 0.0
    %1048 = vmatpush1.msra.mxu0 0.0
    %1049 = vmatprep.subr.mxu0 0.0
    %1050 = vmatpush1.msra.mxu0 0.0
    %1051 = vmatprep.mubr.f32.mxu0 0.0
    %1052 = vmatmul.mubr.f32.gmra.mrb[0].mxu0 %v984
    %v1053 = vpop.f32.mrb[0].mxu0
    %v1054 = vadd.f32 0.0, %v1053
    %v1055 = vpop.f32.mrb[0].mxu0
    %1056 = vdwg.mxu0
    %1057 = vmatprep.subr.mxu0 0.0
    %1058 = vmatpush1.msra.mxu0 %v1054
    %1059 = vmatprep.subr.mxu0 0.0
    %1060 = vmatpush1.msra.mxu0 0.0
    %1061 = vmatprep.subr.mxu0 0.0
    %1062 = vmatpush1.msra.mxu0 0.0
    %1063 = vmatprep.subr.mxu0 0.0
    %1064 = vmatpush1.msra.mxu0 0.0
    %1065 = vmatprep.subr.mxu0 0.0
    %1066 = vmatpush1.msra.mxu0 0.0
    %1067 = vmatprep.subr.mxu0 0.0
    %1068 = vmatpush1.msra.mxu0 0.0
    %1069 = vmatprep.subr.mxu0 0.0
    %1070 = vmatpush1.msra.mxu0 0.0
    %1071 = vmatprep.subr.mxu0 0.0
    %1072 = vmatpush1.msra.mxu0 0.0
    %1073 = vmatprep.subr.mxu0 0.0
    %1074 = vmatpush1.msra.mxu0 0.0
    %1075 = vmatprep.subr.mxu0 0.0
    %1076 = vmatpush1.msra.mxu0 0.0
    %1077 = vmatprep.subr.mxu0 0.0
    %1078 = vmatpush1.msra.mxu0 0.0
    %1079 = vmatprep.subr.mxu0 0.0
    %1080 = vmatpush1.msra.mxu0 0.0
    %1081 = vmatprep.subr.mxu0 0.0
    %1082 = vmatpush1.msra.mxu0 0.0
    %1083 = vmatprep.subr.mxu0 0.0
    %1084 = vmatpush1.msra.mxu0 0.0
    %1085 = vmatprep.subr.mxu0 0.0
    %1086 = vmatpush1.msra.mxu0 0.0
    %1087 = vmatprep.subr.mxu0 0.0
    %1088 = vmatpush1.msra.mxu0 0.0
    %1089 = vmatprep.subr.mxu0 0.0
    %1090 = vmatpush1.msra.mxu0 0.0
    %1091 = vmatprep.subr.mxu0 0.0
    %1092 = vmatpush1.msra.mxu0 0.0
    %1093 = vmatprep.subr.mxu0 0.0
    %1094 = vmatpush1.msra.mxu0 0.0
    %1095 = vmatprep.subr.mxu0 0.0
    %1096 = vmatpush1.msra.mxu0 0.0
    %1097 = vmatprep.subr.mxu0 0.0
    %1098 = vmatpush1.msra.mxu0 0.0
    %1099 = vmatprep.subr.mxu0 0.0
    %1100 = vmatpush1.msra.mxu0 0.0
    %1101 = vmatprep.subr.mxu0 0.0
    %1102 = vmatpush1.msra.mxu0 0.0
    %1103 = vmatprep.subr.mxu0 0.0
    %1104 = vmatpush1.msra.mxu0 0.0
    %1105 = vmatprep.subr.mxu0 0.0
    %1106 = vmatpush1.msra.mxu0 0.0
    %1107 = vmatprep.subr.mxu0 0.0
    %1108 = vmatpush1.msra.mxu0 0.0
    %1109 = vmatprep.subr.mxu0 0.0
    %1110 = vmatpush1.msra.mxu0 0.0
    %1111 = vmatprep.subr.mxu0 0.0
    %1112 = vmatpush1.msra.mxu0 0.0
    %1113 = vmatprep.subr.mxu0 0.0
    %1114 = vmatpush1.msra.mxu0 0.0
    %1115 = vmatprep.subr.mxu0 0.0
    %1116 = vmatpush1.msra.mxu0 0.0
    %1117 = vmatprep.subr.mxu0 0.0
    %1118 = vmatpush1.msra.mxu0 0.0
    %1119 = vmatprep.subr.mxu0 0.0
    %1120 = vmatpush1.msra.mxu0 0.0
    %1121 = vmatprep.mubr.f32.mxu0 0.0
    %1122 = vmatmul.mubr.f32.gmra.mrb[0].mxu0 %v712
    %v1123 = vpop.f32.mrb[0].mxu0
    %v1124 = vadd.f32 0.0, %v1123
    %v1125 = vpop.f32.mrb[0].mxu0
    %1126 = vmatprep.mubr.f32.mxu0 0.0
    %1127 = vmatmul.mubr.f32.gmra.mrb[0].mxu0 %v715
    %v1128 = vpop.f32.mrb[0].mxu0
    %v1129 = vadd.f32 0.0, %v1128
    %v1130 = vpop.f32.mrb[0].mxu0
    %1131 = vmatprep.mubr.f32.mxu0 0.0
    %1132 = vmatmul.mubr.f32.gmra.mrb[0].mxu0 %v718
    %v1133 = vpop.f32.mrb[0].mxu0
    %v1134 = vadd.f32 0.0, %v1133
    %v1135 = vpop.f32.mrb[0].mxu0
    %1136 = vmatprep.mubr.f32.mxu0 0.0
    %1137 = vmatmul.mubr.f32.gmra.mrb[0].mxu0 %v721
    %v1138 = vpop.f32.mrb[0].mxu0
    %v1139 = vadd.f32 0.0, %v1138
    %v1140 = vpop.f32.mrb[0].mxu0
    %1141 = vdwg.mxu0
    %v1143 = vsel %vm710, %v1124, 0
    %v1146 = vsel %vm710, %v1129, 0
    %v1149 = vsel %vm710, %v1134, 0
    %v1152 = vsel %vm710, %v1139, 0
    %1154 = vmatprep.subr.mxu0 0.0
    %1155 = vmatpush1.msra.mxu0 %v108
    %1156 = vmatprep.subr.mxu0 0.0
    %1157 = vmatpush1.msra.mxu0 0.0
    %1158 = vmatprep.subr.mxu0 0.0
    %1159 = vmatpush1.msra.mxu0 0.0
    %1160 = vmatprep.subr.mxu0 0.0
    %1161 = vmatpush1.msra.mxu0 0.0
    %1162 = vmatprep.subr.mxu0 0.0
    %1163 = vmatpush1.msra.mxu0 0.0
    %1164 = vmatprep.subr.mxu0 0.0
    %1165 = vmatpush1.msra.mxu0 0.0
    %1166 = vmatprep.subr.mxu0 0.0
    %1167 = vmatpush1.msra.mxu0 0.0
    %1168 = vmatprep.subr.mxu0 0.0
    %1169 = vmatpush1.msra.mxu0 0.0
    %1170 = vmatprep.subr.mxu0 0.0
    %1171 = vmatpush1.msra.mxu0 0.0
    %1172 = vmatprep.subr.mxu0 0.0
    %1173 = vmatpush1.msra.mxu0 0.0
    %1174 = vmatprep.subr.mxu0 0.0
    %1175 = vmatpush1.msra.mxu0 0.0
    %1176 = vmatprep.subr.mxu0 0.0
    %1177 = vmatpush1.msra.mxu0 0.0
    %1178 = vmatprep.subr.mxu0 0.0
    %1179 = vmatpush1.msra.mxu0 0.0
    %1180 = vmatprep.subr.mxu0 0.0
    %1181 = vmatpush1.msra.mxu0 0.0
    %1182 = vmatprep.subr.mxu0 0.0
    %1183 = vmatpush1.msra.mxu0 0.0
    %1184 = vmatprep.subr.mxu0 0.0
    %1185 = vmatpush1.msra.mxu0 0.0
    %1186 = vmatprep.subr.mxu0 0.0
    %1187 = vmatpush1.msra.mxu0 0.0
    %1188 = vmatprep.subr.mxu0 0.0
    %1189 = vmatpush1.msra.mxu0 0.0
    %1190 = vmatprep.subr.mxu0 0.0
    %1191 = vmatpush1.msra.mxu0 0.0
    %1192 = vmatprep.subr.mxu0 0.0
    %1193 = vmatpush1.msra.mxu0 0.0
    %1194 = vmatprep.subr.mxu0 0.0
    %1195 = vmatpush1.msra.mxu0 0.0
    %1196 = vmatprep.subr.mxu0 0.0
    %1197 = vmatpush1.msra.mxu0 0.0
    %1198 = vmatprep.subr.mxu0 0.0
    %1199 = vmatpush1.msra.mxu0 0.0
    %1200 = vmatprep.subr.mxu0 0.0
    %1201 = vmatpush1.msra.mxu0 0.0
    %1202 = vmatprep.subr.mxu0 0.0
    %1203 = vmatpush1.msra.mxu0 0.0
    %1204 = vmatprep.subr.mxu0 0.0
    %1205 = vmatpush1.msra.mxu0 0.0
    %1206 = vmatprep.subr.mxu0 0.0
    %1207 = vmatpush1.msra.mxu0 0.0
    %1208 = vmatprep.subr.mxu0 0.0
    %1209 = vmatpush1.msra.mxu0 0.0
    %1210 = vmatprep.subr.mxu0 0.0
    %1211 = vmatpush1.msra.mxu0 0.0
    %1212 = vmatprep.subr.mxu0 0.0
    %1213 = vmatpush1.msra.mxu0 0.0
    %1214 = vmatprep.subr.mxu0 0.0
    %1215 = vmatpush1.msra.mxu0 0.0
    %1216 = vmatprep.subr.mxu0 0.0
    %1217 = vmatpush1.msra.mxu0 0.0
    %1218 = vmatprep.mubr.f32.mxu0 0.0
    %1219 = vmatmul.mubr.f32.gmra.mrb[0].mxu0 %v1143
    %v1220 = vpop.f32.mrb[0].mxu0
    %v1221 = vadd.f32 0.0, %v1220
    %v1222 = vpop.f32.mrb[0].mxu0
    %1223 = vmatprep.mubr.f32.mxu0 0.0
    %1224 = vmatmul.mubr.f32.gmra.mrb[0].mxu0 %v1146
    %v1225 = vpop.f32.mrb[0].mxu0
    %v1226 = vadd.f32 0.0, %v1225
    %v1227 = vpop.f32.mrb[0].mxu0
    %1228 = vmatprep.mubr.f32.mxu0 0.0
    %1229 = vmatmul.mubr.f32.gmra.mrb[0].mxu0 %v1149
    %v1230 = vpop.f32.mrb[0].mxu0
    %v1231 = vadd.f32 0.0, %v1230
    %v1232 = vpop.f32.mrb[0].mxu0
    %1233 = vmatprep.mubr.f32.mxu0 0.0
    %1234 = vmatmul.mubr.f32.gmra.mrb[0].mxu0 %v1152
    %v1235 = vpop.f32.mrb[0].mxu0
    %v1236 = vadd.f32 0.0, %v1235
    %v1237 = vpop.f32.mrb[0].mxu0
    %1238 = vdwg.mxu0
    %v1239 = vmul.f32 %v1221, 0.001953125
    %v1240 = vmul.f32 %v1226, 0.001953125
    %v1241 = vmul.f32 %v1231, 0.001953125
    %v1242 = vmul.f32 %v1236, 0.001953125
    %v1243 = vadd.f32 %v1239, 1e-05
    %v1244 = vadd.f32 %v1240, 1e-05
    %v1245 = vadd.f32 %v1241, 1e-05
    %v1246 = vadd.f32 %v1242, 1e-05
    %v1247 = vrsqrt.pop %v1243
    %v1248 = vrsqrt.pop %v1244
    %v1249 = vrsqrt.pop %v1245
    %v1250 = vrsqrt.pop %v1246
    %v1251 = vmul.f32 %v909, %v1247
    %v1252 = vmul.f32 %v910, %v1248
    %v1253 = vmul.f32 %v911, %v1249
    %v1254 = vmul.f32 %v912, %v1250
    %v1255 = vlaneseq
    %v1256 = vshrl.u32 %v1255, 7
    %v1257 = vsub.s32 2, %v1256
    %v1258 = vrot.slane %v86, %v1257
    %v1259 = vmul.f32 %v1251, %v1258
    %v1260 = vmul.f32 %v1252, %v1258
    %v1261 = vmul.f32 %v1253, %v1258
    %v1262 = vmul.f32 %v1254, %v1258
    %v1263 = vlaneseq
    %v1264 = vshrl.u32 %v1263, 7
    %v1265 = vsub.s32 3, %v1264
    %v1266 = vrot.slane %v86, %v1265
    %v1267 = vadd.f32 %v1259, %v1266
    %v1268 = vadd.f32 %v1260, %v1266
    %v1269 = vadd.f32 %v1261, %v1266
    %v1270 = vadd.f32 %v1262, %v1266
    %v1271 = vrot.slane %v1267, 7
    %v1272 = vrot.slane %v1268, 7
    %v1273 = vrot.slane %v1269, 7
    %v1274 = vrot.slane %v1270, 7
    %v1275 = vsel %vm194, %v1273, %v1274
    %v1276 = vsel %vm194, %v1272, %v1273
    %v1277 = vsel %vm194, %v1271, %v1272
    %v1278 = vsel %vm194, %v1274, %v1271
    %v1279 = vsel %vm203, %v1278, 0.0
    %v1280 = vsel %vm204, %v1277, 0.0
    %v1281 = vsel %vm205, %v1276, 0.0
    %v1282 = vsel %vm206, %v1275, 0.0
    %v1283 = vld [vmem:[%s2] sm:$0xff]
    %v1284 = vld [vmem:[%s2 + $0x8] sm:$0xff]
    %v1285 = vld [vmem:[%s2 + $0x10] sm:$0xff]
    %v1286 = vld [vmem:[%s2 + $0x18] sm:$0xff]
    %v1287 = vld [vmem:[%s2 + $0x20] sm:$0xff]
    %v1288 = vld [vmem:[%s2 + $0x28] sm:$0xff]
    %v1289 = vld [vmem:[%s2 + $0x30] sm:$0xff]
    %v1290 = vld [vmem:[%s2 + $0x38] sm:$0xff]
    %v1291 = vld [vmem:[%s2 + $0x40] sm:$0xff]
    %v1292 = vld [vmem:[%s2 + $0x48] sm:$0xff]
    %v1293 = vld [vmem:[%s2 + $0x50] sm:$0xff]
    %v1294 = vld [vmem:[%s2 + $0x58] sm:$0xff]
    %v1295 = vld [vmem:[%s2 + $0x60] sm:$0xff]
    %v1296 = vld [vmem:[%s2 + $0x68] sm:$0xff]
    %v1297 = vld [vmem:[%s2 + $0x70] sm:$0xff]
    %v1298 = vld [vmem:[%s2 + $0x78] sm:$0xff]
    %s1299 = scalar_lea.vmem %s2, 128
    %v1300 = vld [vmem:[%s1299] sm:$0xff]
    %v1301 = vld [vmem:[%s1299 + $0x8] sm:$0xff]
    %v1302 = vld [vmem:[%s1299 + $0x10] sm:$0xff]
    %v1303 = vld [vmem:[%s1299 + $0x18] sm:$0xff]
    %v1304 = vld [vmem:[%s1299 + $0x20] sm:$0xff]
    %v1305 = vld [vmem:[%s1299 + $0x28] sm:$0xff]
    %v1306 = vld [vmem:[%s1299 + $0x30] sm:$0xff]
    %v1307 = vld [vmem:[%s1299 + $0x38] sm:$0xff]
    %v1308 = vld [vmem:[%s1299 + $0x40] sm:$0xff]
    %v1309 = vld [vmem:[%s1299 + $0x48] sm:$0xff]
    %v1310 = vld [vmem:[%s1299 + $0x50] sm:$0xff]
    %v1311 = vld [vmem:[%s1299 + $0x58] sm:$0xff]
    %v1312 = vld [vmem:[%s1299 + $0x60] sm:$0xff]
    %v1313 = vld [vmem:[%s1299 + $0x68] sm:$0xff]
    %v1314 = vld [vmem:[%s1299 + $0x70] sm:$0xff]
    %v1315 = vld [vmem:[%s1299 + $0x78] sm:$0xff]
    %1316 = vmatprep.subr.mxu0 0.0
    %1317 = vmatpush1.msra.mxu0 %v1300
    %1318 = vmatprep.subr.mxu0 0.0
    %1319 = vmatpush1.msra.mxu0 %v1301
    %1320 = vmatprep.subr.mxu0 0.0
    %1321 = vmatpush1.msra.mxu0 %v1302
    %1322 = vmatprep.subr.mxu0 0.0
    %1323 = vmatpush1.msra.mxu0 %v1303
    %1324 = vmatprep.subr.mxu0 0.0
    %1325 = vmatpush1.msra.mxu0 %v1304
    %1326 = vmatprep.subr.mxu0 0.0
    %1327 = vmatpush1.msra.mxu0 %v1305
    %1328 = vmatprep.subr.mxu0 0.0
    %1329 = vmatpush1.msra.mxu0 %v1306
    %1330 = vmatprep.subr.mxu0 0.0
    %1331 = vmatpush1.msra.mxu0 %v1307
    %1332 = vmatprep.subr.mxu0 0.0
    %1333 = vmatpush1.msra.mxu0 %v1308
    %1334 = vmatprep.subr.mxu0 0.0
    %1335 = vmatpush1.msra.mxu0 %v1309
    %1336 = vmatprep.subr.mxu0 0.0
    %1337 = vmatpush1.msra.mxu0 %v1310
    %1338 = vmatprep.subr.mxu0 0.0
    %1339 = vmatpush1.msra.mxu0 %v1311
    %1340 = vmatprep.subr.mxu0 0.0
    %1341 = vmatpush1.msra.mxu0 %v1312
    %1342 = vmatprep.subr.mxu0 0.0
    %1343 = vmatpush1.msra.mxu0 %v1313
    %1344 = vmatprep.subr.mxu0 0.0
    %1345 = vmatpush1.msra.mxu0 %v1314
    %1346 = vmatprep.subr.mxu0 0.0
    %1347 = vmatpush1.msra.mxu0 %v1315
    %1348 = vmatprep.subr.mxu0 0.0
    %1349 = vmatpush1.msra.mxu0 0.0
    %1350 = vmatprep.subr.mxu0 0.0
    %1351 = vmatpush1.msra.mxu0 0.0
    %1352 = vmatprep.subr.mxu0 0.0
    %1353 = vmatpush1.msra.mxu0 0.0
    %1354 = vmatprep.subr.mxu0 0.0
    %1355 = vmatpush1.msra.mxu0 0.0
    %1356 = vmatprep.subr.mxu0 0.0
    %1357 = vmatpush1.msra.mxu0 0.0
    %1358 = vmatprep.subr.mxu0 0.0
    %1359 = vmatpush1.msra.mxu0 0.0
    %1360 = vmatprep.subr.mxu0 0.0
    %1361 = vmatpush1.msra.mxu0 0.0
    %1362 = vmatprep.subr.mxu0 0.0
    %1363 = vmatpush1.msra.mxu0 0.0
    %1364 = vmatprep.subr.mxu0 0.0
    %1365 = vmatpush1.msra.mxu0 0.0
    %1366 = vmatprep.subr.mxu0 0.0
    %1367 = vmatpush1.msra.mxu0 0.0
    %1368 = vmatprep.subr.mxu0 0.0
    %1369 = vmatpush1.msra.mxu0 0.0
    %1370 = vmatprep.subr.mxu0 0.0
    %1371 = vmatpush1.msra.mxu0 0.0
    %1372 = vmatprep.subr.mxu0 0.0
    %1373 = vmatpush1.msra.mxu0 0.0
    %1374 = vmatprep.subr.mxu0 0.0
    %1375 = vmatpush1.msra.mxu0 0.0
    %1376 = vmatprep.subr.mxu0 0.0
    %1377 = vmatpush1.msra.mxu0 0.0
    %1378 = vmatprep.subr.mxu0 0.0
    %1379 = vmatpush1.msra.mxu0 0.0
    %1380 = vmatprep.mubr.f32.mxu0 0.0
    %1381 = vmatmul.mubr.f32.gmra.mrb[0].mxu0 %v1267
    %v1382 = vpop.f32.mrb[0].mxu0
    %v1383 = vadd.f32 0.0, %v1382
    %v1384 = vpop.f32.mrb[0].mxu0
    %1385 = vmatprep.mubr.f32.mxu0 0.0
    %1386 = vmatmul.mubr.f32.gmra.mrb[0].mxu0 %v1268
    %v1387 = vpop.f32.mrb[0].mxu0
    %v1388 = vadd.f32 0.0, %v1387
    %v1389 = vpop.f32.mrb[0].mxu0
    %1390 = vmatprep.mubr.f32.mxu0 0.0
    %1391 = vmatmul.mubr.f32.gmra.mrb[0].mxu0 %v1269
    %v1392 = vpop.f32.mrb[0].mxu0
    %v1393 = vadd.f32 0.0, %v1392
    %v1394 = vpop.f32.mrb[0].mxu0
    %1395 = vmatprep.mubr.f32.mxu0 0.0
    %1396 = vmatmul.mubr.f32.gmra.mrb[0].mxu0 %v1270
    %v1397 = vpop.f32.mrb[0].mxu0
    %v1398 = vadd.f32 0.0, %v1397
    %v1399 = vpop.f32.mrb[0].mxu0
    %1400 = vdwg.mxu0
    %1401 = vmatprep.subr.mxu0 0.0
    %1402 = vmatpush1.msra.mxu0 %v1283
    %1403 = vmatprep.subr.mxu0 0.0
    %1404 = vmatpush1.msra.mxu0 %v1284
    %1405 = vmatprep.subr.mxu0 0.0
    %1406 = vmatpush1.msra.mxu0 %v1285
    %1407 = vmatprep.subr.mxu0 0.0
    %1408 = vmatpush1.msra.mxu0 %v1286
    %1409 = vmatprep.subr.mxu0 0.0
    %1410 = vmatpush1.msra.mxu0 %v1287
    %1411 = vmatprep.subr.mxu0 0.0
    %1412 = vmatpush1.msra.mxu0 %v1288
    %1413 = vmatprep.subr.mxu0 0.0
    %1414 = vmatpush1.msra.mxu0 %v1289
    %1415 = vmatprep.subr.mxu0 0.0
    %1416 = vmatpush1.msra.mxu0 %v1290
    %1417 = vmatprep.subr.mxu0 0.0
    %1418 = vmatpush1.msra.mxu0 %v1291
    %1419 = vmatprep.subr.mxu0 0.0
    %1420 = vmatpush1.msra.mxu0 %v1292
    %1421 = vmatprep.subr.mxu0 0.0
    %1422 = vmatpush1.msra.mxu0 %v1293
    %1423 = vmatprep.subr.mxu0 0.0
    %1424 = vmatpush1.msra.mxu0 %v1294
    %1425 = vmatprep.subr.mxu0 0.0
    %1426 = vmatpush1.msra.mxu0 %v1295
    %1427 = vmatprep.subr.mxu0 0.0
    %1428 = vmatpush1.msra.mxu0 %v1296
    %1429 = vmatprep.subr.mxu0 0.0
    %1430 = vmatpush1.msra.mxu0 %v1297
    %1431 = vmatprep.subr.mxu0 0.0
    %1432 = vmatpush1.msra.mxu0 %v1298
    %1433 = vmatprep.subr.mxu0 0.0
    %1434 = vmatpush1.msra.mxu0 0.0
    %1435 = vmatprep.subr.mxu0 0.0
    %1436 = vmatpush1.msra.mxu0 0.0
    %1437 = vmatprep.subr.mxu0 0.0
    %1438 = vmatpush1.msra.mxu0 0.0
    %1439 = vmatprep.subr.mxu0 0.0
    %1440 = vmatpush1.msra.mxu0 0.0
    %1441 = vmatprep.subr.mxu0 0.0
    %1442 = vmatpush1.msra.mxu0 0.0
    %1443 = vmatprep.subr.mxu0 0.0
    %1444 = vmatpush1.msra.mxu0 0.0
    %1445 = vmatprep.subr.mxu0 0.0
    %1446 = vmatpush1.msra.mxu0 0.0
    %1447 = vmatprep.subr.mxu0 0.0
    %1448 = vmatpush1.msra.mxu0 0.0
    %1449 = vmatprep.subr.mxu0 0.0
    %1450 = vmatpush1.msra.mxu0 0.0
    %1451 = vmatprep.subr.mxu0 0.0
    %1452 = vmatpush1.msra.mxu0 0.0
    %1453 = vmatprep.subr.mxu0 0.0
    %1454 = vmatpush1.msra.mxu0 0.0
    %1455 = vmatprep.subr.mxu0 0.0
    %1456 = vmatpush1.msra.mxu0 0.0
    %1457 = vmatprep.subr.mxu0 0.0
    %1458 = vmatpush1.msra.mxu0 0.0
    %1459 = vmatprep.subr.mxu0 0.0
    %1460 = vmatpush1.msra.mxu0 0.0
    %1461 = vmatprep.subr.mxu0 0.0
    %1462 = vmatpush1.msra.mxu0 0.0
    %1463 = vmatprep.subr.mxu0 0.0
    %1464 = vmatpush1.msra.mxu0 0.0
    %1465 = vmatprep.mubr.f32.mxu0 0.0
    %1466 = vmatmul.mubr.f32.gmra.mrb[0].mxu0 %v1279
    %v1467 = vpop.f32.mrb[0].mxu0
    %v1468 = vadd.f32 %v1383, %v1467
    %v1469 = vpop.f32.mrb[0].mxu0
    %1470 = vmatprep.mubr.f32.mxu0 0.0
    %1471 = vmatmul.mubr.f32.gmra.mrb[0].mxu0 %v1280
    %v1472 = vpop.f32.mrb[0].mxu0
    %v1473 = vadd.f32 %v1388, %v1472
    %v1474 = vpop.f32.mrb[0].mxu0
    %1475 = vmatprep.mubr.f32.mxu0 0.0
    %1476 = vmatmul.mubr.f32.gmra.mrb[0].mxu0 %v1281
    %v1477 = vpop.f32.mrb[0].mxu0
    %v1478 = vadd.f32 %v1393, %v1477
    %v1479 = vpop.f32.mrb[0].mxu0
    %1480 = vmatprep.mubr.f32.mxu0 0.0
    %1481 = vmatmul.mubr.f32.gmra.mrb[0].mxu0 %v1282
    %v1482 = vpop.f32.mrb[0].mxu0
    %v1483 = vadd.f32 %v1398, %v1482
    %v1484 = vpop.f32.mrb[0].mxu0
    %1485 = vdwg.mxu0
    %v1486 = vrot.slane %v1267, 1
    %v1487 = vrot.slane %v1268, 1
    %v1488 = vrot.slane %v1269, 1
    %v1489 = vrot.slane %v1270, 1
    %v1490 = vsel %vm427, %v1488, %v1489
    %v1491 = vsel %vm427, %v1487, %v1488
    %v1492 = vsel %vm427, %v1486, %v1487
    %v1493 = vsel %vm427, %v1489, %v1486
    %v1494 = vsel %vm436, %v1492, 0.0
    %v1495 = vsel %vm437, %v1491, 0.0
    %v1496 = vsel %vm438, %v1490, 0.0
    %v1497 = vsel %vm439, %v1493, 0.0
    %s1498 = scalar_lea.vmem %s2, 256
    %v1499 = vld [vmem:[%s1498] sm:$0xff]
    %v1500 = vld [vmem:[%s1498 + $0x8] sm:$0xff]
    %v1501 = vld [vmem:[%s1498 + $0x10] sm:$0xff]
    %v1502 = vld [vmem:[%s1498 + $0x18] sm:$0xff]
    %v1503 = vld [vmem:[%s1498 + $0x20] sm:$0xff]
    %v1504 = vld [vmem:[%s1498 + $0x28] sm:$0xff]
    %v1505 = vld [vmem:[%s1498 + $0x30] sm:$0xff]
    %v1506 = vld [vmem:[%s1498 + $0x38] sm:$0xff]
    %v1507 = vld [vmem:[%s1498 + $0x40] sm:$0xff]
    %v1508 = vld [vmem:[%s1498 + $0x48] sm:$0xff]
    %v1509 = vld [vmem:[%s1498 + $0x50] sm:$0xff]
    %v1510 = vld [vmem:[%s1498 + $0x58] sm:$0xff]
    %v1511 = vld [vmem:[%s1498 + $0x60] sm:$0xff]
    %v1512 = vld [vmem:[%s1498 + $0x68] sm:$0xff]
    %v1513 = vld [vmem:[%s1498 + $0x70] sm:$0xff]
    %v1514 = vld [vmem:[%s1498 + $0x78] sm:$0xff]
    %1515 = vmatprep.subr.mxu0 0.0
    %1516 = vmatpush1.msra.mxu0 %v1499
    %1517 = vmatprep.subr.mxu0 0.0
    %1518 = vmatpush1.msra.mxu0 %v1500
    %1519 = vmatprep.subr.mxu0 0.0
    %1520 = vmatpush1.msra.mxu0 %v1501
    %1521 = vmatprep.subr.mxu0 0.0
    %1522 = vmatpush1.msra.mxu0 %v1502
    %1523 = vmatprep.subr.mxu0 0.0
    %1524 = vmatpush1.msra.mxu0 %v1503
    %1525 = vmatprep.subr.mxu0 0.0
    %1526 = vmatpush1.msra.mxu0 %v1504
    %1527 = vmatprep.subr.mxu0 0.0
    %1528 = vmatpush1.msra.mxu0 %v1505
    %1529 = vmatprep.subr.mxu0 0.0
    %1530 = vmatpush1.msra.mxu0 %v1506
    %1531 = vmatprep.subr.mxu0 0.0
    %1532 = vmatpush1.msra.mxu0 %v1507
    %1533 = vmatprep.subr.mxu0 0.0
    %1534 = vmatpush1.msra.mxu0 %v1508
    %1535 = vmatprep.subr.mxu0 0.0
    %1536 = vmatpush1.msra.mxu0 %v1509
    %1537 = vmatprep.subr.mxu0 0.0
    %1538 = vmatpush1.msra.mxu0 %v1510
    %1539 = vmatprep.subr.mxu0 0.0
    %1540 = vmatpush1.msra.mxu0 %v1511
    %1541 = vmatprep.subr.mxu0 0.0
    %1542 = vmatpush1.msra.mxu0 %v1512
    %1543 = vmatprep.subr.mxu0 0.0
    %1544 = vmatpush1.msra.mxu0 %v1513
    %1545 = vmatprep.subr.mxu0 0.0
    %1546 = vmatpush1.msra.mxu0 %v1514
    %1547 = vmatprep.subr.mxu0 0.0
    %1548 = vmatpush1.msra.mxu0 0.0
    %1549 = vmatprep.subr.mxu0 0.0
    %1550 = vmatpush1.msra.mxu0 0.0
    %1551 = vmatprep.subr.mxu0 0.0
    %1552 = vmatpush1.msra.mxu0 0.0
    %1553 = vmatprep.subr.mxu0 0.0
    %1554 = vmatpush1.msra.mxu0 0.0
    %1555 = vmatprep.subr.mxu0 0.0
    %1556 = vmatpush1.msra.mxu0 0.0
    %1557 = vmatprep.subr.mxu0 0.0
    %1558 = vmatpush1.msra.mxu0 0.0
    %1559 = vmatprep.subr.mxu0 0.0
    %1560 = vmatpush1.msra.mxu0 0.0
    %1561 = vmatprep.subr.mxu0 0.0
    %1562 = vmatpush1.msra.mxu0 0.0
    %1563 = vmatprep.subr.mxu0 0.0
    %1564 = vmatpush1.msra.mxu0 0.0
    %1565 = vmatprep.subr.mxu0 0.0
    %1566 = vmatpush1.msra.mxu0 0.0
    %1567 = vmatprep.subr.mxu0 0.0
    %1568 = vmatpush1.msra.mxu0 0.0
    %1569 = vmatprep.subr.mxu0 0.0
    %1570 = vmatpush1.msra.mxu0 0.0
    %1571 = vmatprep.subr.mxu0 0.0
    %1572 = vmatpush1.msra.mxu0 0.0
    %1573 = vmatprep.subr.mxu0 0.0
    %1574 = vmatpush1.msra.mxu0 0.0
    %1575 = vmatprep.subr.mxu0 0.0
    %1576 = vmatpush1.msra.mxu0 0.0
    %1577 = vmatprep.subr.mxu0 0.0
    %1578 = vmatpush1.msra.mxu0 0.0
    %1579 = vmatprep.mubr.f32.mxu0 0.0
    %1580 = vmatmul.mubr.f32.gmra.mrb[0].mxu0 %v1494
    %v1581 = vpop.f32.mrb[0].mxu0
    %v1582 = vadd.f32 0.0, %v1581
    %v1583 = vpop.f32.mrb[0].mxu0
    %1584 = vmatprep.mubr.f32.mxu0 0.0
    %1585 = vmatmul.mubr.f32.gmra.mrb[0].mxu0 %v1495
    %v1586 = vpop.f32.mrb[0].mxu0
    %v1587 = vadd.f32 0.0, %v1586
    %v1588 = vpop.f32.mrb[0].mxu0
    %1589 = vmatprep.mubr.f32.mxu0 0.0
    %1590 = vmatmul.mubr.f32.gmra.mrb[0].mxu0 %v1496
    %v1591 = vpop.f32.mrb[0].mxu0
    %v1592 = vadd.f32 0.0, %v1591
    %v1593 = vpop.f32.mrb[0].mxu0
    %1594 = vmatprep.mubr.f32.mxu0 0.0
    %1595 = vmatmul.mubr.f32.gmra.mrb[0].mxu0 %v1497
    %v1596 = vpop.f32.mrb[0].mxu0
    %v1597 = vadd.f32 0.0, %v1596
    %v1598 = vpop.f32.mrb[0].mxu0
    %1599 = vdwg.mxu0
    %v1600 = vadd.f32 %v1468, %v1582
    %v1601 = vadd.f32 %v1473, %v1587
    %v1602 = vadd.f32 %v1478, %v1592
    %v1603 = vadd.f32 %v1483, %v1597
    %v1604 = vlaneseq
    %v1605 = vshrl.u32 %v1604, 7
    %v1606 = vsub.s32 1, %v1605
    %v1607 = vrot.slane %v86, %v1606
    %v1608 = vadd.f32 %v1600, %v1607
    %v1609 = vadd.f32 %v1601, %v1607
    %v1610 = vadd.f32 %v1602, %v1607
    %v1611 = vadd.f32 %v1603, %v1607
    %v1612 = vmax.f32 %v1608, 0.0
    %v1613 = vmax.f32 %v1609, 0.0
    %v1614 = vmax.f32 %v1610, 0.0
    %v1615 = vmax.f32 %v1611, 0.0
    %1616 = vmatprep.subr.mxu0 0.0
    %1617 = vmatpush1.msra.mxu0 %v1612
    %1618 = vmatprep.subr.mxu0 0.0
    %1619 = vmatpush1.msra.mxu0 %v1613
    %1620 = vmatprep.subr.mxu0 0.0
    %1621 = vmatpush1.msra.mxu0 %v1614
    %1622 = vmatprep.subr.mxu0 0.0
    %1623 = vmatpush1.msra.mxu0 %v1615
    %1624 = vmatprep.subr.mxu0 0.0
    %1625 = vmatpush1.msra.mxu0 0.0
    %1626 = vmatprep.subr.mxu0 0.0
    %1627 = vmatpush1.msra.mxu0 0.0
    %1628 = vmatprep.subr.mxu0 0.0
    %1629 = vmatpush1.msra.mxu0 0.0
    %1630 = vmatprep.subr.mxu0 0.0
    %1631 = vmatpush1.msra.mxu0 0.0
    %1632 = vmatprep.subr.mxu0 0.0
    %1633 = vmatpush1.msra.mxu0 0.0
    %1634 = vmatprep.subr.mxu0 0.0
    %1635 = vmatpush1.msra.mxu0 0.0
    %1636 = vmatprep.subr.mxu0 0.0
    %1637 = vmatpush1.msra.mxu0 0.0
    %1638 = vmatprep.subr.mxu0 0.0
    %1639 = vmatpush1.msra.mxu0 0.0
    %1640 = vmatprep.subr.mxu0 0.0
    %1641 = vmatpush1.msra.mxu0 0.0
    %1642 = vmatprep.subr.mxu0 0.0
    %1643 = vmatpush1.msra.mxu0 0.0
    %1644 = vmatprep.subr.mxu0 0.0
    %1645 = vmatpush1.msra.mxu0 0.0
    %1646 = vmatprep.subr.mxu0 0.0
    %1647 = vmatpush1.msra.mxu0 0.0
    %1648 = vmatprep.subr.mxu0 0.0
    %1649 = vmatpush1.msra.mxu0 0.0
    %1650 = vmatprep.subr.mxu0 0.0
    %1651 = vmatpush1.msra.mxu0 0.0
    %1652 = vmatprep.subr.mxu0 0.0
    %1653 = vmatpush1.msra.mxu0 0.0
    %1654 = vmatprep.subr.mxu0 0.0
    %1655 = vmatpush1.msra.mxu0 0.0
    %1656 = vmatprep.subr.mxu0 0.0
    %1657 = vmatpush1.msra.mxu0 0.0
    %1658 = vmatprep.subr.mxu0 0.0
    %1659 = vmatpush1.msra.mxu0 0.0
    %1660 = vmatprep.subr.mxu0 0.0
    %1661 = vmatpush1.msra.mxu0 0.0
    %1662 = vmatprep.subr.mxu0 0.0
    %1663 = vmatpush1.msra.mxu0 0.0
    %1664 = vmatprep.subr.mxu0 0.0
    %1665 = vmatpush1.msra.mxu0 0.0
    %1666 = vmatprep.subr.mxu0 0.0
    %1667 = vmatpush1.msra.mxu0 0.0
    %1668 = vmatprep.subr.mxu0 0.0
    %1669 = vmatpush1.msra.mxu0 0.0
    %1670 = vmatprep.subr.mxu0 0.0
    %1671 = vmatpush1.msra.mxu0 0.0
    %1672 = vmatprep.subr.mxu0 0.0
    %1673 = vmatpush1.msra.mxu0 0.0
    %1674 = vmatprep.subr.mxu0 0.0
    %1675 = vmatpush1.msra.mxu0 0.0
    %1676 = vmatprep.subr.mxu0 0.0
    %1677 = vmatpush1.msra.mxu0 0.0
    %1678 = vmatprep.subr.mxu0 0.0
    %1679 = vmatpush1.msra.mxu0 0.0
    %1680 = vmatprep.mubr.f32.mxu0 0.0
    %1681 = vmatmul.mubr.f32.gmra.mrb[0].mxu0 %v568
    %v1682 = vpop.f32.mrb[0].mxu0
    %v1683 = vadd.f32 0.0, %v1682
    %v1684 = vpop.f32.mrb[0].mxu0
    %1685 = vdwg.mxu0
    %1686 = vmatprep.subr.mxu0 0.0
    %1687 = vmatpush1.msra.mxu0 %v92
    %1688 = vmatprep.subr.mxu0 0.0
    %1689 = vmatpush1.msra.mxu0 %v93
    %1690 = vmatprep.subr.mxu0 0.0
    %1691 = vmatpush1.msra.mxu0 %v94
    %1692 = vmatprep.subr.mxu0 0.0
    %1693 = vmatpush1.msra.mxu0 %v95
    %1694 = vmatprep.subr.mxu0 0.0
    %1695 = vmatpush1.msra.mxu0 %v96
    %1696 = vmatprep.subr.mxu0 0.0
    %1697 = vmatpush1.msra.mxu0 %v97
    %1698 = vmatprep.subr.mxu0 0.0
    %1699 = vmatpush1.msra.mxu0 %v98
    %1700 = vmatprep.subr.mxu0 0.0
    %1701 = vmatpush1.msra.mxu0 %v99
    %1702 = vmatprep.subr.mxu0 0.0
    %1703 = vmatpush1.msra.mxu0 %v100
    %1704 = vmatprep.subr.mxu0 0.0
    %1705 = vmatpush1.msra.mxu0 %v101
    %1706 = vmatprep.subr.mxu0 0.0
    %1707 = vmatpush1.msra.mxu0 %v102
    %1708 = vmatprep.subr.mxu0 0.0
    %1709 = vmatpush1.msra.mxu0 %v103
    %1710 = vmatprep.subr.mxu0 0.0
    %1711 = vmatpush1.msra.mxu0 %v104
    %1712 = vmatprep.subr.mxu0 0.0
    %1713 = vmatpush1.msra.mxu0 %v105
    %1714 = vmatprep.subr.mxu0 0.0
    %1715 = vmatpush1.msra.mxu0 %v106
    %1716 = vmatprep.subr.mxu0 0.0
    %1717 = vmatpush1.msra.mxu0 %v107
    %1718 = vmatprep.subr.mxu0 0.0
    %1719 = vmatpush1.msra.mxu0 0.0
    %1720 = vmatprep.subr.mxu0 0.0
    %1721 = vmatpush1.msra.mxu0 0.0
    %1722 = vmatprep.subr.mxu0 0.0
    %1723 = vmatpush1.msra.mxu0 0.0
    %1724 = vmatprep.subr.mxu0 0.0
    %1725 = vmatpush1.msra.mxu0 0.0
    %1726 = vmatprep.subr.mxu0 0.0
    %1727 = vmatpush1.msra.mxu0 0.0
    %1728 = vmatprep.subr.mxu0 0.0
    %1729 = vmatpush1.msra.mxu0 0.0
    %1730 = vmatprep.subr.mxu0 0.0
    %1731 = vmatpush1.msra.mxu0 0.0
    %1732 = vmatprep.subr.mxu0 0.0
    %1733 = vmatpush1.msra.mxu0 0.0
    %1734 = vmatprep.subr.mxu0 0.0
    %1735 = vmatpush1.msra.mxu0 0.0
    %1736 = vmatprep.subr.mxu0 0.0
    %1737 = vmatpush1.msra.mxu0 0.0
    %1738 = vmatprep.subr.mxu0 0.0
    %1739 = vmatpush1.msra.mxu0 0.0
    %1740 = vmatprep.subr.mxu0 0.0
    %1741 = vmatpush1.msra.mxu0 0.0
    %1742 = vmatprep.subr.mxu0 0.0
    %1743 = vmatpush1.msra.mxu0 0.0
    %1744 = vmatprep.subr.mxu0 0.0
    %1745 = vmatpush1.msra.mxu0 0.0
    %1746 = vmatprep.subr.mxu0 0.0
    %1747 = vmatpush1.msra.mxu0 0.0
    %1748 = vmatprep.subr.mxu0 0.0
    %1749 = vmatpush1.msra.mxu0 0.0
    %1750 = vmatprep.mubr.f32.mxu0 0.0
    %1751 = vmatmul.mubr.f32.gmra.mrb[0].mxu0 %v1683
    %v1752 = vpop.f32.mrb[0].mxu0
    %v1753 = vadd.f32 0.0, %v1752
    %v1754 = vpop.f32.mrb[0].mxu0
    %1755 = vdwg.mxu0
    %1756 = vmatprep.subr.mxu0 0.0
    %1757 = vmatpush1.msra.mxu0 %v1753
    %1758 = vmatprep.subr.mxu0 0.0
    %1759 = vmatpush1.msra.mxu0 0.0
    %1760 = vmatprep.subr.mxu0 0.0
    %1761 = vmatpush1.msra.mxu0 0.0
    %1762 = vmatprep.subr.mxu0 0.0
    %1763 = vmatpush1.msra.mxu0 0.0
    %1764 = vmatprep.subr.mxu0 0.0
    %1765 = vmatpush1.msra.mxu0 0.0
    %1766 = vmatprep.subr.mxu0 0.0
    %1767 = vmatpush1.msra.mxu0 0.0
    %1768 = vmatprep.subr.mxu0 0.0
    %1769 = vmatpush1.msra.mxu0 0.0
    %1770 = vmatprep.subr.mxu0 0.0
    %1771 = vmatpush1.msra.mxu0 0.0
    %1772 = vmatprep.subr.mxu0 0.0
    %1773 = vmatpush1.msra.mxu0 0.0
    %1774 = vmatprep.subr.mxu0 0.0
    %1775 = vmatpush1.msra.mxu0 0.0
    %1776 = vmatprep.subr.mxu0 0.0
    %1777 = vmatpush1.msra.mxu0 0.0
    %1778 = vmatprep.subr.mxu0 0.0
    %1779 = vmatpush1.msra.mxu0 0.0
    %1780 = vmatprep.subr.mxu0 0.0
    %1781 = vmatpush1.msra.mxu0 0.0
    %1782 = vmatprep.subr.mxu0 0.0
    %1783 = vmatpush1.msra.mxu0 0.0
    %1784 = vmatprep.subr.mxu0 0.0
    %1785 = vmatpush1.msra.mxu0 0.0
    %1786 = vmatprep.subr.mxu0 0.0
    %1787 = vmatpush1.msra.mxu0 0.0
    %1788 = vmatprep.subr.mxu0 0.0
    %1789 = vmatpush1.msra.mxu0 0.0
    %1790 = vmatprep.subr.mxu0 0.0
    %1791 = vmatpush1.msra.mxu0 0.0
    %1792 = vmatprep.subr.mxu0 0.0
    %1793 = vmatpush1.msra.mxu0 0.0
    %1794 = vmatprep.subr.mxu0 0.0
    %1795 = vmatpush1.msra.mxu0 0.0
    %1796 = vmatprep.subr.mxu0 0.0
    %1797 = vmatpush1.msra.mxu0 0.0
    %1798 = vmatprep.subr.mxu0 0.0
    %1799 = vmatpush1.msra.mxu0 0.0
    %1800 = vmatprep.subr.mxu0 0.0
    %1801 = vmatpush1.msra.mxu0 0.0
    %1802 = vmatprep.subr.mxu0 0.0
    %1803 = vmatpush1.msra.mxu0 0.0
    %1804 = vmatprep.subr.mxu0 0.0
    %1805 = vmatpush1.msra.mxu0 0.0
    %1806 = vmatprep.subr.mxu0 0.0
    %1807 = vmatpush1.msra.mxu0 0.0
    %1808 = vmatprep.subr.mxu0 0.0
    %1809 = vmatpush1.msra.mxu0 0.0
    %1810 = vmatprep.subr.mxu0 0.0
    %1811 = vmatpush1.msra.mxu0 0.0
    %1812 = vmatprep.subr.mxu0 0.0
    %1813 = vmatpush1.msra.mxu0 0.0
    %1814 = vmatprep.subr.mxu0 0.0
    %1815 = vmatpush1.msra.mxu0 0.0
    %1816 = vmatprep.subr.mxu0 0.0
    %1817 = vmatpush1.msra.mxu0 0.0
    %1818 = vmatprep.subr.mxu0 0.0
    %1819 = vmatpush1.msra.mxu0 0.0
    %1820 = vmatprep.mubr.f32.mxu0 0.0
    %1821 = vmatmul.mubr.f32.gmra.mrb[0].mxu0 %v712
    %v1822 = vpop.f32.mrb[0].mxu0
    %v1823 = vadd.f32 0.0, %v1822
    %v1824 = vpop.f32.mrb[0].mxu0
    %1825 = vmatprep.mubr.f32.mxu0 0.0
    %1826 = vmatmul.mubr.f32.gmra.mrb[0].mxu0 %v715
    %v1827 = vpop.f32.mrb[0].mxu0
    %v1828 = vadd.f32 0.0, %v1827
    %v1829 = vpop.f32.mrb[0].mxu0
    %1830 = vmatprep.mubr.f32.mxu0 0.0
    %1831 = vmatmul.mubr.f32.gmra.mrb[0].mxu0 %v718
    %v1832 = vpop.f32.mrb[0].mxu0
    %v1833 = vadd.f32 0.0, %v1832
    %v1834 = vpop.f32.mrb[0].mxu0
    %1835 = vmatprep.mubr.f32.mxu0 0.0
    %1836 = vmatmul.mubr.f32.gmra.mrb[0].mxu0 %v721
    %v1837 = vpop.f32.mrb[0].mxu0
    %v1838 = vadd.f32 0.0, %v1837
    %v1839 = vpop.f32.mrb[0].mxu0
    %1840 = vdwg.mxu0
    %v1842 = vsel %vm710, %v1823, 0
    %v1845 = vsel %vm710, %v1828, 0
    %v1848 = vsel %vm710, %v1833, 0
    %v1851 = vsel %vm710, %v1838, 0
    %1853 = vmatprep.subr.mxu0 0.0
    %1854 = vmatpush1.msra.mxu0 %v108
    %1855 = vmatprep.subr.mxu0 0.0
    %1856 = vmatpush1.msra.mxu0 0.0
    %1857 = vmatprep.subr.mxu0 0.0
    %1858 = vmatpush1.msra.mxu0 0.0
    %1859 = vmatprep.subr.mxu0 0.0
    %1860 = vmatpush1.msra.mxu0 0.0
    %1861 = vmatprep.subr.mxu0 0.0
    %1862 = vmatpush1.msra.mxu0 0.0
    %1863 = vmatprep.subr.mxu0 0.0
    %1864 = vmatpush1.msra.mxu0 0.0
    %1865 = vmatprep.subr.mxu0 0.0
    %1866 = vmatpush1.msra.mxu0 0.0
    %1867 = vmatprep.subr.mxu0 0.0
    %1868 = vmatpush1.msra.mxu0 0.0
    %1869 = vmatprep.subr.mxu0 0.0
    %1870 = vmatpush1.msra.mxu0 0.0
    %1871 = vmatprep.subr.mxu0 0.0
    %1872 = vmatpush1.msra.mxu0 0.0
    %1873 = vmatprep.subr.mxu0 0.0
    %1874 = vmatpush1.msra.mxu0 0.0
    %1875 = vmatprep.subr.mxu0 0.0
    %1876 = vmatpush1.msra.mxu0 0.0
    %1877 = vmatprep.subr.mxu0 0.0
    %1878 = vmatpush1.msra.mxu0 0.0
    %1879 = vmatprep.subr.mxu0 0.0
    %1880 = vmatpush1.msra.mxu0 0.0
    %1881 = vmatprep.subr.mxu0 0.0
    %1882 = vmatpush1.msra.mxu0 0.0
    %1883 = vmatprep.subr.mxu0 0.0
    %1884 = vmatpush1.msra.mxu0 0.0
    %1885 = vmatprep.subr.mxu0 0.0
    %1886 = vmatpush1.msra.mxu0 0.0
    %1887 = vmatprep.subr.mxu0 0.0
    %1888 = vmatpush1.msra.mxu0 0.0
    %1889 = vmatprep.subr.mxu0 0.0
    %1890 = vmatpush1.msra.mxu0 0.0
    %1891 = vmatprep.subr.mxu0 0.0
    %1892 = vmatpush1.msra.mxu0 0.0
    %1893 = vmatprep.subr.mxu0 0.0
    %1894 = vmatpush1.msra.mxu0 0.0
    %1895 = vmatprep.subr.mxu0 0.0
    %1896 = vmatpush1.msra.mxu0 0.0
    %1897 = vmatprep.subr.mxu0 0.0
    %1898 = vmatpush1.msra.mxu0 0.0
    %1899 = vmatprep.subr.mxu0 0.0
    %1900 = vmatpush1.msra.mxu0 0.0
    %1901 = vmatprep.subr.mxu0 0.0
    %1902 = vmatpush1.msra.mxu0 0.0
    %1903 = vmatprep.subr.mxu0 0.0
    %1904 = vmatpush1.msra.mxu0 0.0
    %1905 = vmatprep.subr.mxu0 0.0
    %1906 = vmatpush1.msra.mxu0 0.0
    %1907 = vmatprep.subr.mxu0 0.0
    %1908 = vmatpush1.msra.mxu0 0.0
    %1909 = vmatprep.subr.mxu0 0.0
    %1910 = vmatpush1.msra.mxu0 0.0
    %1911 = vmatprep.subr.mxu0 0.0
    %1912 = vmatpush1.msra.mxu0 0.0
    %1913 = vmatprep.subr.mxu0 0.0
    %1914 = vmatpush1.msra.mxu0 0.0
    %1915 = vmatprep.subr.mxu0 0.0
    %1916 = vmatpush1.msra.mxu0 0.0
    %1917 = vmatprep.mubr.f32.mxu0 0.0
    %1918 = vmatmul.mubr.f32.gmra.mrb[0].mxu0 %v1842
    %v1919 = vpop.f32.mrb[0].mxu0
    %v1920 = vadd.f32 0.0, %v1919
    %v1921 = vpop.f32.mrb[0].mxu0
    %1922 = vmatprep.mubr.f32.mxu0 0.0
    %1923 = vmatmul.mubr.f32.gmra.mrb[0].mxu0 %v1845
    %v1924 = vpop.f32.mrb[0].mxu0
    %v1925 = vadd.f32 0.0, %v1924
    %v1926 = vpop.f32.mrb[0].mxu0
    %1927 = vmatprep.mubr.f32.mxu0 0.0
    %1928 = vmatmul.mubr.f32.gmra.mrb[0].mxu0 %v1848
    %v1929 = vpop.f32.mrb[0].mxu0
    %v1930 = vadd.f32 0.0, %v1929
    %v1931 = vpop.f32.mrb[0].mxu0
    %1932 = vmatprep.mubr.f32.mxu0 0.0
    %1933 = vmatmul.mubr.f32.gmra.mrb[0].mxu0 %v1851
    %v1934 = vpop.f32.mrb[0].mxu0
    %v1935 = vadd.f32 0.0, %v1934
    %v1936 = vpop.f32.mrb[0].mxu0
    %1937 = vdwg.mxu0
    %v1938 = vmul.f32 %v1920, 0.001953125
    %v1939 = vmul.f32 %v1925, 0.001953125
    %v1940 = vmul.f32 %v1930, 0.001953125
    %v1941 = vmul.f32 %v1935, 0.001953125
    %v1942 = vsub.f32 %v1612, %v1938
    %v1943 = vsub.f32 %v1613, %v1939
    %v1944 = vsub.f32 %v1614, %v1940
    %v1945 = vsub.f32 %v1615, %v1941
    %v1946 = vmul.f32 %v1942, %v1942
    %v1947 = vmul.f32 %v1943, %v1943
    %v1948 = vmul.f32 %v1944, %v1944
    %v1949 = vmul.f32 %v1945, %v1945
    %1950 = vmatprep.subr.mxu0 0.0
    %1951 = vmatpush1.msra.mxu0 %v1946
    %1952 = vmatprep.subr.mxu0 0.0
    %1953 = vmatpush1.msra.mxu0 %v1947
    %1954 = vmatprep.subr.mxu0 0.0
    %1955 = vmatpush1.msra.mxu0 %v1948
    %1956 = vmatprep.subr.mxu0 0.0
    %1957 = vmatpush1.msra.mxu0 %v1949
    %1958 = vmatprep.subr.mxu0 0.0
    %1959 = vmatpush1.msra.mxu0 0.0
    %1960 = vmatprep.subr.mxu0 0.0
    %1961 = vmatpush1.msra.mxu0 0.0
    %1962 = vmatprep.subr.mxu0 0.0
    %1963 = vmatpush1.msra.mxu0 0.0
    %1964 = vmatprep.subr.mxu0 0.0
    %1965 = vmatpush1.msra.mxu0 0.0
    %1966 = vmatprep.subr.mxu0 0.0
    %1967 = vmatpush1.msra.mxu0 0.0
    %1968 = vmatprep.subr.mxu0 0.0
    %1969 = vmatpush1.msra.mxu0 0.0
    %1970 = vmatprep.subr.mxu0 0.0
    %1971 = vmatpush1.msra.mxu0 0.0
    %1972 = vmatprep.subr.mxu0 0.0
    %1973 = vmatpush1.msra.mxu0 0.0
    %1974 = vmatprep.subr.mxu0 0.0
    %1975 = vmatpush1.msra.mxu0 0.0
    %1976 = vmatprep.subr.mxu0 0.0
    %1977 = vmatpush1.msra.mxu0 0.0
    %1978 = vmatprep.subr.mxu0 0.0
    %1979 = vmatpush1.msra.mxu0 0.0
    %1980 = vmatprep.subr.mxu0 0.0
    %1981 = vmatpush1.msra.mxu0 0.0
    %1982 = vmatprep.subr.mxu0 0.0
    %1983 = vmatpush1.msra.mxu0 0.0
    %1984 = vmatprep.subr.mxu0 0.0
    %1985 = vmatpush1.msra.mxu0 0.0
    %1986 = vmatprep.subr.mxu0 0.0
    %1987 = vmatpush1.msra.mxu0 0.0
    %1988 = vmatprep.subr.mxu0 0.0
    %1989 = vmatpush1.msra.mxu0 0.0
    %1990 = vmatprep.subr.mxu0 0.0
    %1991 = vmatpush1.msra.mxu0 0.0
    %1992 = vmatprep.subr.mxu0 0.0
    %1993 = vmatpush1.msra.mxu0 0.0
    %1994 = vmatprep.subr.mxu0 0.0
    %1995 = vmatpush1.msra.mxu0 0.0
    %1996 = vmatprep.subr.mxu0 0.0
    %1997 = vmatpush1.msra.mxu0 0.0
    %1998 = vmatprep.subr.mxu0 0.0
    %1999 = vmatpush1.msra.mxu0 0.0
    %2000 = vmatprep.subr.mxu0 0.0
    %2001 = vmatpush1.msra.mxu0 0.0
    %2002 = vmatprep.subr.mxu0 0.0
    %2003 = vmatpush1.msra.mxu0 0.0
    %2004 = vmatprep.subr.mxu0 0.0
    %2005 = vmatpush1.msra.mxu0 0.0
    %2006 = vmatprep.subr.mxu0 0.0
    %2007 = vmatpush1.msra.mxu0 0.0
    %2008 = vmatprep.subr.mxu0 0.0
    %2009 = vmatpush1.msra.mxu0 0.0
    %2010 = vmatprep.subr.mxu0 0.0
    %2011 = vmatpush1.msra.mxu0 0.0
    %2012 = vmatprep.subr.mxu0 0.0
    %2013 = vmatpush1.msra.mxu0 0.0
    %2014 = vmatprep.mubr.f32.mxu0 0.0
    %2015 = vmatmul.mubr.f32.gmra.mrb[0].mxu0 %v568
    %v2016 = vpop.f32.mrb[0].mxu0
    %v2017 = vadd.f32 0.0, %v2016
    %v2018 = vpop.f32.mrb[0].mxu0
    %2019 = vdwg.mxu0
    %2020 = vmatprep.subr.mxu0 0.0
    %2021 = vmatpush1.msra.mxu0 %v92
    %2022 = vmatprep.subr.mxu0 0.0
    %2023 = vmatpush1.msra.mxu0 %v93
    %2024 = vmatprep.subr.mxu0 0.0
    %2025 = vmatpush1.msra.mxu0 %v94
    %2026 = vmatprep.subr.mxu0 0.0
    %2027 = vmatpush1.msra.mxu0 %v95
    %2028 = vmatprep.subr.mxu0 0.0
    %2029 = vmatpush1.msra.mxu0 %v96
    %2030 = vmatprep.subr.mxu0 0.0
    %2031 = vmatpush1.msra.mxu0 %v97
    %2032 = vmatprep.subr.mxu0 0.0
    %2033 = vmatpush1.msra.mxu0 %v98
    %2034 = vmatprep.subr.mxu0 0.0
    %2035 = vmatpush1.msra.mxu0 %v99
    %2036 = vmatprep.subr.mxu0 0.0
    %2037 = vmatpush1.msra.mxu0 %v100
    %2038 = vmatprep.subr.mxu0 0.0
    %2039 = vmatpush1.msra.mxu0 %v101
    %2040 = vmatprep.subr.mxu0 0.0
    %2041 = vmatpush1.msra.mxu0 %v102
    %2042 = vmatprep.subr.mxu0 0.0
    %2043 = vmatpush1.msra.mxu0 %v103
    %2044 = vmatprep.subr.mxu0 0.0
    %2045 = vmatpush1.msra.mxu0 %v104
    %2046 = vmatprep.subr.mxu0 0.0
    %2047 = vmatpush1.msra.mxu0 %v105
    %2048 = vmatprep.subr.mxu0 0.0
    %2049 = vmatpush1.msra.mxu0 %v106
    %2050 = vmatprep.subr.mxu0 0.0
    %2051 = vmatpush1.msra.mxu0 %v107
    %2052 = vmatprep.subr.mxu0 0.0
    %2053 = vmatpush1.msra.mxu0 0.0
    %2054 = vmatprep.subr.mxu0 0.0
    %2055 = vmatpush1.msra.mxu0 0.0
    %2056 = vmatprep.subr.mxu0 0.0
    %2057 = vmatpush1.msra.mxu0 0.0
    %2058 = vmatprep.subr.mxu0 0.0
    %2059 = vmatpush1.msra.mxu0 0.0
    %2060 = vmatprep.subr.mxu0 0.0
    %2061 = vmatpush1.msra.mxu0 0.0
    %2062 = vmatprep.subr.mxu0 0.0
    %2063 = vmatpush1.msra.mxu0 0.0
    %2064 = vmatprep.subr.mxu0 0.0
    %2065 = vmatpush1.msra.mxu0 0.0
    %2066 = vmatprep.subr.mxu0 0.0
    %2067 = vmatpush1.msra.mxu0 0.0
    %2068 = vmatprep.subr.mxu0 0.0
    %2069 = vmatpush1.msra.mxu0 0.0
    %2070 = vmatprep.subr.mxu0 0.0
    %2071 = vmatpush1.msra.mxu0 0.0
    %2072 = vmatprep.subr.mxu0 0.0
    %2073 = vmatpush1.msra.mxu0 0.0
    %2074 = vmatprep.subr.mxu0 0.0
    %2075 = vmatpush1.msra.mxu0 0.0
    %2076 = vmatprep.subr.mxu0 0.0
    %2077 = vmatpush1.msra.mxu0 0.0
    %2078 = vmatprep.subr.mxu0 0.0
    %2079 = vmatpush1.msra.mxu0 0.0
    %2080 = vmatprep.subr.mxu0 0.0
    %2081 = vmatpush1.msra.mxu0 0.0
    %2082 = vmatprep.subr.mxu0 0.0
    %2083 = vmatpush1.msra.mxu0 0.0
    %2084 = vmatprep.mubr.f32.mxu0 0.0
    %2085 = vmatmul.mubr.f32.gmra.mrb[0].mxu0 %v2017
    %v2086 = vpop.f32.mrb[0].mxu0
    %v2087 = vadd.f32 0.0, %v2086
    %v2088 = vpop.f32.mrb[0].mxu0
    %2089 = vdwg.mxu0
    %2090 = vmatprep.subr.mxu0 0.0
    %2091 = vmatpush1.msra.mxu0 %v2087
    %2092 = vmatprep.subr.mxu0 0.0
    %2093 = vmatpush1.msra.mxu0 0.0
    %2094 = vmatprep.subr.mxu0 0.0
    %2095 = vmatpush1.msra.mxu0 0.0
    %2096 = vmatprep.subr.mxu0 0.0
    %2097 = vmatpush1.msra.mxu0 0.0
    %2098 = vmatprep.subr.mxu0 0.0
    %2099 = vmatpush1.msra.mxu0 0.0
    %2100 = vmatprep.subr.mxu0 0.0
    %2101 = vmatpush1.msra.mxu0 0.0
    %2102 = vmatprep.subr.mxu0 0.0
    %2103 = vmatpush1.msra.mxu0 0.0
    %2104 = vmatprep.subr.mxu0 0.0
    %2105 = vmatpush1.msra.mxu0 0.0
    %2106 = vmatprep.subr.mxu0 0.0
    %2107 = vmatpush1.msra.mxu0 0.0
    %2108 = vmatprep.subr.mxu0 0.0
    %2109 = vmatpush1.msra.mxu0 0.0
    %2110 = vmatprep.subr.mxu0 0.0
    %2111 = vmatpush1.msra.mxu0 0.0
    %2112 = vmatprep.subr.mxu0 0.0
    %2113 = vmatpush1.msra.mxu0 0.0
    %2114 = vmatprep.subr.mxu0 0.0
    %2115 = vmatpush1.msra.mxu0 0.0
    %2116 = vmatprep.subr.mxu0 0.0
    %2117 = vmatpush1.msra.mxu0 0.0
    %2118 = vmatprep.subr.mxu0 0.0
    %2119 = vmatpush1.msra.mxu0 0.0
    %2120 = vmatprep.subr.mxu0 0.0
    %2121 = vmatpush1.msra.mxu0 0.0
    %2122 = vmatprep.subr.mxu0 0.0
    %2123 = vmatpush1.msra.mxu0 0.0
    %2124 = vmatprep.subr.mxu0 0.0
    %2125 = vmatpush1.msra.mxu0 0.0
    %2126 = vmatprep.subr.mxu0 0.0
    %2127 = vmatpush1.msra.mxu0 0.0
    %2128 = vmatprep.subr.mxu0 0.0
    %2129 = vmatpush1.msra.mxu0 0.0
    %2130 = vmatprep.subr.mxu0 0.0
    %2131 = vmatpush1.msra.mxu0 0.0
    %2132 = vmatprep.subr.mxu0 0.0
    %2133 = vmatpush1.msra.mxu0 0.0
    %2134 = vmatprep.subr.mxu0 0.0
    %2135 = vmatpush1.msra.mxu0 0.0
    %2136 = vmatprep.subr.mxu0 0.0
    %2137 = vmatpush1.msra.mxu0 0.0
    %2138 = vmatprep.subr.mxu0 0.0
    %2139 = vmatpush1.msra.mxu0 0.0
    %2140 = vmatprep.subr.mxu0 0.0
    %2141 = vmatpush1.msra.mxu0 0.0
    %2142 = vmatprep.subr.mxu0 0.0
    %2143 = vmatpush1.msra.mxu0 0.0
    %2144 = vmatprep.subr.mxu0 0.0
    %2145 = vmatpush1.msra.mxu0 0.0
    %2146 = vmatprep.subr.mxu0 0.0
    %2147 = vmatpush1.msra.mxu0 0.0
    %2148 = vmatprep.subr.mxu0 0.0
    %2149 = vmatpush1.msra.mxu0 0.0
    %2150 = vmatprep.subr.mxu0 0.0
    %2151 = vmatpush1.msra.mxu0 0.0
    %2152 = vmatprep.subr.mxu0 0.0
    %2153 = vmatpush1.msra.mxu0 0.0
    %2154 = vmatprep.mubr.f32.mxu0 0.0
    %2155 = vmatmul.mubr.f32.gmra.mrb[0].mxu0 %v712
    %v2156 = vpop.f32.mrb[0].mxu0
    %v2157 = vadd.f32 0.0, %v2156
    %v2158 = vpop.f32.mrb[0].mxu0
    %2159 = vmatprep.mubr.f32.mxu0 0.0
    %2160 = vmatmul.mubr.f32.gmra.mrb[0].mxu0 %v715
    %v2161 = vpop.f32.mrb[0].mxu0
    %v2162 = vadd.f32 0.0, %v2161
    %v2163 = vpop.f32.mrb[0].mxu0
    %2164 = vmatprep.mubr.f32.mxu0 0.0
    %2165 = vmatmul.mubr.f32.gmra.mrb[0].mxu0 %v718
    %v2166 = vpop.f32.mrb[0].mxu0
    %v2167 = vadd.f32 0.0, %v2166
    %v2168 = vpop.f32.mrb[0].mxu0
    %2169 = vmatprep.mubr.f32.mxu0 0.0
    %2170 = vmatmul.mubr.f32.gmra.mrb[0].mxu0 %v721
    %v2171 = vpop.f32.mrb[0].mxu0
    %v2172 = vadd.f32 0.0, %v2171
    %v2173 = vpop.f32.mrb[0].mxu0
    %2174 = vdwg.mxu0
    %v2176 = vsel %vm710, %v2157, 0
    %v2179 = vsel %vm710, %v2162, 0
    %v2182 = vsel %vm710, %v2167, 0
    %v2185 = vsel %vm710, %v2172, 0
    %2187 = vmatprep.subr.mxu0 0.0
    %2188 = vmatpush1.msra.mxu0 %v108
    %2189 = vmatprep.subr.mxu0 0.0
    %2190 = vmatpush1.msra.mxu0 0.0
    %2191 = vmatprep.subr.mxu0 0.0
    %2192 = vmatpush1.msra.mxu0 0.0
    %2193 = vmatprep.subr.mxu0 0.0
    %2194 = vmatpush1.msra.mxu0 0.0
    %2195 = vmatprep.subr.mxu0 0.0
    %2196 = vmatpush1.msra.mxu0 0.0
    %2197 = vmatprep.subr.mxu0 0.0
    %2198 = vmatpush1.msra.mxu0 0.0
    %2199 = vmatprep.subr.mxu0 0.0
    %2200 = vmatpush1.msra.mxu0 0.0
    %2201 = vmatprep.subr.mxu0 0.0
    %2202 = vmatpush1.msra.mxu0 0.0
    %2203 = vmatprep.subr.mxu0 0.0
    %2204 = vmatpush1.msra.mxu0 0.0
    %2205 = vmatprep.subr.mxu0 0.0
    %2206 = vmatpush1.msra.mxu0 0.0
    %2207 = vmatprep.subr.mxu0 0.0
    %2208 = vmatpush1.msra.mxu0 0.0
    %2209 = vmatprep.subr.mxu0 0.0
    %2210 = vmatpush1.msra.mxu0 0.0
    %2211 = vmatprep.subr.mxu0 0.0
    %2212 = vmatpush1.msra.mxu0 0.0
    %2213 = vmatprep.subr.mxu0 0.0
    %2214 = vmatpush1.msra.mxu0 0.0
    %2215 = vmatprep.subr.mxu0 0.0
    %2216 = vmatpush1.msra.mxu0 0.0
    %2217 = vmatprep.subr.mxu0 0.0
    %2218 = vmatpush1.msra.mxu0 0.0
    %2219 = vmatprep.subr.mxu0 0.0
    %2220 = vmatpush1.msra.mxu0 0.0
    %2221 = vmatprep.subr.mxu0 0.0
    %2222 = vmatpush1.msra.mxu0 0.0
    %2223 = vmatprep.subr.mxu0 0.0
    %2224 = vmatpush1.msra.mxu0 0.0
    %2225 = vmatprep.subr.mxu0 0.0
    %2226 = vmatpush1.msra.mxu0 0.0
    %2227 = vmatprep.subr.mxu0 0.0
    %2228 = vmatpush1.msra.mxu0 0.0
    %2229 = vmatprep.subr.mxu0 0.0
    %2230 = vmatpush1.msra.mxu0 0.0
    %2231 = vmatprep.subr.mxu0 0.0
    %2232 = vmatpush1.msra.mxu0 0.0
    %2233 = vmatprep.subr.mxu0 0.0
    %2234 = vmatpush1.msra.mxu0 0.0
    %2235 = vmatprep.subr.mxu0 0.0
    %2236 = vmatpush1.msra.mxu0 0.0
    %2237 = vmatprep.subr.mxu0 0.0
    %2238 = vmatpush1.msra.mxu0 0.0
    %2239 = vmatprep.subr.mxu0 0.0
    %2240 = vmatpush1.msra.mxu0 0.0
    %2241 = vmatprep.subr.mxu0 0.0
    %2242 = vmatpush1.msra.mxu0 0.0
    %2243 = vmatprep.subr.mxu0 0.0
    %2244 = vmatpush1.msra.mxu0 0.0
    %2245 = vmatprep.subr.mxu0 0.0
    %2246 = vmatpush1.msra.mxu0 0.0
    %2247 = vmatprep.subr.mxu0 0.0
    %2248 = vmatpush1.msra.mxu0 0.0
    %2249 = vmatprep.subr.mxu0 0.0
    %2250 = vmatpush1.msra.mxu0 0.0
    %2251 = vmatprep.mubr.f32.mxu0 0.0
    %2252 = vmatmul.mubr.f32.gmra.mrb[0].mxu0 %v2176
    %v2253 = vpop.f32.mrb[0].mxu0
    %v2254 = vadd.f32 0.0, %v2253
    %v2255 = vpop.f32.mrb[0].mxu0
    %2256 = vmatprep.mubr.f32.mxu0 0.0
    %2257 = vmatmul.mubr.f32.gmra.mrb[0].mxu0 %v2179
    %v2258 = vpop.f32.mrb[0].mxu0
    %v2259 = vadd.f32 0.0, %v2258
    %v2260 = vpop.f32.mrb[0].mxu0
    %2261 = vmatprep.mubr.f32.mxu0 0.0
    %2262 = vmatmul.mubr.f32.gmra.mrb[0].mxu0 %v2182
    %v2263 = vpop.f32.mrb[0].mxu0
    %v2264 = vadd.f32 0.0, %v2263
    %v2265 = vpop.f32.mrb[0].mxu0
    %2266 = vmatprep.mubr.f32.mxu0 0.0
    %2267 = vmatmul.mubr.f32.gmra.mrb[0].mxu0 %v2185
    %v2268 = vpop.f32.mrb[0].mxu0
    %v2269 = vadd.f32 0.0, %v2268
    %v2270 = vpop.f32.mrb[0].mxu0
    %2271 = vdwg.mxu0
    %v2272 = vmul.f32 %v2254, 0.001953125
    %v2273 = vmul.f32 %v2259, 0.001953125
    %v2274 = vmul.f32 %v2264, 0.001953125
    %v2275 = vmul.f32 %v2269, 0.001953125
    %v2276 = vadd.f32 %v2272, 1e-05
    %v2277 = vadd.f32 %v2273, 1e-05
    %v2278 = vadd.f32 %v2274, 1e-05
    %v2279 = vadd.f32 %v2275, 1e-05
    %v2280 = vrsqrt.pop %v2276
    %v2281 = vrsqrt.pop %v2277
    %v2282 = vrsqrt.pop %v2278
    %v2283 = vrsqrt.pop %v2279
    %v2284 = vmul.f32 %v1942, %v2280
    %v2285 = vmul.f32 %v1943, %v2281
    %v2286 = vmul.f32 %v1944, %v2282
    %v2287 = vmul.f32 %v1945, %v2283
    %v2288 = vmul.f32 %v2284, %v1258
    %v2289 = vmul.f32 %v2285, %v1258
    %v2290 = vmul.f32 %v2286, %v1258
    %v2291 = vmul.f32 %v2287, %v1258
    %v2292 = vadd.f32 %v2288, %v1266
    %v2293 = vadd.f32 %v2289, %v1266
    %v2294 = vadd.f32 %v2290, %v1266
    %v2295 = vadd.f32 %v2291, %v1266
    %v2296 = vrot.slane %v2292, 1
    %v2297 = vrot.slane %v2293, 1
    %v2298 = vrot.slane %v2294, 1
    %v2299 = vrot.slane %v2295, 1
    %v2300 = vsel %vm427, %v2298, %v2299
    %v2301 = vsel %vm427, %v2297, %v2298
    %v2302 = vsel %vm427, %v2296, %v2297
    %v2303 = vsel %vm427, %v2299, %v2296
    %v2304 = vmax.f32 %v2292, %v2302
    %v2305 = vmax.f32 %v2293, %v2301
    %v2306 = vmax.f32 %v2294, %v2300
    %v2307 = vmax.f32 %v2295, %v2303
    %v2308 = vld [vmem:[%s8] sm:$0xff]
    %v2309 = vld [vmem:[%s8 + $0x8] sm:$0xff]
    %v2311 = vsel %vm566, %v2308, 0
    %v2314 = vsel %vm566, %v2309, 0
    %2316 = vmatprep.subr.mxu0 0.0
    %2317 = vmatpush1.msra.mxu0 %v2304
    %2318 = vmatprep.subr.mxu0 0.0
    %2319 = vmatpush1.msra.mxu0 %v2305
    %2320 = vmatprep.subr.mxu0 0.0
    %2321 = vmatpush1.msra.mxu0 %v2306
    %2322 = vmatprep.subr.mxu0 0.0
    %2323 = vmatpush1.msra.mxu0 %v2307
    %2324 = vmatprep.subr.mxu0 0.0
    %2325 = vmatpush1.msra.mxu0 0.0
    %2326 = vmatprep.subr.mxu0 0.0
    %2327 = vmatpush1.msra.mxu0 0.0
    %2328 = vmatprep.subr.mxu0 0.0
    %2329 = vmatpush1.msra.mxu0 0.0
    %2330 = vmatprep.subr.mxu0 0.0
    %2331 = vmatpush1.msra.mxu0 0.0
    %2332 = vmatprep.subr.mxu0 0.0
    %2333 = vmatpush1.msra.mxu0 0.0
    %2334 = vmatprep.subr.mxu0 0.0
    %2335 = vmatpush1.msra.mxu0 0.0
    %2336 = vmatprep.subr.mxu0 0.0
    %2337 = vmatpush1.msra.mxu0 0.0
    %2338 = vmatprep.subr.mxu0 0.0
    %2339 = vmatpush1.msra.mxu0 0.0
    %2340 = vmatprep.subr.mxu0 0.0
    %2341 = vmatpush1.msra.mxu0 0.0
    %2342 = vmatprep.subr.mxu0 0.0
    %2343 = vmatpush1.msra.mxu0 0.0
    %2344 = vmatprep.subr.mxu0 0.0
    %2345 = vmatpush1.msra.mxu0 0.0
    %2346 = vmatprep.subr.mxu0 0.0
    %2347 = vmatpush1.msra.mxu0 0.0
    %2348 = vmatprep.subr.mxu0 0.0
    %2349 = vmatpush1.msra.mxu0 0.0
    %2350 = vmatprep.subr.mxu0 0.0
    %2351 = vmatpush1.msra.mxu0 0.0
    %2352 = vmatprep.subr.mxu0 0.0
    %2353 = vmatpush1.msra.mxu0 0.0
    %2354 = vmatprep.subr.mxu0 0.0
    %2355 = vmatpush1.msra.mxu0 0.0
    %2356 = vmatprep.subr.mxu0 0.0
    %2357 = vmatpush1.msra.mxu0 0.0
    %2358 = vmatprep.subr.mxu0 0.0
    %2359 = vmatpush1.msra.mxu0 0.0
    %2360 = vmatprep.subr.mxu0 0.0
    %2361 = vmatpush1.msra.mxu0 0.0
    %2362 = vmatprep.subr.mxu0 0.0
    %2363 = vmatpush1.msra.mxu0 0.0
    %2364 = vmatprep.subr.mxu0 0.0
    %2365 = vmatpush1.msra.mxu0 0.0
    %2366 = vmatprep.subr.mxu0 0.0
    %2367 = vmatpush1.msra.mxu0 0.0
    %2368 = vmatprep.subr.mxu0 0.0
    %2369 = vmatpush1.msra.mxu0 0.0
    %2370 = vmatprep.subr.mxu0 0.0
    %2371 = vmatpush1.msra.mxu0 0.0
    %2372 = vmatprep.subr.mxu0 0.0
    %2373 = vmatpush1.msra.mxu0 0.0
    %2374 = vmatprep.subr.mxu0 0.0
    %2375 = vmatpush1.msra.mxu0 0.0
    %2376 = vmatprep.subr.mxu0 0.0
    %2377 = vmatpush1.msra.mxu0 0.0
    %2378 = vmatprep.subr.mxu0 0.0
    %2379 = vmatpush1.msra.mxu0 0.0
    %2380 = vmatprep.mubr.f32.mxu0 0.0
    %2381 = vmatmul.mubr.f32.gmra.mrb[0].mxu0 %v2311
    %v2382 = vpop.f32.mrb[0].mxu0
    %v2383 = vadd.f32 0.0, %v2382
    %v2384 = vpop.f32.mrb[0].mxu0
    %2385 = vmatprep.mubr.f32.mxu0 0.0
    %2386 = vmatmul.mubr.f32.gmra.mrb[0].mxu0 %v2314
    %v2387 = vpop.f32.mrb[0].mxu0
    %v2388 = vadd.f32 0.0, %v2387
    %v2389 = vpop.f32.mrb[0].mxu0
    %2390 = vdwg.mxu0
    %2391 = vrot.lane.b32.xlu0 %v2383, 120
    %v2392 = vpop.permute.xlu0 %2391
    %2393 = vrot.lane.b32.xlu0 %v2388, 120
    %v2394 = vpop.permute.xlu0 %2393
    %v2395 = vmax.f32 %v2383, %v2392
    %v2396 = vmax.f32 %v2388, %v2394
    %v2397 = vld [vmem:[%s9] sm:$0xff]
    %v2398 = vld [vmem:[%s9 + $0x8] sm:$0xff]
    %v2399 = vld [vmem:[%s9 + $0x10] sm:$0xff]
    %v2400 = vld [vmem:[%s9 + $0x18] sm:$0xff]
    %v2401 = vld [vmem:[%s9 + $0x20] sm:$0xff]
    %v2402 = vld [vmem:[%s9 + $0x28] sm:$0xff]
    %v2403 = vld [vmem:[%s9 + $0x30] sm:$0xff]
    %v2404 = vld [vmem:[%s9 + $0x38] sm:$0xff]
    %v2405 = vld [vmem:[%s9 + $0x40] sm:$0xff]
    %v2406 = vld [vmem:[%s9 + $0x48] sm:$0xff]
    %v2407 = vld [vmem:[%s9 + $0x50] sm:$0xff]
    %v2408 = vld [vmem:[%s9 + $0x58] sm:$0xff]
    %v2409 = vld [vmem:[%s9 + $0x60] sm:$0xff]
    %v2410 = vld [vmem:[%s9 + $0x68] sm:$0xff]
    %v2411 = vld [vmem:[%s9 + $0x70] sm:$0xff]
    %v2412 = vld [vmem:[%s9 + $0x78] sm:$0xff]
    %2413 = vmatprep.subr.mxu0 0.0
    %2414 = vmatpush1.msra.mxu0 %v2397
    %2415 = vmatprep.subr.mxu0 0.0
    %2416 = vmatpush1.msra.mxu0 %v2398
    %2417 = vmatprep.subr.mxu0 0.0
    %2418 = vmatpush1.msra.mxu0 %v2399
    %2419 = vmatprep.subr.mxu0 0.0
    %2420 = vmatpush1.msra.mxu0 %v2400
    %2421 = vmatprep.subr.mxu0 0.0
    %2422 = vmatpush1.msra.mxu0 %v2401
    %2423 = vmatprep.subr.mxu0 0.0
    %2424 = vmatpush1.msra.mxu0 %v2402
    %2425 = vmatprep.subr.mxu0 0.0
    %2426 = vmatpush1.msra.mxu0 %v2403
    %2427 = vmatprep.subr.mxu0 0.0
    %2428 = vmatpush1.msra.mxu0 %v2404
    %2429 = vmatprep.subr.mxu0 0.0
    %2430 = vmatpush1.msra.mxu0 %v2405
    %2431 = vmatprep.subr.mxu0 0.0
    %2432 = vmatpush1.msra.mxu0 %v2406
    %2433 = vmatprep.subr.mxu0 0.0
    %2434 = vmatpush1.msra.mxu0 %v2407
    %2435 = vmatprep.subr.mxu0 0.0
    %2436 = vmatpush1.msra.mxu0 %v2408
    %2437 = vmatprep.subr.mxu0 0.0
    %2438 = vmatpush1.msra.mxu0 %v2409
    %2439 = vmatprep.subr.mxu0 0.0
    %2440 = vmatpush1.msra.mxu0 %v2410
    %2441 = vmatprep.subr.mxu0 0.0
    %2442 = vmatpush1.msra.mxu0 %v2411
    %2443 = vmatprep.subr.mxu0 0.0
    %2444 = vmatpush1.msra.mxu0 %v2412
    %2445 = vmatprep.subr.mxu0 0.0
    %2446 = vmatpush1.msra.mxu0 0.0
    %2447 = vmatprep.subr.mxu0 0.0
    %2448 = vmatpush1.msra.mxu0 0.0
    %2449 = vmatprep.subr.mxu0 0.0
    %2450 = vmatpush1.msra.mxu0 0.0
    %2451 = vmatprep.subr.mxu0 0.0
    %2452 = vmatpush1.msra.mxu0 0.0
    %2453 = vmatprep.subr.mxu0 0.0
    %2454 = vmatpush1.msra.mxu0 0.0
    %2455 = vmatprep.subr.mxu0 0.0
    %2456 = vmatpush1.msra.mxu0 0.0
    %2457 = vmatprep.subr.mxu0 0.0
    %2458 = vmatpush1.msra.mxu0 0.0
    %2459 = vmatprep.subr.mxu0 0.0
    %2460 = vmatpush1.msra.mxu0 0.0
    %2461 = vmatprep.subr.mxu0 0.0
    %2462 = vmatpush1.msra.mxu0 0.0
    %2463 = vmatprep.subr.mxu0 0.0
    %2464 = vmatpush1.msra.mxu0 0.0
    %2465 = vmatprep.subr.mxu0 0.0
    %2466 = vmatpush1.msra.mxu0 0.0
    %2467 = vmatprep.subr.mxu0 0.0
    %2468 = vmatpush1.msra.mxu0 0.0
    %2469 = vmatprep.subr.mxu0 0.0
    %2470 = vmatpush1.msra.mxu0 0.0
    %2471 = vmatprep.subr.mxu0 0.0
    %2472 = vmatpush1.msra.mxu0 0.0
    %2473 = vmatprep.subr.mxu0 0.0
    %2474 = vmatpush1.msra.mxu0 0.0
    %2475 = vmatprep.subr.mxu0 0.0
    %2476 = vmatpush1.msra.mxu0 0.0
    %2477 = vmatprep.mubr.f32.mxu0 0.0
    %2478 = vmatmul.mubr.f32.gmra.mrb[0].mxu0 %v2395
    %v2479 = vpop.f32.mrb[0].mxu0
    %v2480 = vadd.f32 0.0, %v2479
    %v2481 = vpop.f32.mrb[0].mxu0
    %2482 = vmatprep.mubr.f32.mxu0 0.0
    %2483 = vmatmul.mubr.f32.gmra.mrb[0].mxu0 %v2396
    %v2484 = vpop.f32.mrb[0].mxu0
    %v2485 = vadd.f32 0.0, %v2484
    %v2486 = vpop.f32.mrb[0].mxu0
    %2487 = vdwg.mxu0
    %2488 = vst.msk [vmem:[%s10] sm:$0xff] %vm228, %v2480
    %2489 = vst.msk [vmem:[%s10 + $0x8] sm:$0xff] %vm228, %v2485
    // Predicated region
    $region58: #{forward.1} parent=1 // pred_check
      _
    $region59: #{forward.1} parent=1 // pred_check_branch
      %2491 = sbr.rel (0) target = $region61
    $region60: #{forward.1} parent=1 // pred_region
      _
    $region61: #{forward.1} parent=1 // pred_fallthru
      _
    // Predicated region
    $region62: #{forward.1} parent=1 // pred_check
      _
    $region63: #{forward.1} parent=1 // pred_check_branch
      %2493 = sbr.rel (0) target = $region65
    $region64: #{forward.1} parent=1 // pred_region
      _
    $region65: #{forward.1} parent=1 // pred_fallthru
      _
    %2494 = vsyncpa [#allocation3], 1
    %2495 = vsyncpa [#allocation5], 1
    %2496 = vsyncpa [#allocation8], 1

</llo_original>
